<compile_context>
chip_gen: v6e
topology: v6e:2x2x1
jax: 0.10.0
libtpu: 0.0.40
codegen_flags: <defaults>
</compile_context>

<pallas_src>
import functools

import jax
import jax.numpy as jnp
import numpy as np
from jax.experimental import pallas as pl
from jax.experimental.pallas import tpu as pltpu


def _window_attention_kernel(x_ref, wqkv_ref, bqkv_ref, wproj_ref, bproj_ref,
                             bias_ref, o_ref, *, tb, seq, num_heads, head_dim):
    """Processes tb windows per grid step.

    x_ref    : (tb*N, C)  bf16   input tokens of tb windows (flattened)
    wqkv_ref : (C, 3C)    bf16   qkv weight (transposed for x @ W; q cols pre-scaled)
    bqkv_ref : (1, 3C)    bf16   qkv bias (q part pre-scaled)
    wproj_ref: (C, C)     bf16   proj weight (transposed for x @ W)
    bproj_ref: (1, C)     bf16   proj bias
    bias_ref : (nH, N, N) f32    relative position bias (pre-gathered, resident)
    o_ref    : (tb*N, C)         output (x dtype)
    """
    N = seq
    C = num_heads * head_dim

    x2d = x_ref[...]                                                    # (tb*N, C) bf16

    # qkv = x @ Wqkv + b  on the MXU bf16 fast path, f32 accumulation.
    # Columns laid out as (3, nH, hd) flattened, matching torch's
    # reshape(B_, N, 3, nH, hd).  The qk scale is already folded into W/b.
    qkv_f32 = jnp.dot(x2d, wqkv_ref[...], preferred_element_type=jnp.float32)
    qkv_f32 = qkv_f32 + bqkv_ref[...].astype(jnp.float32)               # (tb*N, 3C)
    qkv = qkv_f32.astype(jnp.bfloat16)                                   # one downcast

    head_outs = []
    for h in range(num_heads):  # tiny static unroll; everything inside is tb-batched
        q = qkv[:, 0 * C + h * head_dim:0 * C + (h + 1) * head_dim].reshape(tb, N, head_dim)
        k = qkv[:, 1 * C + h * head_dim:1 * C + (h + 1) * head_dim].reshape(tb, N, head_dim)
        v = qkv[:, 2 * C + h * head_dim:2 * C + (h + 1) * head_dim].reshape(tb, N, head_dim)

        # per-window (scaled q) @ k^T, batched over the tb windows -> f32 logits
        logits = jnp.einsum('bqd,bkd->bqk', q, k,
                            preferred_element_type=jnp.float32)          # (tb, N, N)
        logits = logits + bias_ref[h][None].astype(jnp.float32)          # +rel pos bias

        # numerically stable softmax in f32; normalization deferred to the head output
        logits = logits - jnp.max(logits, axis=-1, keepdims=True)
        p = jnp.exp(logits)                                              # (tb, N, N) f32
        l = jnp.sum(p, axis=-1, keepdims=True)                           # (tb, N, 1) f32

        oh = jnp.einsum('bqk,bkd->bqd', p.astype(jnp.bfloat16), v,
                        preferred_element_type=jnp.float32)              # (tb, N, hd) f32
        oh = oh * pl.reciprocal(l, approx=True)                          # normalize here
        head_outs.append(oh.reshape(tb * N, head_dim))

    # Concat heads along lanes (8 -> 32) and do ONE proj matmul (K = C).
    heads = jnp.concatenate(head_outs, axis=-1).astype(jnp.bfloat16)     # (tb*N, C)
    y = jnp.dot(heads, wproj_ref[...], preferred_element_type=jnp.float32)
    y = y + bproj_ref[...].astype(jnp.float32)                           # (tb*N, C)
    o_ref[...] = y.astype(o_ref.dtype)


def _plan_tiling(B_, tb_max=64, min_steps=4):
    """Pick windows-per-step tb and padded B_.

    tb is chosen so the grid has >= min_steps steps (>= 2 per v7x TensorCore when
    the single grid axis is 'parallel'), capped at tb_max (keeps the per-step
    footprint well under v7x's 64 MiB VMEM).  B_ is padded up to a multiple of tb
    so awkward/prime B_ does not collapse to one window per step.
    """
    tb = max(1, min(tb_max, pl.cdiv(B_, min_steps)))
    B_pad = pl.cdiv(B_, tb) * tb
    return tb, B_pad


def window_attention(x, wqkv_t, bqkv, wproj_t, bproj, rel_pos_bias,
                     *, num_heads, scale, tb_max=64, mask=None):
    """x: (B_, N, C); rel_pos_bias: (num_heads, N, N).  mask must be None."""
    # TODO(synk): shifted-window mask path not implemented.
    assert mask is None, "shifted-window mask path is not implemented"
    B_, N, C = x.shape
    head_dim = C // num_heads

    # Fold the qk scale into the q columns of the qkv projection (true constant fold:
    # (x @ Wq + bq) * s == x @ (Wq*s) + bq*s), then cast params to bf16.
    col_scale = jnp.concatenate([jnp.full((C,), scale, jnp.float32),
                                 jnp.ones((2 * C,), jnp.float32)])
    wqkv_b = (wqkv_t.astype(jnp.float32) * col_scale[None, :]).astype(jnp.bfloat16)
    bqkv_b = (bqkv.astype(jnp.float32) * col_scale[None, :]).astype(jnp.bfloat16)
    wproj_b = wproj_t.astype(jnp.bfloat16)
    bproj_b = bproj.astype(jnp.bfloat16)
    bias_f32 = rel_pos_bias.astype(jnp.float32)

    tb, B_pad = _plan_tiling(B_, tb_max)
    grid = (B_pad // tb,)

    # Flatten windows*tokens so blocks are plain 2-D (tb*N, C) slabs; bf16 activations.
    x2d = x.reshape(B_ * N, C).astype(jnp.bfloat16)
    if B_pad != B_:
        x2d = jnp.pad(x2d, ((0, (B_pad - B_) * N), (0, 0)))

    kernel = functools.partial(
        _window_attention_kernel,
        tb=tb, seq=N, num_heads=num_heads, head_dim=head_dim)

    flops = int(B_pad * (2 * N * C * (3 * C)                     # qkv projection
                         + num_heads * 2 * (2 * N * N * head_dim)  # QK^T and attn@V
                         + 2 * N * C * C))                        # output projection
    bytes_accessed = int(
        x2d.size * 2                                              # bf16 in
        + B_pad * N * C * jnp.dtype(x.dtype).itemsize             # out
        + (wqkv_b.size + bqkv_b.size + wproj_b.size + bproj_b.size) * 2
        + bias_f32.size * 4)
    cost = pl.CostEstimate(flops=flops,
                           transcendentals=int(B_pad * num_heads * N * N),
                           bytes_accessed=bytes_accessed)

    out2d = pl.pallas_call(
        kernel,
        out_shape=jax.ShapeDtypeStruct((B_pad * N, C), x.dtype),
        grid_spec=pltpu.PrefetchScalarGridSpec(
            num_scalar_prefetch=0,
            grid=grid,
            in_specs=[
                pl.BlockSpec((tb * N, C), lambda b: (b, 0)),              # x (tb windows)
                pl.BlockSpec((C, 3 * C), lambda b: (0, 0)),               # qkv weight^T (scaled)
                pl.BlockSpec((1, 3 * C), lambda b: (0, 0)),               # qkv bias (scaled)
                pl.BlockSpec((C, C), lambda b: (0, 0)),                   # proj weight^T
                pl.BlockSpec((1, C), lambda b: (0, 0)),                   # proj bias
                pl.BlockSpec((num_heads, N, N), lambda b: (0, 0, 0)),     # rel pos bias
            ],
            out_specs=pl.BlockSpec((tb * N, C), lambda b: (b, 0)),
        ),
        compiler_params=pltpu.CompilerParams(
            dimension_semantics=("parallel",),
            vmem_limit_bytes=48 * 1024 * 1024),
        cost_estimate=cost,
    )(x2d, wqkv_b, bqkv_b, wproj_b, bproj_b, bias_f32)

    if B_pad != B_:
        out2d = out2d[:B_ * N]
    return out2d.reshape(B_, N, C)


def make_relative_position_index(wh, ww):
    """Replicates the PyTorch buffer computation (numpy, static)."""
    coords_h = np.arange(wh)
    coords_w = np.arange(ww)
    coords = np.stack(np.meshgrid(coords_h, coords_w, indexing="ij"))   # (2, Wh, Ww)
    coords_flatten = coords.reshape(2, -1)                              # (2, Wh*Ww)
    relative_coords = coords_flatten[:, :, None] - coords_flatten[:, None, :]
    relative_coords = relative_coords.transpose(1, 2, 0).copy()         # (N, N, 2)
    relative_coords[:, :, 0] += wh - 1
    relative_coords[:, :, 1] += ww - 1
    relative_coords[:, :, 0] *= 2 * ww - 1
    return relative_coords.sum(-1)                                      # (N, N)


def reference_window_attention(x, wqkv_t, bqkv, wproj_t, bproj, rel_pos_bias,
                               *, num_heads, scale):
    """Pure-JAX reference mirroring the PyTorch forward (mask=None, dropout=0)."""
    B_, N, C = x.shape
    hd = C // num_heads
    qkv = x @ wqkv_t + bqkv[0]                                          # (B_, N, 3C)
    qkv = qkv.reshape(B_, N, 3, num_heads, hd).transpose(2, 0, 3, 1, 4)
    q, k, v = qkv[0], qkv[1], qkv[2]                                    # (B_, nH, N, hd)
    attn = (q * scale) @ jnp.swapaxes(k, -2, -1)                        # (B_, nH, N, N)
    attn = attn + rel_pos_bias[None]
    attn = jax.nn.softmax(attn, axis=-1)
    out = (attn @ v).transpose(0, 2, 1, 3).reshape(B_, N, C)
    return out @ wproj_t + bproj[0]


if __name__ == "__main__":
    # Small shapes consistent with the module: window_size=8 -> N=64 tokens/window.
    window = (8, 8)
    N = window[0] * window[1]        # 64
    dim = 32                         # channels
    num_heads = 4
    head_dim = dim // num_heads
    scale = head_dim ** (-0.5)
    B_ = 8                           # num_windows * batch  -> tb=2, grid of 4 steps

    key = jax.random.PRNGKey(0)
    k_x, k_qw, k_qb, k_pw, k_pb, k_tab = jax.random.split(key, 6)

    x = jax.random.normal(k_x, (B_, N, dim), dtype=jnp.float32)

    # Deterministic synthetic parameters (nn.Linear shapes: qkv (3C, C), proj (C, C)),
    # stored pre-transposed for x @ W^T convenience.
    wqkv_t = jax.random.normal(k_qw, (dim, 3 * dim), dtype=jnp.float32) * 0.05
    bqkv = jax.random.normal(k_qb, (1, 3 * dim), dtype=jnp.float32) * 0.02
    wproj_t = jax.random.normal(k_pw, (dim, dim), dtype=jnp.float32) * 0.05
    bproj = jax.random.normal(k_pb, (1, dim), dtype=jnp.float32) * 0.02

    # Relative position bias table ~ trunc_normal(std=0.02); normal*0.02 used here.
    table = jax.random.normal(
        k_tab, ((2 * window[0] - 1) * (2 * window[1] - 1), num_heads),
        dtype=jnp.float32) * 0.02

    # Glue: gather the (nH, N, N) relative position bias once outside the kernel.
    rel_idx = jnp.asarray(make_relative_position_index(*window).reshape(-1))
    rel_pos_bias = table[rel_idx].reshape(N, N, num_heads).transpose(2, 0, 1)  # (nH, N, N)

    out = window_attention(x, wqkv_t, bqkv, wproj_t, bproj, rel_pos_bias,
                           num_heads=num_heads, scale=scale)
    out = jax.block_until_ready(out)
    assert out.shape == (B_, N, dim)

    # Reference on bf16-cast inputs (f32 math) so the comparison isolates in-kernel
    # rounding (f32-accumulated MXU, bf16 probability/head casts, approx reciprocal)
    # from the deliberate bf16 input cast.
    def _b(a):
        return a.astype(jnp.bfloat16).astype(jnp.float32)
    ref = reference_window_attention(_b(x), _b(wqkv_t), _b(bqkv), _b(wproj_t),
                                     _b(bproj), rel_pos_bias,
                                     num_heads=num_heads, scale=scale)
    np.testing.assert_allclose(np.asarray(out), np.asarray(ref), atol=1e-2, rtol=2e-2)

    print("KERNEL_OK")
</pallas_src>

<mosaic_0001>
module attributes {stable_mosaic.version = 11 : i64} {
  func.func @_window_attention_kernel(%arg0: i32, %arg1: memref<128x32xbf16, #tpu.memory_space<vmem>>, %arg2: memref<32x96xbf16, #tpu.memory_space<vmem>>, %arg3: memref<1x96xbf16, #tpu.memory_space<vmem>>, %arg4: memref<32x32xbf16, #tpu.memory_space<vmem>>, %arg5: memref<1x32xbf16, #tpu.memory_space<vmem>>, %arg6: memref<4x64x64xf32, #tpu.memory_space<vmem>>, %arg7: memref<128x32xf32, #tpu.memory_space<vmem>>) attributes {dimension_semantics = [#tpu.dimension_semantics<parallel>], iteration_bounds = array<i64: 4>, scalar_prefetch = 0 : i64, scratch_operands = 0 : i64, tpu.core_type = #tpu.core_type<tc>, window_params = [{transform_indices = @transform_0, window_bounds = array<i64: 128, 32>}, {pipeline_mode = #tpu.pipeline_mode<synchronous>, transform_indices = @transform_1, window_bounds = array<i64: 32, 96>}, {pipeline_mode = #tpu.pipeline_mode<synchronous>, transform_indices = @transform_2, window_bounds = array<i64: 1, 96>}, {pipeline_mode = #tpu.pipeline_mode<synchronous>, transform_indices = @transform_3, window_bounds = array<i64: 32, 32>}, {pipeline_mode = #tpu.pipeline_mode<synchronous>, transform_indices = @transform_4, window_bounds = array<i64: 1, 32>}, {pipeline_mode = #tpu.pipeline_mode<synchronous>, transform_indices = @transform_5, window_bounds = array<i64: 4, 64, 64>}, {transform_indices = @transform_6, window_bounds = array<i64: 128, 32>}]} {
    %c0 = arith.constant 0 : index
    %c0_0 = arith.constant 0 : index
    %0 = vector.load %arg1[%c0, %c0_0] : memref<128x32xbf16, #tpu.memory_space<vmem>>, vector<128x32xbf16>
    %c0_1 = arith.constant 0 : index
    %c0_2 = arith.constant 0 : index
    %1 = vector.load %arg2[%c0_1, %c0_2] : memref<32x96xbf16, #tpu.memory_space<vmem>>, vector<32x96xbf16>
    %cst = arith.constant dense<0.000000e+00> : vector<128x96xf32>
    %2 = tpu.matmul %0, %1, %cst {dimension_numbers = #tpu.dot_dimension_numbers<[1], [0], [0], [1], [0, 0, 1, 1], [], []>} : vector<128x32xbf16>, vector<32x96xbf16>, vector<128x96xf32> -> vector<128x96xf32>
    %c0_3 = arith.constant 0 : index
    %c0_4 = arith.constant 0 : index
    %3 = vector.load %arg3[%c0_3, %c0_4] : memref<1x96xbf16, #tpu.memory_space<vmem>>, vector<1x96xbf16>
    %4 = arith.extf %3 : vector<1x96xbf16> to vector<1x96xf32>
    %5 = vector.broadcast %4 : vector<1x96xf32> to vector<128x96xf32>
    %6 = arith.addf %2, %5 : vector<128x96xf32>
    %7 = arith.truncf %6 : vector<128x96xf32> to vector<128x96xbf16>
    %8 = vector.extract_strided_slice %7 {offsets = [0, 0], sizes = [128, 8], strides = [1, 1]} : vector<128x96xbf16> to vector<128x8xbf16>
    %9 = vector.shape_cast %8 : vector<128x8xbf16> to vector<2x64x8xbf16>
    %10 = vector.extract_strided_slice %7 {offsets = [0, 32], sizes = [128, 8], strides = [1, 1]} : vector<128x96xbf16> to vector<128x8xbf16>
    %11 = vector.shape_cast %10 : vector<128x8xbf16> to vector<2x64x8xbf16>
    %12 = vector.extract_strided_slice %7 {offsets = [0, 64], sizes = [128, 8], strides = [1, 1]} : vector<128x96xbf16> to vector<128x8xbf16>
    %13 = vector.shape_cast %12 : vector<128x8xbf16> to vector<2x64x8xbf16>
    "tpu.trace_start"() <{level = 10 : i32, message = "bqd,bkd->bqk"}> : () -> ()
    %cst_5 = arith.constant dense<0.000000e+00> : vector<2x64x64xf32>
    %14 = tpu.matmul %9, %11, %cst_5 {dimension_numbers = #tpu.dot_dimension_numbers<[2], [2], [1], [1], [0, 0, 0, 1, 1, 1], [0], [0]>} : vector<2x64x8xbf16>, vector<2x64x8xbf16>, vector<2x64x64xf32> -> vector<2x64x64xf32>
    "tpu.trace_stop"() : () -> ()
    %c0_6 = arith.constant 0 : index
    %c0_7 = arith.constant 0 : index
    %c0_8 = arith.constant 0 : index
    %15 = vector.load %arg6[%c0_6, %c0_7, %c0_8] : memref<4x64x64xf32, #tpu.memory_space<vmem>>, vector<1x64x64xf32>
    %16 = vector.shape_cast %15 : vector<1x64x64xf32> to vector<64x64xf32>
    %17 = vector.shape_cast %16 : vector<64x64xf32> to vector<1x64x64xf32>
    %18 = vector.broadcast %17 : vector<1x64x64xf32> to vector<2x64x64xf32>
    %19 = arith.addf %14, %18 : vector<2x64x64xf32>
    %cst_9 = arith.constant dense<0xFF800000> : vector<2x64xf32>
    %20 = vector.multi_reduction <maximumf>, %19, %cst_9 [2] : vector<2x64x64xf32> to vector<2x64xf32>
    %21 = vector.shape_cast %20 : vector<2x64xf32> to vector<2x64x1xf32>
    %22 = vector.broadcast %21 : vector<2x64x1xf32> to vector<2x64x64xf32>
    %23 = arith.subf %19, %22 : vector<2x64x64xf32>
    %24 = math.exp %23 : vector<2x64x64xf32>
    %cst_10 = arith.constant dense<0.000000e+00> : vector<2x64xf32>
    %25 = vector.multi_reduction <add>, %24, %cst_10 [2] : vector<2x64x64xf32> to vector<2x64xf32>
    %26 = vector.shape_cast %25 : vector<2x64xf32> to vector<2x64x1xf32>
    %27 = arith.truncf %24 : vector<2x64x64xf32> to vector<2x64x64xbf16>
    "tpu.trace_start"() <{level = 10 : i32, message = "bqk,bkd->bqd"}> : () -> ()
    %cst_11 = arith.constant dense<0.000000e+00> : vector<2x64x8xf32>
    %28 = tpu.matmul %27, %13, %cst_11 {dimension_numbers = #tpu.dot_dimension_numbers<[2], [1], [1], [2], [0, 0, 0, 1, 1, 2], [0], [0]>} : vector<2x64x64xbf16>, vector<2x64x8xbf16>, vector<2x64x8xf32> -> vector<2x64x8xf32>
    "tpu.trace_stop"() : () -> ()
    %29 = tpu.reciprocal %26 {approx = true} : vector<2x64x1xf32> -> vector<2x64x1xf32>
    %30 = vector.broadcast %29 : vector<2x64x1xf32> to vector<2x64x8xf32>
    %31 = arith.mulf %28, %30 : vector<2x64x8xf32>
    %32 = vector.shape_cast %31 : vector<2x64x8xf32> to vector<128x8xf32>
    %33 = vector.extract_strided_slice %7 {offsets = [0, 8], sizes = [128, 8], strides = [1, 1]} : vector<128x96xbf16> to vector<128x8xbf16>
    %34 = vector.shape_cast %33 : vector<128x8xbf16> to vector<2x64x8xbf16>
    %35 = vector.extract_strided_slice %7 {offsets = [0, 40], sizes = [128, 8], strides = [1, 1]} : vector<128x96xbf16> to vector<128x8xbf16>
    %36 = vector.shape_cast %35 : vector<128x8xbf16> to vector<2x64x8xbf16>
    %37 = vector.extract_strided_slice %7 {offsets = [0, 72], sizes = [128, 8], strides = [1, 1]} : vector<128x96xbf16> to vector<128x8xbf16>
    %38 = vector.shape_cast %37 : vector<128x8xbf16> to vector<2x64x8xbf16>
    "tpu.trace_start"() <{level = 10 : i32, message = "bqd,bkd->bqk"}> : () -> ()
    %cst_12 = arith.constant dense<0.000000e+00> : vector<2x64x64xf32>
    %39 = tpu.matmul %34, %36, %cst_12 {dimension_numbers = #tpu.dot_dimension_numbers<[2], [2], [1], [1], [0, 0, 0, 1, 1, 1], [0], [0]>} : vector<2x64x8xbf16>, vector<2x64x8xbf16>, vector<2x64x64xf32> -> vector<2x64x64xf32>
    "tpu.trace_stop"() : () -> ()
    %c1 = arith.constant 1 : index
    %c0_13 = arith.constant 0 : index
    %c0_14 = arith.constant 0 : index
    %40 = vector.load %arg6[%c1, %c0_13, %c0_14] : memref<4x64x64xf32, #tpu.memory_space<vmem>>, vector<1x64x64xf32>
    %41 = vector.shape_cast %40 : vector<1x64x64xf32> to vector<64x64xf32>
    %42 = vector.shape_cast %41 : vector<64x64xf32> to vector<1x64x64xf32>
    %43 = vector.broadcast %42 : vector<1x64x64xf32> to vector<2x64x64xf32>
    %44 = arith.addf %39, %43 : vector<2x64x64xf32>
    %cst_15 = arith.constant dense<0xFF800000> : vector<2x64xf32>
    %45 = vector.multi_reduction <maximumf>, %44, %cst_15 [2] : vector<2x64x64xf32> to vector<2x64xf32>
    %46 = vector.shape_cast %45 : vector<2x64xf32> to vector<2x64x1xf32>
    %47 = vector.broadcast %46 : vector<2x64x1xf32> to vector<2x64x64xf32>
    %48 = arith.subf %44, %47 : vector<2x64x64xf32>
    %49 = math.exp %48 : vector<2x64x64xf32>
    %cst_16 = arith.constant dense<0.000000e+00> : vector<2x64xf32>
    %50 = vector.multi_reduction <add>, %49, %cst_16 [2] : vector<2x64x64xf32> to vector<2x64xf32>
    %51 = vector.shape_cast %50 : vector<2x64xf32> to vector<2x64x1xf32>
    %52 = arith.truncf %49 : vector<2x64x64xf32> to vector<2x64x64xbf16>
    "tpu.trace_start"() <{level = 10 : i32, message = "bqk,bkd->bqd"}> : () -> ()
    %cst_17 = arith.constant dense<0.000000e+00> : vector<2x64x8xf32>
    %53 = tpu.matmul %52, %38, %cst_17 {dimension_numbers = #tpu.dot_dimension_numbers<[2], [1], [1], [2], [0, 0, 0, 1, 1, 2], [0], [0]>} : vector<2x64x64xbf16>, vector<2x64x8xbf16>, vector<2x64x8xf32> -> vector<2x64x8xf32>
    "tpu.trace_stop"() : () -> ()
    %54 = tpu.reciprocal %51 {approx = true} : vector<2x64x1xf32> -> vector<2x64x1xf32>
    %55 = vector.broadcast %54 : vector<2x64x1xf32> to vector<2x64x8xf32>
    %56 = arith.mulf %53, %55 : vector<2x64x8xf32>
    %57 = vector.shape_cast %56 : vector<2x64x8xf32> to vector<128x8xf32>
    %58 = vector.extract_strided_slice %7 {offsets = [0, 16], sizes = [128, 8], strides = [1, 1]} : vector<128x96xbf16> to vector<128x8xbf16>
    %59 = vector.shape_cast %58 : vector<128x8xbf16> to vector<2x64x8xbf16>
    %60 = vector.extract_strided_slice %7 {offsets = [0, 48], sizes = [128, 8], strides = [1, 1]} : vector<128x96xbf16> to vector<128x8xbf16>
    %61 = vector.shape_cast %60 : vector<128x8xbf16> to vector<2x64x8xbf16>
    %62 = vector.extract_strided_slice %7 {offsets = [0, 80], sizes = [128, 8], strides = [1, 1]} : vector<128x96xbf16> to vector<128x8xbf16>
    %63 = vector.shape_cast %62 : vector<128x8xbf16> to vector<2x64x8xbf16>
    "tpu.trace_start"() <{level = 10 : i32, message = "bqd,bkd->bqk"}> : () -> ()
    %cst_18 = arith.constant dense<0.000000e+00> : vector<2x64x64xf32>
    %64 = tpu.matmul %59, %61, %cst_18 {dimension_numbers = #tpu.dot_dimension_numbers<[2], [2], [1], [1], [0, 0, 0, 1, 1, 1], [0], [0]>} : vector<2x64x8xbf16>, vector<2x64x8xbf16>, vector<2x64x64xf32> -> vector<2x64x64xf32>
    "tpu.trace_stop"() : () -> ()
    %c2 = arith.constant 2 : index
    %c0_19 = arith.constant 0 : index
    %c0_20 = arith.constant 0 : index
    %65 = vector.load %arg6[%c2, %c0_19, %c0_20] : memref<4x64x64xf32, #tpu.memory_space<vmem>>, vector<1x64x64xf32>
    %66 = vector.shape_cast %65 : vector<1x64x64xf32> to vector<64x64xf32>
    %67 = vector.shape_cast %66 : vector<64x64xf32> to vector<1x64x64xf32>
    %68 = vector.broadcast %67 : vector<1x64x64xf32> to vector<2x64x64xf32>
    %69 = arith.addf %64, %68 : vector<2x64x64xf32>
    %cst_21 = arith.constant dense<0xFF800000> : vector<2x64xf32>
    %70 = vector.multi_reduction <maximumf>, %69, %cst_21 [2] : vector<2x64x64xf32> to vector<2x64xf32>
    %71 = vector.shape_cast %70 : vector<2x64xf32> to vector<2x64x1xf32>
    %72 = vector.broadcast %71 : vector<2x64x1xf32> to vector<2x64x64xf32>
    %73 = arith.subf %69, %72 : vector<2x64x64xf32>
    %74 = math.exp %73 : vector<2x64x64xf32>
    %cst_22 = arith.constant dense<0.000000e+00> : vector<2x64xf32>
    %75 = vector.multi_reduction <add>, %74, %cst_22 [2] : vector<2x64x64xf32> to vector<2x64xf32>
    %76 = vector.shape_cast %75 : vector<2x64xf32> to vector<2x64x1xf32>
    %77 = arith.truncf %74 : vector<2x64x64xf32> to vector<2x64x64xbf16>
    "tpu.trace_start"() <{level = 10 : i32, message = "bqk,bkd->bqd"}> : () -> ()
    %cst_23 = arith.constant dense<0.000000e+00> : vector<2x64x8xf32>
    %78 = tpu.matmul %77, %63, %cst_23 {dimension_numbers = #tpu.dot_dimension_numbers<[2], [1], [1], [2], [0, 0, 0, 1, 1, 2], [0], [0]>} : vector<2x64x64xbf16>, vector<2x64x8xbf16>, vector<2x64x8xf32> -> vector<2x64x8xf32>
    "tpu.trace_stop"() : () -> ()
    %79 = tpu.reciprocal %76 {approx = true} : vector<2x64x1xf32> -> vector<2x64x1xf32>
    %80 = vector.broadcast %79 : vector<2x64x1xf32> to vector<2x64x8xf32>
    %81 = arith.mulf %78, %80 : vector<2x64x8xf32>
    %82 = vector.shape_cast %81 : vector<2x64x8xf32> to vector<128x8xf32>
    %83 = vector.extract_strided_slice %7 {offsets = [0, 24], sizes = [128, 8], strides = [1, 1]} : vector<128x96xbf16> to vector<128x8xbf16>
    %84 = vector.shape_cast %83 : vector<128x8xbf16> to vector<2x64x8xbf16>
    %85 = vector.extract_strided_slice %7 {offsets = [0, 56], sizes = [128, 8], strides = [1, 1]} : vector<128x96xbf16> to vector<128x8xbf16>
    %86 = vector.shape_cast %85 : vector<128x8xbf16> to vector<2x64x8xbf16>
    %87 = vector.extract_strided_slice %7 {offsets = [0, 88], sizes = [128, 8], strides = [1, 1]} : vector<128x96xbf16> to vector<128x8xbf16>
    %88 = vector.shape_cast %87 : vector<128x8xbf16> to vector<2x64x8xbf16>
    "tpu.trace_start"() <{level = 10 : i32, message = "bqd,bkd->bqk"}> : () -> ()
    %cst_24 = arith.constant dense<0.000000e+00> : vector<2x64x64xf32>
    %89 = tpu.matmul %84, %86, %cst_24 {dimension_numbers = #tpu.dot_dimension_numbers<[2], [2], [1], [1], [0, 0, 0, 1, 1, 1], [0], [0]>} : vector<2x64x8xbf16>, vector<2x64x8xbf16>, vector<2x64x64xf32> -> vector<2x64x64xf32>
    "tpu.trace_stop"() : () -> ()
    %c3 = arith.constant 3 : index
    %c0_25 = arith.constant 0 : index
    %c0_26 = arith.constant 0 : index
    %90 = vector.load %arg6[%c3, %c0_25, %c0_26] : memref<4x64x64xf32, #tpu.memory_space<vmem>>, vector<1x64x64xf32>
    %91 = vector.shape_cast %90 : vector<1x64x64xf32> to vector<64x64xf32>
    %92 = vector.shape_cast %91 : vector<64x64xf32> to vector<1x64x64xf32>
    %93 = vector.broadcast %92 : vector<1x64x64xf32> to vector<2x64x64xf32>
    %94 = arith.addf %89, %93 : vector<2x64x64xf32>
    %cst_27 = arith.constant dense<0xFF800000> : vector<2x64xf32>
    %95 = vector.multi_reduction <maximumf>, %94, %cst_27 [2] : vector<2x64x64xf32> to vector<2x64xf32>
    %96 = vector.shape_cast %95 : vector<2x64xf32> to vector<2x64x1xf32>
    %97 = vector.broadcast %96 : vector<2x64x1xf32> to vector<2x64x64xf32>
    %98 = arith.subf %94, %97 : vector<2x64x64xf32>
    %99 = math.exp %98 : vector<2x64x64xf32>
    %cst_28 = arith.constant dense<0.000000e+00> : vector<2x64xf32>
    %100 = vector.multi_reduction <add>, %99, %cst_28 [2] : vector<2x64x64xf32> to vector<2x64xf32>
    %101 = vector.shape_cast %100 : vector<2x64xf32> to vector<2x64x1xf32>
    %102 = arith.truncf %99 : vector<2x64x64xf32> to vector<2x64x64xbf16>
    "tpu.trace_start"() <{level = 10 : i32, message = "bqk,bkd->bqd"}> : () -> ()
    %cst_29 = arith.constant dense<0.000000e+00> : vector<2x64x8xf32>
    %103 = tpu.matmul %102, %88, %cst_29 {dimension_numbers = #tpu.dot_dimension_numbers<[2], [1], [1], [2], [0, 0, 0, 1, 1, 2], [0], [0]>} : vector<2x64x64xbf16>, vector<2x64x8xbf16>, vector<2x64x8xf32> -> vector<2x64x8xf32>
    "tpu.trace_stop"() : () -> ()
    %104 = tpu.reciprocal %101 {approx = true} : vector<2x64x1xf32> -> vector<2x64x1xf32>
    %105 = vector.broadcast %104 : vector<2x64x1xf32> to vector<2x64x8xf32>
    %106 = arith.mulf %103, %105 : vector<2x64x8xf32>
    %107 = vector.shape_cast %106 : vector<2x64x8xf32> to vector<128x8xf32>
    %108 = tpu.concatenate %32, %57, %82, %107 in 1 : vector<128x8xf32>, vector<128x8xf32>, vector<128x8xf32>, vector<128x8xf32> -> vector<128x32xf32>
    %109 = arith.truncf %108 : vector<128x32xf32> to vector<128x32xbf16>
    %c0_30 = arith.constant 0 : index
    %c0_31 = arith.constant 0 : index
    %110 = vector.load %arg4[%c0_30, %c0_31] : memref<32x32xbf16, #tpu.memory_space<vmem>>, vector<32x32xbf16>
    %cst_32 = arith.constant dense<0.000000e+00> : vector<128x32xf32>
    %111 = tpu.matmul %109, %110, %cst_32 {dimension_numbers = #tpu.dot_dimension_numbers<[1], [0], [0], [1], [0, 0, 1, 1], [], []>} : vector<128x32xbf16>, vector<32x32xbf16>, vector<128x32xf32> -> vector<128x32xf32>
    %c0_33 = arith.constant 0 : index
    %c0_34 = arith.constant 0 : index
    %112 = vector.load %arg5[%c0_33, %c0_34] : memref<1x32xbf16, #tpu.memory_space<vmem>>, vector<1x32xbf16>
    %113 = arith.extf %112 : vector<1x32xbf16> to vector<1x32xf32>
    %114 = vector.broadcast %113 : vector<1x32xf32> to vector<128x32xf32>
    %115 = arith.addf %111, %114 : vector<128x32xf32>
    %c0_35 = arith.constant 0 : index
    %c0_36 = arith.constant 0 : index
    %116 = vector.load %arg7[%c0_35, %c0_36] : memref<128x32xf32, #tpu.memory_space<vmem>>, vector<128x32xf32>
    tpu.vector_store %arg7[%c0_35, %c0_36], %115 {strides = array<i32>} : memref<128x32xf32, #tpu.memory_space<vmem>>, vector<128x32xf32>,
    return
  }
  func.func @transform_0(%arg0: i32) -> (i32, i32) {
    %c0_i32 = arith.constant 0 : i32
    %c0_i32_0 = arith.constant 0 : i32
    return %arg0, %c0_i32 : i32, i32
  }
  func.func @transform_1(%arg0: i32) -> (i32, i32) {
    %c0_i32 = arith.constant 0 : i32
    %c0_i32_0 = arith.constant 0 : i32
    %c0_i32_1 = arith.constant 0 : i32
    return %c0_i32, %c0_i32_0 : i32, i32
  }
  func.func @transform_2(%arg0: i32) -> (i32, i32) {
    %c0_i32 = arith.constant 0 : i32
    %c0_i32_0 = arith.constant 0 : i32
    %c0_i32_1 = arith.constant 0 : i32
    return %c0_i32, %c0_i32_0 : i32, i32
  }
  func.func @transform_3(%arg0: i32) -> (i32, i32) {
    %c0_i32 = arith.constant 0 : i32
    %c0_i32_0 = arith.constant 0 : i32
    %c0_i32_1 = arith.constant 0 : i32
    return %c0_i32, %c0_i32_0 : i32, i32
  }
  func.func @transform_4(%arg0: i32) -> (i32, i32) {
    %c0_i32 = arith.constant 0 : i32
    %c0_i32_0 = arith.constant 0 : i32
    %c0_i32_1 = arith.constant 0 : i32
    return %c0_i32, %c0_i32_0 : i32, i32
  }
  func.func @transform_5(%arg0: i32) -> (i32, i32, i32) {
    %c0_i32 = arith.constant 0 : i32
    %c0_i32_0 = arith.constant 0 : i32
    %c0_i32_1 = arith.constant 0 : i32
    %c0_i32_2 = arith.constant 0 : i32
    return %c0_i32, %c0_i32_0, %c0_i32_1 : i32, i32, i32
  }
  func.func @transform_6(%arg0: i32) -> (i32, i32) {
    %c0_i32 = arith.constant 0 : i32
    %c0_i32_0 = arith.constant 0 : i32
    return %arg0, %c0_i32 : i32, i32
  }
}

</mosaic_0001>

<llo_original>
// kernel: tpu_custom_call.1
$region0: #{tpu_custom_call.1}
  #allocation0 [shape = 'u32[]', space=smem, size = 0x4, offset = 0x4, fixed_abs, tag = 'smem constant byte address 0x4 - core index']
  #allocation1 [shape = 'u32[144,128]{1,0:T(1,128)}', space=vmem, size = 0x12000, scoped, tag = 'internal scratch']
  %s0 = inlined_call_operand.vmem [shape: bf16[512,32], index: 0, kind: input, shape index: {}]
  %s1 = inlined_call_operand.vmem [shape: bf16[32,96], index: 1, kind: input, shape index: {}]
  %s2 = inlined_call_operand.vmem [shape: bf16[1,96], index: 2, kind: input, shape index: {}]
  %s3 = inlined_call_operand.vmem [shape: bf16[32,32], index: 3, kind: input, shape index: {}]
  %s4 = inlined_call_operand.vmem [shape: bf16[1,32], index: 4, kind: input, shape index: {}]
  %s5 = inlined_call_operand.vmem [shape: f32[4,64,64], index: 5, kind: input, shape index: {}]
  %s6 = inlined_call_operand.vmem [shape: f32[512,32], index: 6, kind: output, shape index: {}]
  %s7 = sld [smem:[#allocation0]]
  $region57: #{tpu_custom_call.1} parent=0
    _
  %s9 = ssub.s32 1, %s7
  %s10 = scalar_select 0, %s9, %s7
  loop: start=0, step=1, limit=6
  $region2: #{tpu_custom_call.1} parent=0 // loop_pre_header
    _
  $region3: #{tpu_custom_call.1} parent=0 // loop_header
    %s12 = sphi 0, %s16
    %p13 = scmp.ge.s32.totalorder %s12, 6
    %s22 = sphi 0, %s24
    %s25 = sphi 0, %s22
    %s26 = sphi 0, %s25
    %s42 = sphi 0, %s26
    %s46 = sphi 0, %s46
    %s48 = sphi 0, %s46
    %s49 = sphi 0, %s48
    %s63 = sphi 0, %s49
    %s67 = sphi 0, %s67
    %s69 = sphi 0, %s67
    %s70 = sphi 0, %s69
    %s84 = sphi 0, %s70
    %s88 = sphi 0, %s88
    %s90 = sphi 0, %s88
    %s91 = sphi 0, %s90
    %s105 = sphi 0, %s91
    %s109 = sphi 0, %s109
    %s111 = sphi 0, %s109
    %s112 = sphi 0, %s111
    %s126 = sphi 0, %s112
    %s130 = sphi 0, %s130
    %s132 = sphi 0, %s130
    %s133 = sphi 0, %s132
    %s147 = sphi 0, %s133
    %s153 = sphi 0, %s155
    %s156 = sphi 0, %s153
    %s157 = sphi 0, %s156
    %s173 = sphi 0, %s157
  $region4: #{tpu_custom_call.1} parent=0 // loop_header_branch
    %15 = sbr.rel (%p13) target = $region8
  $region5: #{tpu_custom_call.1} parent=0 // loop_body
    %s17 = ssub.s32 %s12, 1
    %s18 = ssub.s32 %s12, 2
    %s19 = sadd.s32 %s12, 1
    %s20 = ssub.s32 %s12, %s19
    %p21 = scmp.eq.s32.totalorder %s20, 0
    %s23 = sadd.s32 %s22, 1
    %s24 = scalar_select %p21, %s22, %s23
    %p27 = pneg %p21
    %p28 = scmp.eq.s32.totalorder %s12, 3
    %p29 = por %p27, %p28
    %p30 = scmp.ne.s32.totalorder %s22, %s25
    %p31 = scmp.eq.s32.totalorder %s12, 0
    %p32 = por %p30, %p31
    %p33 = scmp.ne.s32.totalorder %s22, %s25
    %p34 = scmp.eq.s32.totalorder %s17, 3
    %p35 = por %p33, %p34
    %p36 = scmp.ne.s32.totalorder %s25, %s26
    %p37 = scmp.eq.s32.totalorder %s17, 0
    %p38 = por %p36, %p37
    %p39 = scmp.ne.s32.totalorder %s25, %s26
    %p40 = scmp.eq.s32.totalorder %s18, 3
    %p41 = por %p39, %p40
    %p43 = scmp.ne.s32.totalorder %s26, %s42
    %p44 = scmp.eq.s32.totalorder %s18, 0
    %p45 = por %p43, %p44
    %s47 = sadd.s32 %s46, 1
    %p50 = scmp.eq.s32.totalorder %s12, 3
    %p51 = scmp.ne.s32.totalorder %s46, %s48
    %p52 = scmp.eq.s32.totalorder %s12, 0
    %p53 = por %p51, %p52
    %p54 = scmp.ne.s32.totalorder %s46, %s48
    %p55 = scmp.eq.s32.totalorder %s17, 3
    %p56 = por %p54, %p55
    %p57 = scmp.ne.s32.totalorder %s48, %s49
    %p58 = scmp.eq.s32.totalorder %s17, 0
    %p59 = por %p57, %p58
    %p60 = scmp.ne.s32.totalorder %s48, %s49
    %p61 = scmp.eq.s32.totalorder %s18, 3
    %p62 = por %p60, %p61
    %p64 = scmp.ne.s32.totalorder %s49, %s63
    %p65 = scmp.eq.s32.totalorder %s18, 0
    %p66 = por %p64, %p65
    %s68 = sadd.s32 %s67, 1
    %p71 = scmp.eq.s32.totalorder %s12, 3
    %p72 = scmp.ne.s32.totalorder %s67, %s69
    %p73 = scmp.eq.s32.totalorder %s12, 0
    %p74 = por %p72, %p73
    %p75 = scmp.ne.s32.totalorder %s67, %s69
    %p76 = scmp.eq.s32.totalorder %s17, 3
    %p77 = por %p75, %p76
    %p78 = scmp.ne.s32.totalorder %s69, %s70
    %p79 = scmp.eq.s32.totalorder %s17, 0
    %p80 = por %p78, %p79
    %p81 = scmp.ne.s32.totalorder %s69, %s70
    %p82 = scmp.eq.s32.totalorder %s18, 3
    %p83 = por %p81, %p82
    %p85 = scmp.ne.s32.totalorder %s70, %s84
    %p86 = scmp.eq.s32.totalorder %s18, 0
    %p87 = por %p85, %p86
    %s89 = sadd.s32 %s88, 1
    %p92 = scmp.eq.s32.totalorder %s12, 3
    %p93 = scmp.ne.s32.totalorder %s88, %s90
    %p94 = scmp.eq.s32.totalorder %s12, 0
    %p95 = por %p93, %p94
    %p96 = scmp.ne.s32.totalorder %s88, %s90
    %p97 = scmp.eq.s32.totalorder %s17, 3
    %p98 = por %p96, %p97
    %p99 = scmp.ne.s32.totalorder %s90, %s91
    %p100 = scmp.eq.s32.totalorder %s17, 0
    %p101 = por %p99, %p100
    %p102 = scmp.ne.s32.totalorder %s90, %s91
    %p103 = scmp.eq.s32.totalorder %s18, 3
    %p104 = por %p102, %p103
    %p106 = scmp.ne.s32.totalorder %s91, %s105
    %p107 = scmp.eq.s32.totalorder %s18, 0
    %p108 = por %p106, %p107
    %s110 = sadd.s32 %s109, 1
    %p113 = scmp.eq.s32.totalorder %s12, 3
    %p114 = scmp.ne.s32.totalorder %s109, %s111
    %p115 = scmp.eq.s32.totalorder %s12, 0
    %p116 = por %p114, %p115
    %p117 = scmp.ne.s32.totalorder %s109, %s111
    %p118 = scmp.eq.s32.totalorder %s17, 3
    %p119 = por %p117, %p118
    %p120 = scmp.ne.s32.totalorder %s111, %s112
    %p121 = scmp.eq.s32.totalorder %s17, 0
    %p122 = por %p120, %p121
    %p123 = scmp.ne.s32.totalorder %s111, %s112
    %p124 = scmp.eq.s32.totalorder %s18, 3
    %p125 = por %p123, %p124
    %p127 = scmp.ne.s32.totalorder %s112, %s126
    %p128 = scmp.eq.s32.totalorder %s18, 0
    %p129 = por %p127, %p128
    %s131 = sadd.s32 %s130, 1
    %p134 = scmp.eq.s32.totalorder %s12, 3
    %p135 = scmp.ne.s32.totalorder %s130, %s132
    %p136 = scmp.eq.s32.totalorder %s12, 0
    %p137 = por %p135, %p136
    %p138 = scmp.ne.s32.totalorder %s130, %s132
    %p139 = scmp.eq.s32.totalorder %s17, 3
    %p140 = por %p138, %p139
    %p141 = scmp.ne.s32.totalorder %s132, %s133
    %p142 = scmp.eq.s32.totalorder %s17, 0
    %p143 = por %p141, %p142
    %p144 = scmp.ne.s32.totalorder %s132, %s133
    %p145 = scmp.eq.s32.totalorder %s18, 3
    %p146 = por %p144, %p145
    %p148 = scmp.ne.s32.totalorder %s133, %s147
    %p149 = scmp.eq.s32.totalorder %s18, 0
    %p150 = por %p148, %p149
    %s151 = ssub.s32 %s12, %s19
    %p152 = scmp.eq.s32.totalorder %s151, 0
    %s154 = sadd.s32 %s153, 1
    %s155 = scalar_select %p152, %s153, %s154
    %p158 = pneg %p152
    %p159 = scmp.eq.s32.totalorder %s12, 3
    %p160 = por %p158, %p159
    %p161 = scmp.ne.s32.totalorder %s153, %s156
    %p162 = scmp.eq.s32.totalorder %s12, 0
    %p163 = por %p161, %p162
    %p164 = scmp.ne.s32.totalorder %s153, %s156
    %p165 = scmp.eq.s32.totalorder %s17, 3
    %p166 = por %p164, %p165
    %p167 = scmp.ne.s32.totalorder %s156, %s157
    %p168 = scmp.eq.s32.totalorder %s17, 0
    %p169 = por %p167, %p168
    %p170 = scmp.ne.s32.totalorder %s156, %s157
    %p171 = scmp.eq.s32.totalorder %s18, 3
    %p172 = por %p170, %p171
    %p174 = scmp.ne.s32.totalorder %s157, %s173
    %p175 = scmp.eq.s32.totalorder %s18, 0
    %p176 = por %p174, %p175
    %p177 = scmp.le.s32.totalorder 1, %s12
    %p178 = scmp.lt.s32.totalorder %s12, 5
    %p179 = pnand %p177, %p178
    %p180 = pneg %p179
    // Predicated region
    $region9: #{tpu_custom_call.1} parent=5 // pred_check
      _
    $region10: #{tpu_custom_call.1} parent=5 // pred_check_branch
      %182 = sbr.rel (%p179) target = $region12
    $region11: #{tpu_custom_call.1} parent=5 // pred_region
      %s183 = ssub.s32 %s12, 1
      // Predicated region
      $region13: #{tpu_custom_call.1} parent=11 // pred_check
        %p184 = pneg %p59
      $region14: #{tpu_custom_call.1} parent=11 // pred_check_branch
        %186 = sbr.rel (%p184) target = $region16
      $region15: #{tpu_custom_call.1} parent=11 // pred_region
        _
      $region16: #{tpu_custom_call.1} parent=11 // pred_fallthru
        _
      // Predicated region
      $region17: #{tpu_custom_call.1} parent=11 // pred_check
        %p187 = pneg %p80
      $region18: #{tpu_custom_call.1} parent=11 // pred_check_branch
        %189 = sbr.rel (%p187) target = $region20
      $region19: #{tpu_custom_call.1} parent=11 // pred_region
        _
      $region20: #{tpu_custom_call.1} parent=11 // pred_fallthru
        _
      // Predicated region
      $region21: #{tpu_custom_call.1} parent=11 // pred_check
        %p190 = pneg %p101
      $region22: #{tpu_custom_call.1} parent=11 // pred_check_branch
        %192 = sbr.rel (%p190) target = $region24
      $region23: #{tpu_custom_call.1} parent=11 // pred_region
        _
      $region24: #{tpu_custom_call.1} parent=11 // pred_fallthru
        _
      // Predicated region
      $region25: #{tpu_custom_call.1} parent=11 // pred_check
        %p193 = pneg %p122
      $region26: #{tpu_custom_call.1} parent=11 // pred_check_branch
        %195 = sbr.rel (%p193) target = $region28
      $region27: #{tpu_custom_call.1} parent=11 // pred_region
        _
      $region28: #{tpu_custom_call.1} parent=11 // pred_fallthru
        _
      // Predicated region
      $region29: #{tpu_custom_call.1} parent=11 // pred_check
        %p196 = pneg %p143
      $region30: #{tpu_custom_call.1} parent=11 // pred_check_branch
        %198 = sbr.rel (%p196) target = $region32
      $region31: #{tpu_custom_call.1} parent=11 // pred_region
        _
      $region32: #{tpu_custom_call.1} parent=11 // pred_fallthru
        _
    $region12: #{tpu_custom_call.1} parent=5 // pred_fallthru
      _
    %p199 = scmp.lt.s32.totalorder %s12, 4
    // Predicated region
    $region33: #{tpu_custom_call.1} parent=5 // pred_check
      %p200 = pneg %p199
    $region34: #{tpu_custom_call.1} parent=5 // pred_check_branch
      %202 = sbr.rel (%p200) target = $region36
    $region35: #{tpu_custom_call.1} parent=5 // pred_region
      // Predicated region
      $region37: #{tpu_custom_call.1} parent=35 // pred_check
        %p203 = pneg %p32
      $region38: #{tpu_custom_call.1} parent=35 // pred_check_branch
        %205 = sbr.rel (%p203) target = $region40
      $region39: #{tpu_custom_call.1} parent=35 // pred_region
        %s206 = smul.u32 16, %s12
        %p207 = scmp.lt.s32.totalorder %s206, 63
        %s208 = scalar_select %p207, %s206, 63
        %s209 = smul.addr %s208, 4
        %s210 = scalar_lea.vmem %s0, %s209
        %s211 = smul.u32 16, %s12
      $region40: #{tpu_custom_call.1} parent=35 // pred_fallthru
        _
    $region36: #{tpu_custom_call.1} parent=5 // pred_fallthru
      _
    %p212 = scmp.le.s32.totalorder 1, %s12
    %p213 = scmp.lt.s32.totalorder %s12, 5
    %p214 = pnand %p212, %p213
    %p215 = pneg %p214
    // Predicated region
    $region41: #{tpu_custom_call.1} parent=5 // pred_check
      _
    $region42: #{tpu_custom_call.1} parent=5 // pred_check_branch
      %217 = sbr.rel (%p214) target = $region44
    $region43: #{tpu_custom_call.1} parent=5 // pred_region
      %s218 = ssub.s32 %s12, 1
      %s219 = smul.u32 16, %s17
      %p220 = scmp.lt.s32.totalorder %s219, 63
      %s221 = scalar_select %p220, %s219, 63
      %s222 = smul.addr %s221, 4
      %s223 = scalar_lea.vmem %s0, %s222
      %p224 = pneg %p38
      %p225 = pneg %p35
      %p226 = pneg %p59
      %p227 = pneg %p56
      %p228 = pneg %p80
      %p229 = pneg %p77
      %p230 = pneg %p101
      %p231 = pneg %p98
      %p232 = pneg %p122
      %p233 = pneg %p119
      %p234 = pneg %p143
      %p235 = pneg %p140
      %p236 = pneg %p169
      %p237 = pneg %p166
      %s238 = smul.u32 16, %s17
      %p239 = scmp.lt.s32.totalorder %s238, 63
      %s240 = scalar_select %p239, %s238, 63
      %s241 = smul.addr %s240, 8
      %s242 = scalar_lea.vmem %s6, %s241
      %s243 = smul.u32 16, %s17
      %p244 = scmp.lt.s32.totalorder %s243, 63
      %s245 = scalar_select %p244, %s243, 63
      %s246 = smul.addr %s245, 4
      %s247 = scalar_lea.vmem %s0, %s246
      %s248 = smul.u32 16, %s17
      %s249 = smul.u32 16, %s17
      %p250 = scmp.lt.s32.totalorder %s249, 63
      %s251 = scalar_select %p250, %s249, 63
      %s252 = smul.addr %s251, 8
      %s253 = scalar_lea.vmem %s6, %s252
      %s254 = smul.u32 16, %s17
      %v256 = vld [vmem:[%s247] sm:$0xf]
      %v257 = vld [vmem:[%s247 + $0x4] sm:$0xf]
      %v258 = vld [vmem:[%s247 + $0x8] sm:$0xf]
      %v259 = vld [vmem:[%s247 + $0xc] sm:$0xf]
      %v260 = vld [vmem:[%s247 + $0x10] sm:$0xf]
      %v261 = vld [vmem:[%s247 + $0x14] sm:$0xf]
      %v262 = vld [vmem:[%s247 + $0x18] sm:$0xf]
      %v263 = vld [vmem:[%s247 + $0x1c] sm:$0xf]
      %v264 = vld [vmem:[%s247 + $0x20] sm:$0xf]
      %v265 = vld [vmem:[%s247 + $0x24] sm:$0xf]
      %v266 = vld [vmem:[%s247 + $0x28] sm:$0xf]
      %v267 = vld [vmem:[%s247 + $0x2c] sm:$0xf]
      %v268 = vld [vmem:[%s247 + $0x30] sm:$0xf]
      %v269 = vld [vmem:[%s247 + $0x34] sm:$0xf]
      %v270 = vld [vmem:[%s247 + $0x38] sm:$0xf]
      %v271 = vld [vmem:[%s247 + $0x3c] sm:$0xf]
      %v272 = vld [vmem:[%s1] sm:$0xf]
      %v273 = vld [vmem:[%s1 + $0x4] sm:$0xf]
      %v274 = vld [vmem:[%s1 + $0x8] sm:$0xf]
      %v275 = vld [vmem:[%s1 + $0xc] sm:$0xf]
      %v276 = vld [vmem:[%s2] sm:$0x1]
      %v277 = vunpack.c.l.bf16 %v276
      %v278 = vlaneseq
      %v279 = vshrl.u32 %v278, 7
      %v280 = vsub.s32 0, %v279
      %v281 = vrot.slane %v277, %v280
      %v298 = vunpack.c.l.b16 %v256
      %v299 = vunpack.c.l.b16 %v257
      %v300 = vunpack.c.l.b16 %v258
      %v301 = vunpack.c.l.b16 %v259
      %v302 = vunpack.c.l.b16 %v260
      %v303 = vunpack.c.l.b16 %v261
      %v304 = vunpack.c.l.b16 %v262
      %v305 = vunpack.c.l.b16 %v263
      %v306 = vunpack.c.l.b16 %v264
      %v307 = vunpack.c.l.b16 %v265
      %v308 = vunpack.c.l.b16 %v266
      %v309 = vunpack.c.l.b16 %v267
      %v310 = vunpack.c.l.b16 %v268
      %v311 = vunpack.c.l.b16 %v269
      %v312 = vunpack.c.l.b16 %v270
      %v313 = vunpack.c.l.b16 %v271
      %v314 = vpack.c.b16 %v299, %v298
      %v315 = vpack.c.b16 %v301, %v300
      %v316 = vpack.c.b16 %v303, %v302
      %v317 = vpack.c.b16 %v305, %v304
      %v318 = vpack.c.b16 %v307, %v306
      %v319 = vpack.c.b16 %v309, %v308
      %v320 = vpack.c.b16 %v311, %v310
      %v321 = vpack.c.b16 %v313, %v312
      %v326 = vunpack.c.l.b16 %v272
      %v327 = vunpack.c.l.b16 %v273
      %v328 = vunpack.c.l.b16 %v274
      %v329 = vunpack.c.l.b16 %v275
      %v330 = vpack.c.b16 %v327, %v326
      %v331 = vpack.c.b16 %v329, %v328
      %vm334 = vcmask 261120
      %v336 = vsel %vm334, %v314, 0
      %v339 = vsel %vm334, %v315, 0
      %v342 = vsel %vm334, %v316, 0
      %v345 = vsel %vm334, %v317, 0
      %v348 = vsel %vm334, %v318, 0
      %v351 = vsel %vm334, %v319, 0
      %v354 = vsel %vm334, %v320, 0
      %v357 = vsel %vm334, %v321, 0
      %359 = vmatprep.subr.bf16.mxu0 0
      %360 = vmatpush1.bf16.msra.mxu0 0
      %361 = vmatprep.subr.bf16.mxu0 0
      %362 = vmatpush1.bf16.msra.mxu0 0
      %363 = vmatprep.subr.bf16.mxu0 0
      %364 = vmatpush1.bf16.msra.mxu0 0
      %365 = vmatprep.subr.bf16.mxu0 0
      %366 = vmatpush1.bf16.msra.mxu0 0
      %367 = vmatprep.subr.bf16.mxu0 0
      %368 = vmatpush1.bf16.msra.mxu0 0
      %369 = vmatprep.subr.bf16.mxu0 0
      %370 = vmatpush1.bf16.msra.mxu0 0
      %371 = vmatprep.subr.bf16.mxu0 0
      %372 = vmatpush1.bf16.msra.mxu0 %v331
      %373 = vmatprep.subr.bf16.mxu0 0
      %374 = vmatpush1.bf16.msra.mxu0 %v330
      %375 = vmatprep.subr.bf16.mxu0 0
      %376 = vmatpush2.bf16.msra.mxu0 0
      %377 = vmatprep.subr.bf16.mxu0 0
      %378 = vmatpush2.bf16.msra.mxu0 0
      %379 = vmatprep.subr.bf16.mxu0 0
      %380 = vmatpush2.bf16.msra.mxu0 0
      %381 = vmatprep.subr.bf16.mxu0 0
      %382 = vmatpush2.bf16.msra.mxu0 0
      %383 = vmatprep.subr.bf16.mxu0 0
      %384 = vmatpush2.bf16.msra.mxu0 0
      %385 = vmatprep.subr.bf16.mxu0 0
      %386 = vmatpush2.bf16.msra.mxu0 0
      %387 = vmatprep.subr.bf16.mxu0 0
      %388 = vmatpush2.bf16.msra.mxu0 0
      %389 = vmatprep.subr.bf16.mxu0 0
      %390 = vmatpush2.bf16.msra.mxu0 0
      %391 = vmatprep.mubr.bf16.mxu0 0
      %392 = vmatmul.mubr.bf16.gmra.mxu0 %v336
      %v393 = vpop.f32.mrf.mxu0
      %v394 = vadd.f32 %v281, %v393
      %v395 = vpop.f32.mrf.mxu0
      %v396 = vpop.f32.mrf.mxu0
      %v397 = vadd.f32 %v281, %v396
      %v398 = vpop.f32.mrf.mxu0
      %399 = vmatprep.mubr.bf16.mxu0 0
      %400 = vmatmul.mubr.bf16.gmra.mxu0 %v339
      %v401 = vpop.f32.mrf.mxu0
      %v402 = vadd.f32 %v281, %v401
      %v403 = vpop.f32.mrf.mxu0
      %v404 = vpop.f32.mrf.mxu0
      %v405 = vadd.f32 %v281, %v404
      %v406 = vpop.f32.mrf.mxu0
      %407 = vmatprep.mubr.bf16.mxu0 0
      %408 = vmatmul.mubr.bf16.gmra.mxu0 %v342
      %v409 = vpop.f32.mrf.mxu0
      %v410 = vadd.f32 %v281, %v409
      %v411 = vpop.f32.mrf.mxu0
      %v412 = vpop.f32.mrf.mxu0
      %v413 = vadd.f32 %v281, %v412
      %v414 = vpop.f32.mrf.mxu0
      %415 = vmatprep.mubr.bf16.mxu0 0
      %416 = vmatmul.mubr.bf16.gmra.mxu0 %v345
      %v417 = vpop.f32.mrf.mxu0
      %v418 = vadd.f32 %v281, %v417
      %v419 = vpop.f32.mrf.mxu0
      %v420 = vpop.f32.mrf.mxu0
      %v421 = vadd.f32 %v281, %v420
      %v422 = vpop.f32.mrf.mxu0
      %423 = vmatprep.mubr.bf16.mxu0 0
      %424 = vmatmul.mubr.bf16.gmra.mxu0 %v348
      %v425 = vpop.f32.mrf.mxu0
      %v426 = vadd.f32 %v281, %v425
      %v427 = vpop.f32.mrf.mxu0
      %v428 = vpop.f32.mrf.mxu0
      %v429 = vadd.f32 %v281, %v428
      %v430 = vpop.f32.mrf.mxu0
      %431 = vmatprep.mubr.bf16.mxu0 0
      %432 = vmatmul.mubr.bf16.gmra.mxu0 %v351
      %v433 = vpop.f32.mrf.mxu0
      %v434 = vadd.f32 %v281, %v433
      %v435 = vpop.f32.mrf.mxu0
      %v436 = vpop.f32.mrf.mxu0
      %v437 = vadd.f32 %v281, %v436
      %v438 = vpop.f32.mrf.mxu0
      %439 = vmatprep.mubr.bf16.mxu0 0
      %440 = vmatmul.mubr.bf16.gmra.mxu0 %v354
      %v441 = vpop.f32.mrf.mxu0
      %v442 = vadd.f32 %v281, %v441
      %v443 = vpop.f32.mrf.mxu0
      %v444 = vpop.f32.mrf.mxu0
      %v445 = vadd.f32 %v281, %v444
      %v446 = vpop.f32.mrf.mxu0
      %447 = vmatprep.mubr.bf16.mxu0 0
      %448 = vmatmul.mubr.bf16.gmra.mxu0 %v357
      %v449 = vpop.f32.mrf.mxu0
      %v450 = vadd.f32 %v281, %v449
      %v451 = vpop.f32.mrf.mxu0
      %v452 = vpop.f32.mrf.mxu0
      %v453 = vadd.f32 %v281, %v452
      %v454 = vpop.f32.mrf.mxu0
      %455 = vdwg.mxu0
      %v456 = vpack.c.bf16 %v397, %v394
      %v457 = vpack.c.bf16 %v405, %v402
      %v458 = vpack.c.bf16 %v413, %v410
      %v459 = vpack.c.bf16 %v421, %v418
      %v460 = vpack.c.bf16 %v429, %v426
      %v461 = vpack.c.bf16 %v437, %v434
      %v462 = vpack.c.bf16 %v445, %v442
      %v463 = vpack.c.bf16 %v453, %v450
      %v464 = vld [vmem:[%s5] sm:$0xff]
      %v465 = vld [vmem:[%s5 + $0x8] sm:$0xff]
      %v466 = vld [vmem:[%s5 + $0x10] sm:$0xff]
      %v467 = vld [vmem:[%s5 + $0x18] sm:$0xff]
      %v468 = vld [vmem:[%s5 + $0x20] sm:$0xff]
      %v469 = vld [vmem:[%s5 + $0x28] sm:$0xff]
      %v470 = vld [vmem:[%s5 + $0x30] sm:$0xff]
      %v471 = vld [vmem:[%s5 + $0x38] sm:$0xff]
      %476 = vrot.lane.b32.xlu0 %v456, 96
      %v477 = vpop.permute.xlu0 %476
      %478 = vrot.lane.b32.xlu0 %v457, 96
      %v479 = vpop.permute.xlu0 %478
      %480 = vrot.lane.b32.xlu0 %v458, 96
      %v481 = vpop.permute.xlu0 %480
      %482 = vrot.lane.b32.xlu0 %v459, 96
      %v483 = vpop.permute.xlu0 %482
      %vm484 = vcmask 64512
      %v486 = vsel %vm484, %v456, 0
      %v489 = vsel %vm484, %v457, 0
      %v492 = vsel %vm484, %v458, 0
      %v495 = vsel %vm484, %v459, 0
      %v498 = vsel %vm484, %v477, 0
      %v501 = vsel %vm484, %v479, 0
      %v504 = vsel %vm484, %v481, 0
      %v507 = vsel %vm484, %v483, 0
      %509 = vmatprep.subr.bf16.mxu0 0
      %510 = vmatpush1.bf16.xpose.msra.mxu0 0
      %511 = vmatprep.subr.bf16.mxu0 0
      %512 = vmatpush1.bf16.xpose.msra.mxu0 0
      %513 = vmatprep.subr.bf16.mxu0 0
      %514 = vmatpush1.bf16.xpose.msra.mxu0 0
      %515 = vmatprep.subr.bf16.mxu0 0
      %516 = vmatpush1.bf16.xpose.msra.mxu0 0
      %517 = vmatprep.subr.bf16.mxu0 0
      %518 = vmatpush1.bf16.xpose.msra.mxu0 %v507
      %519 = vmatprep.subr.bf16.mxu0 0
      %520 = vmatpush1.bf16.xpose.msra.mxu0 %v504
      %521 = vmatprep.subr.bf16.mxu0 0
      %522 = vmatpush1.bf16.xpose.msra.mxu0 %v501
      %523 = vmatprep.subr.bf16.mxu0 0
      %524 = vmatpush1.bf16.xpose.msra.mxu0 %v498
      %525 = vmatprep.subr.bf16.mxu0 0
      %526 = vmatpush2.bf16.xpose.msra.mxu0 0
      %527 = vmatprep.subr.bf16.mxu0 0
      %528 = vmatpush2.bf16.xpose.msra.mxu0 0
      %529 = vmatprep.subr.bf16.mxu0 0
      %530 = vmatpush2.bf16.xpose.msra.mxu0 0
      %531 = vmatprep.subr.bf16.mxu0 0
      %532 = vmatpush2.bf16.xpose.msra.mxu0 0
      %533 = vmatprep.subr.bf16.mxu0 0
      %534 = vmatpush2.bf16.xpose.msra.mxu0 0
      %535 = vmatprep.subr.bf16.mxu0 0
      %536 = vmatpush2.bf16.xpose.msra.mxu0 0
      %537 = vmatprep.subr.bf16.mxu0 0
      %538 = vmatpush2.bf16.xpose.msra.mxu0 0
      %539 = vmatprep.subr.bf16.mxu0 0
      %540 = vmatpush2.bf16.xpose.msra.mxu0 0
      %541 = vmatprep.mubr.bf16.mxu0 0
      %542 = vmatmul.mubr.bf16.gmra.mxu0 %v486
      %v543 = vpop.f32.mrf.mxu0
      %v544 = vadd.f32 %v464, %v543
      %v545 = vpop.f32.mrf.mxu0
      %v546 = vpop.f32.mrf.mxu0
      %v547 = vadd.f32 %v465, %v546
      %v548 = vpop.f32.mrf.mxu0
      %549 = vmatprep.mubr.bf16.mxu0 0
      %550 = vmatmul.mubr.bf16.gmra.mxu0 %v489
      %v551 = vpop.f32.mrf.mxu0
      %v552 = vadd.f32 %v466, %v551
      %v553 = vpop.f32.mrf.mxu0
      %v554 = vpop.f32.mrf.mxu0
      %v555 = vadd.f32 %v467, %v554
      %v556 = vpop.f32.mrf.mxu0
      %557 = vmatprep.mubr.bf16.mxu0 0
      %558 = vmatmul.mubr.bf16.gmra.mxu0 %v492
      %v559 = vpop.f32.mrf.mxu0
      %v560 = vadd.f32 %v468, %v559
      %v561 = vpop.f32.mrf.mxu0
      %v562 = vpop.f32.mrf.mxu0
      %v563 = vadd.f32 %v469, %v562
      %v564 = vpop.f32.mrf.mxu0
      %565 = vmatprep.mubr.bf16.mxu0 0
      %566 = vmatmul.mubr.bf16.gmra.mxu0 %v495
      %v567 = vpop.f32.mrf.mxu0
      %v568 = vadd.f32 %v470, %v567
      %v569 = vpop.f32.mrf.mxu0
      %v570 = vpop.f32.mrf.mxu0
      %v571 = vadd.f32 %v471, %v570
      %v572 = vpop.f32.mrf.mxu0
      %573 = vdwg.mxu0
      %578 = vrot.lane.b32.xlu0 %v460, 96
      %v579 = vpop.permute.xlu0 %578
      %580 = vrot.lane.b32.xlu0 %v461, 96
      %v581 = vpop.permute.xlu0 %580
      %582 = vrot.lane.b32.xlu0 %v462, 96
      %v583 = vpop.permute.xlu0 %582
      %584 = vrot.lane.b32.xlu0 %v463, 96
      %v585 = vpop.permute.xlu0 %584
      %v587 = vsel %vm484, %v460, 0
      %v590 = vsel %vm484, %v461, 0
      %v593 = vsel %vm484, %v462, 0
      %v596 = vsel %vm484, %v463, 0
      %v599 = vsel %vm484, %v579, 0
      %v602 = vsel %vm484, %v581, 0
      %v605 = vsel %vm484, %v583, 0
      %v608 = vsel %vm484, %v585, 0
      %610 = vmatprep.subr.bf16.mxu0 0
      %611 = vmatpush1.bf16.xpose.msra.mxu0 0
      %612 = vmatprep.subr.bf16.mxu0 0
      %613 = vmatpush1.bf16.xpose.msra.mxu0 0
      %614 = vmatprep.subr.bf16.mxu0 0
      %615 = vmatpush1.bf16.xpose.msra.mxu0 0
      %616 = vmatprep.subr.bf16.mxu0 0
      %617 = vmatpush1.bf16.xpose.msra.mxu0 0
      %618 = vmatprep.subr.bf16.mxu0 0
      %619 = vmatpush1.bf16.xpose.msra.mxu0 %v608
      %620 = vmatprep.subr.bf16.mxu0 0
      %621 = vmatpush1.bf16.xpose.msra.mxu0 %v605
      %622 = vmatprep.subr.bf16.mxu0 0
      %623 = vmatpush1.bf16.xpose.msra.mxu0 %v602
      %624 = vmatprep.subr.bf16.mxu0 0
      %625 = vmatpush1.bf16.xpose.msra.mxu0 %v599
      %626 = vmatprep.subr.bf16.mxu0 0
      %627 = vmatpush2.bf16.xpose.msra.mxu0 0
      %628 = vmatprep.subr.bf16.mxu0 0
      %629 = vmatpush2.bf16.xpose.msra.mxu0 0
      %630 = vmatprep.subr.bf16.mxu0 0
      %631 = vmatpush2.bf16.xpose.msra.mxu0 0
      %632 = vmatprep.subr.bf16.mxu0 0
      %633 = vmatpush2.bf16.xpose.msra.mxu0 0
      %634 = vmatprep.subr.bf16.mxu0 0
      %635 = vmatpush2.bf16.xpose.msra.mxu0 0
      %636 = vmatprep.subr.bf16.mxu0 0
      %637 = vmatpush2.bf16.xpose.msra.mxu0 0
      %638 = vmatprep.subr.bf16.mxu0 0
      %639 = vmatpush2.bf16.xpose.msra.mxu0 0
      %640 = vmatprep.subr.bf16.mxu0 0
      %641 = vmatpush2.bf16.xpose.msra.mxu0 0
      %642 = vmatprep.mubr.bf16.mxu0 0
      %643 = vmatmul.mubr.bf16.gmra.mxu0 %v587
      %v644 = vpop.f32.mrf.mxu0
      %v645 = vadd.f32 %v464, %v644
      %v646 = vpop.f32.mrf.mxu0
      %v647 = vpop.f32.mrf.mxu0
      %v648 = vadd.f32 %v465, %v647
      %v649 = vpop.f32.mrf.mxu0
      %650 = vmatprep.mubr.bf16.mxu0 0
      %651 = vmatmul.mubr.bf16.gmra.mxu0 %v590
      %v652 = vpop.f32.mrf.mxu0
      %v653 = vadd.f32 %v466, %v652
      %v654 = vpop.f32.mrf.mxu0
      %v655 = vpop.f32.mrf.mxu0
      %v656 = vadd.f32 %v467, %v655
      %v657 = vpop.f32.mrf.mxu0
      %658 = vmatprep.mubr.bf16.mxu0 0
      %659 = vmatmul.mubr.bf16.gmra.mxu0 %v593
      %v660 = vpop.f32.mrf.mxu0
      %v661 = vadd.f32 %v468, %v660
      %v662 = vpop.f32.mrf.mxu0
      %v663 = vpop.f32.mrf.mxu0
      %v664 = vadd.f32 %v469, %v663
      %v665 = vpop.f32.mrf.mxu0
      %666 = vmatprep.mubr.bf16.mxu0 0
      %667 = vmatmul.mubr.bf16.gmra.mxu0 %v596
      %v668 = vpop.f32.mrf.mxu0
      %v669 = vadd.f32 %v470, %v668
      %v670 = vpop.f32.mrf.mxu0
      %v671 = vpop.f32.mrf.mxu0
      %v672 = vadd.f32 %v471, %v671
      %v673 = vpop.f32.mrf.mxu0
      %674 = vdwg.mxu0
      %vm675 = vcmask 523264
      %v676 = vsel %vm675, %v544, -inf
      %677 = vmax.xlane.f32.xlu0 %v676
      %v678 = vpop.xlane.xlu0 %677
      %v679 = vsel %vm675, %v547, -inf
      %680 = vmax.xlane.f32.xlu0 %v679
      %v681 = vpop.xlane.xlu0 %680
      %v682 = vsel %vm675, %v552, -inf
      %683 = vmax.xlane.f32.xlu0 %v682
      %v684 = vpop.xlane.xlu0 %683
      %v685 = vsel %vm675, %v555, -inf
      %686 = vmax.xlane.f32.xlu0 %v685
      %v687 = vpop.xlane.xlu0 %686
      %v688 = vsel %vm675, %v560, -inf
      %689 = vmax.xlane.f32.xlu0 %v688
      %v690 = vpop.xlane.xlu0 %689
      %v691 = vsel %vm675, %v563, -inf
      %692 = vmax.xlane.f32.xlu0 %v691
      %v693 = vpop.xlane.xlu0 %692
      %v694 = vsel %vm675, %v568, -inf
      %695 = vmax.xlane.f32.xlu0 %v694
      %v696 = vpop.xlane.xlu0 %695
      %v697 = vsel %vm675, %v571, -inf
      %698 = vmax.xlane.f32.xlu0 %v697
      %v699 = vpop.xlane.xlu0 %698
      %v700 = vsel %vm675, %v645, -inf
      %701 = vmax.xlane.f32.xlu0 %v700
      %v702 = vpop.xlane.xlu0 %701
      %v703 = vsel %vm675, %v648, -inf
      %704 = vmax.xlane.f32.xlu0 %v703
      %v705 = vpop.xlane.xlu0 %704
      %v706 = vsel %vm675, %v653, -inf
      %707 = vmax.xlane.f32.xlu0 %v706
      %v708 = vpop.xlane.xlu0 %707
      %v709 = vsel %vm675, %v656, -inf
      %710 = vmax.xlane.f32.xlu0 %v709
      %v711 = vpop.xlane.xlu0 %710
      %v712 = vsel %vm675, %v661, -inf
      %713 = vmax.xlane.f32.xlu0 %v712
      %v714 = vpop.xlane.xlu0 %713
      %v715 = vsel %vm675, %v664, -inf
      %716 = vmax.xlane.f32.xlu0 %v715
      %v717 = vpop.xlane.xlu0 %716
      %v718 = vsel %vm675, %v669, -inf
      %719 = vmax.xlane.f32.xlu0 %v718
      %v720 = vpop.xlane.xlu0 %719
      %v721 = vsel %vm675, %v672, -inf
      %722 = vmax.xlane.f32.xlu0 %v721
      %v723 = vpop.xlane.xlu0 %722
      %v724 = vsub.f32 %v544, %v678
      %v725 = vsub.f32 %v547, %v681
      %v726 = vsub.f32 %v552, %v684
      %v727 = vsub.f32 %v555, %v687
      %v728 = vsub.f32 %v560, %v690
      %v729 = vsub.f32 %v563, %v693
      %v730 = vsub.f32 %v568, %v696
      %v731 = vsub.f32 %v571, %v699
      %v732 = vsub.f32 %v645, %v702
      %v733 = vsub.f32 %v648, %v705
      %v734 = vsub.f32 %v653, %v708
      %v735 = vsub.f32 %v656, %v711
      %v736 = vsub.f32 %v661, %v714
      %v737 = vsub.f32 %v664, %v717
      %v738 = vsub.f32 %v669, %v720
      %v739 = vsub.f32 %v672, %v723
      %v740 = vmul.f32 %v724, 1.442695
      %v741 = vpow.pop %v740
      %v742 = vmul.f32 %v725, 1.442695
      %v743 = vpow.pop %v742
      %v744 = vmul.f32 %v726, 1.442695
      %v745 = vpow.pop %v744
      %v746 = vmul.f32 %v727, 1.442695
      %v747 = vpow.pop %v746
      %v748 = vmul.f32 %v728, 1.442695
      %v749 = vpow.pop %v748
      %v750 = vmul.f32 %v729, 1.442695
      %v751 = vpow.pop %v750
      %v752 = vmul.f32 %v730, 1.442695
      %v753 = vpow.pop %v752
      %v754 = vmul.f32 %v731, 1.442695
      %v755 = vpow.pop %v754
      %v756 = vmul.f32 %v732, 1.442695
      %v757 = vpow.pop %v756
      %v758 = vmul.f32 %v733, 1.442695
      %v759 = vpow.pop %v758
      %v760 = vmul.f32 %v734, 1.442695
      %v761 = vpow.pop %v760
      %v762 = vmul.f32 %v735, 1.442695
      %v763 = vpow.pop %v762
      %v764 = vmul.f32 %v736, 1.442695
      %v765 = vpow.pop %v764
      %v766 = vmul.f32 %v737, 1.442695
      %v767 = vpow.pop %v766
      %v768 = vmul.f32 %v738, 1.442695
      %v769 = vpow.pop %v768
      %v770 = vmul.f32 %v739, 1.442695
      %v771 = vpow.pop %v770
      %v772 = vsel %vm675, %v741, 0.0
      %773 = vadd.xlane.f32.xlu0 %v772
      %v774 = vpop.xlane.xlu0 %773
      %v775 = vsel %vm675, %v743, 0.0
      %776 = vadd.xlane.f32.xlu0 %v775
      %v777 = vpop.xlane.xlu0 %776
      %v778 = vsel %vm675, %v745, 0.0
      %779 = vadd.xlane.f32.xlu0 %v778
      %v780 = vpop.xlane.xlu0 %779
      %v781 = vsel %vm675, %v747, 0.0
      %782 = vadd.xlane.f32.xlu0 %v781
      %v783 = vpop.xlane.xlu0 %782
      %v784 = vsel %vm675, %v749, 0.0
      %785 = vadd.xlane.f32.xlu0 %v784
      %v786 = vpop.xlane.xlu0 %785
      %v787 = vsel %vm675, %v751, 0.0
      %788 = vadd.xlane.f32.xlu0 %v787
      %v789 = vpop.xlane.xlu0 %788
      %v790 = vsel %vm675, %v753, 0.0
      %791 = vadd.xlane.f32.xlu0 %v790
      %v792 = vpop.xlane.xlu0 %791
      %v793 = vsel %vm675, %v755, 0.0
      %794 = vadd.xlane.f32.xlu0 %v793
      %v795 = vpop.xlane.xlu0 %794
      %v796 = vsel %vm675, %v757, 0.0
      %797 = vadd.xlane.f32.xlu0 %v796
      %v798 = vpop.xlane.xlu0 %797
      %v799 = vsel %vm675, %v759, 0.0
      %800 = vadd.xlane.f32.xlu0 %v799
      %v801 = vpop.xlane.xlu0 %800
      %v802 = vsel %vm675, %v761, 0.0
      %803 = vadd.xlane.f32.xlu0 %v802
      %v804 = vpop.xlane.xlu0 %803
      %v805 = vsel %vm675, %v763, 0.0
      %806 = vadd.xlane.f32.xlu0 %v805
      %v807 = vpop.xlane.xlu0 %806
      %v808 = vsel %vm675, %v765, 0.0
      %809 = vadd.xlane.f32.xlu0 %v808
      %v810 = vpop.xlane.xlu0 %809
      %v811 = vsel %vm675, %v767, 0.0
      %812 = vadd.xlane.f32.xlu0 %v811
      %v813 = vpop.xlane.xlu0 %812
      %v814 = vsel %vm675, %v769, 0.0
      %815 = vadd.xlane.f32.xlu0 %v814
      %v816 = vpop.xlane.xlu0 %815
      %v817 = vsel %vm675, %v771, 0.0
      %818 = vadd.xlane.f32.xlu0 %v817
      %v819 = vpop.xlane.xlu0 %818
      %v820 = vpack.c.bf16 %v743, %v741
      %v821 = vpack.c.bf16 %v747, %v745
      %v822 = vpack.c.bf16 %v751, %v749
      %v823 = vpack.c.bf16 %v755, %v753
      %v824 = vpack.c.bf16 %v759, %v757
      %v825 = vpack.c.bf16 %v763, %v761
      %v826 = vpack.c.bf16 %v767, %v765
      %v827 = vpack.c.bf16 %v771, %v769
      %828 = vrot.lane.b32.xlu0 %v456, 64
      %v829 = vpop.permute.xlu0 %828
      %830 = vrot.lane.b32.xlu0 %v457, 64
      %v831 = vpop.permute.xlu0 %830
      %832 = vrot.lane.b32.xlu0 %v458, 64
      %v833 = vpop.permute.xlu0 %832
      %834 = vrot.lane.b32.xlu0 %v459, 64
      %v835 = vpop.permute.xlu0 %834
      %v841 = vsel %vm675, %v820, 0
      %v844 = vsel %vm675, %v821, 0
      %v847 = vsel %vm675, %v822, 0
      %v850 = vsel %vm675, %v823, 0
      %852 = vmatprep.subr.bf16.mxu0 0
      %853 = vmatpush1.bf16.msra.mxu0 0
      %854 = vmatprep.subr.bf16.mxu0 0
      %855 = vmatpush1.bf16.msra.mxu0 0
      %856 = vmatprep.subr.bf16.mxu0 0
      %857 = vmatpush1.bf16.msra.mxu0 0
      %858 = vmatprep.subr.bf16.mxu0 0
      %859 = vmatpush1.bf16.msra.mxu0 0
      %860 = vmatprep.subr.bf16.mxu0 0
      %861 = vmatpush1.bf16.msra.mxu0 %v835
      %862 = vmatprep.subr.bf16.mxu0 0
      %863 = vmatpush1.bf16.msra.mxu0 %v833
      %864 = vmatprep.subr.bf16.mxu0 0
      %865 = vmatpush1.bf16.msra.mxu0 %v831
      %866 = vmatprep.subr.bf16.mxu0 0
      %867 = vmatpush1.bf16.msra.mxu0 %v829
      %868 = vmatprep.subr.bf16.mxu0 0
      %869 = vmatpush2.bf16.msra.mxu0 0
      %870 = vmatprep.subr.bf16.mxu0 0
      %871 = vmatpush2.bf16.msra.mxu0 0
      %872 = vmatprep.subr.bf16.mxu0 0
      %873 = vmatpush2.bf16.msra.mxu0 0
      %874 = vmatprep.subr.bf16.mxu0 0
      %875 = vmatpush2.bf16.msra.mxu0 0
      %876 = vmatprep.subr.bf16.mxu0 0
      %877 = vmatpush2.bf16.msra.mxu0 0
      %878 = vmatprep.subr.bf16.mxu0 0
      %879 = vmatpush2.bf16.msra.mxu0 0
      %880 = vmatprep.subr.bf16.mxu0 0
      %881 = vmatpush2.bf16.msra.mxu0 0
      %882 = vmatprep.subr.bf16.mxu0 0
      %883 = vmatpush2.bf16.msra.mxu0 0
      %884 = vmatprep.mubr.bf16.mxu0 0
      %885 = vmatmul.mubr.bf16.gmra.mxu0 %v841
      %v886 = vpop.f32.mrf.mxu0
      %v887 = vadd.f32 0.0, %v886
      %v888 = vpop.f32.mrf.mxu0
      %v889 = vpop.f32.mrf.mxu0
      %v890 = vadd.f32 0.0, %v889
      %v891 = vpop.f32.mrf.mxu0
      %892 = vmatprep.mubr.bf16.mxu0 0
      %893 = vmatmul.mubr.bf16.gmra.mxu0 %v844
      %v894 = vpop.f32.mrf.mxu0
      %v895 = vadd.f32 0.0, %v894
      %v896 = vpop.f32.mrf.mxu0
      %v897 = vpop.f32.mrf.mxu0
      %v898 = vadd.f32 0.0, %v897
      %v899 = vpop.f32.mrf.mxu0
      %900 = vmatprep.mubr.bf16.mxu0 0
      %901 = vmatmul.mubr.bf16.gmra.mxu0 %v847
      %v902 = vpop.f32.mrf.mxu0
      %v903 = vadd.f32 0.0, %v902
      %v904 = vpop.f32.mrf.mxu0
      %v905 = vpop.f32.mrf.mxu0
      %v906 = vadd.f32 0.0, %v905
      %v907 = vpop.f32.mrf.mxu0
      %908 = vmatprep.mubr.bf16.mxu0 0
      %909 = vmatmul.mubr.bf16.gmra.mxu0 %v850
      %v910 = vpop.f32.mrf.mxu0
      %v911 = vadd.f32 0.0, %v910
      %v912 = vpop.f32.mrf.mxu0
      %v913 = vpop.f32.mrf.mxu0
      %v914 = vadd.f32 0.0, %v913
      %v915 = vpop.f32.mrf.mxu0
      %916 = vdwg.mxu0
      %917 = vrot.lane.b32.xlu0 %v460, 64
      %v918 = vpop.permute.xlu0 %917
      %919 = vrot.lane.b32.xlu0 %v461, 64
      %v920 = vpop.permute.xlu0 %919
      %921 = vrot.lane.b32.xlu0 %v462, 64
      %v922 = vpop.permute.xlu0 %921
      %923 = vrot.lane.b32.xlu0 %v463, 64
      %v924 = vpop.permute.xlu0 %923
      %v930 = vsel %vm675, %v824, 0
      %v933 = vsel %vm675, %v825, 0
      %v936 = vsel %vm675, %v826, 0
      %v939 = vsel %vm675, %v827, 0
      %941 = vmatprep.subr.bf16.mxu0 0
      %942 = vmatpush1.bf16.msra.mxu0 0
      %943 = vmatprep.subr.bf16.mxu0 0
      %944 = vmatpush1.bf16.msra.mxu0 0
      %945 = vmatprep.subr.bf16.mxu0 0
      %946 = vmatpush1.bf16.msra.mxu0 0
      %947 = vmatprep.subr.bf16.mxu0 0
      %948 = vmatpush1.bf16.msra.mxu0 0
      %949 = vmatprep.subr.bf16.mxu0 0
      %950 = vmatpush1.bf16.msra.mxu0 %v924
      %951 = vmatprep.subr.bf16.mxu0 0
      %952 = vmatpush1.bf16.msra.mxu0 %v922
      %953 = vmatprep.subr.bf16.mxu0 0
      %954 = vmatpush1.bf16.msra.mxu0 %v920
      %955 = vmatprep.subr.bf16.mxu0 0
      %956 = vmatpush1.bf16.msra.mxu0 %v918
      %957 = vmatprep.subr.bf16.mxu0 0
      %958 = vmatpush2.bf16.msra.mxu0 0
      %959 = vmatprep.subr.bf16.mxu0 0
      %960 = vmatpush2.bf16.msra.mxu0 0
      %961 = vmatprep.subr.bf16.mxu0 0
      %962 = vmatpush2.bf16.msra.mxu0 0
      %963 = vmatprep.subr.bf16.mxu0 0
      %964 = vmatpush2.bf16.msra.mxu0 0
      %965 = vmatprep.subr.bf16.mxu0 0
      %966 = vmatpush2.bf16.msra.mxu0 0
      %967 = vmatprep.subr.bf16.mxu0 0
      %968 = vmatpush2.bf16.msra.mxu0 0
      %969 = vmatprep.subr.bf16.mxu0 0
      %970 = vmatpush2.bf16.msra.mxu0 0
      %971 = vmatprep.subr.bf16.mxu0 0
      %972 = vmatpush2.bf16.msra.mxu0 0
      %973 = vmatprep.mubr.bf16.mxu0 0
      %974 = vmatmul.mubr.bf16.gmra.mxu0 %v930
      %v975 = vpop.f32.mrf.mxu0
      %v976 = vadd.f32 0.0, %v975
      %v977 = vpop.f32.mrf.mxu0
      %v978 = vpop.f32.mrf.mxu0
      %v979 = vadd.f32 0.0, %v978
      %v980 = vpop.f32.mrf.mxu0
      %981 = vmatprep.mubr.bf16.mxu0 0
      %982 = vmatmul.mubr.bf16.gmra.mxu0 %v933
      %v983 = vpop.f32.mrf.mxu0
      %v984 = vadd.f32 0.0, %v983
      %v985 = vpop.f32.mrf.mxu0
      %v986 = vpop.f32.mrf.mxu0
      %v987 = vadd.f32 0.0, %v986
      %v988 = vpop.f32.mrf.mxu0
      %989 = vmatprep.mubr.bf16.mxu0 0
      %990 = vmatmul.mubr.bf16.gmra.mxu0 %v936
      %v991 = vpop.f32.mrf.mxu0
      %v992 = vadd.f32 0.0, %v991
      %v993 = vpop.f32.mrf.mxu0
      %v994 = vpop.f32.mrf.mxu0
      %v995 = vadd.f32 0.0, %v994
      %v996 = vpop.f32.mrf.mxu0
      %997 = vmatprep.mubr.bf16.mxu0 0
      %998 = vmatmul.mubr.bf16.gmra.mxu0 %v939
      %v999 = vpop.f32.mrf.mxu0
      %v1000 = vadd.f32 0.0, %v999
      %v1001 = vpop.f32.mrf.mxu0
      %v1002 = vpop.f32.mrf.mxu0
      %v1003 = vadd.f32 0.0, %v1002
      %v1004 = vpop.f32.mrf.mxu0
      %1005 = vdwg.mxu0
      %v1006 = vrcp.pop %v774
      %v1007 = vrcp.pop %v777
      %v1008 = vrcp.pop %v780
      %v1009 = vrcp.pop %v783
      %v1010 = vrcp.pop %v786
      %v1011 = vrcp.pop %v789
      %v1012 = vrcp.pop %v792
      %v1013 = vrcp.pop %v795
      %v1014 = vrcp.pop %v798
      %v1015 = vrcp.pop %v801
      %v1016 = vrcp.pop %v804
      %v1017 = vrcp.pop %v807
      %v1018 = vrcp.pop %v810
      %v1019 = vrcp.pop %v813
      %v1020 = vrcp.pop %v816
      %v1021 = vrcp.pop %v819
      %v1022 = vmul.f32 %v887, %v1006
      %v1023 = vmul.f32 %v890, %v1007
      %v1024 = vmul.f32 %v895, %v1008
      %v1025 = vmul.f32 %v898, %v1009
      %v1026 = vmul.f32 %v903, %v1010
      %v1027 = vmul.f32 %v906, %v1011
      %v1028 = vmul.f32 %v911, %v1012
      %v1029 = vmul.f32 %v914, %v1013
      %v1030 = vmul.f32 %v976, %v1014
      %v1031 = vmul.f32 %v979, %v1015
      %v1032 = vmul.f32 %v984, %v1016
      %v1033 = vmul.f32 %v987, %v1017
      %v1034 = vmul.f32 %v992, %v1018
      %v1035 = vmul.f32 %v995, %v1019
      %v1036 = vmul.f32 %v1000, %v1020
      %v1037 = vmul.f32 %v1003, %v1021
      %s1038 = scalar_lea.vmem %s5, 64
      %v1039 = vld [vmem:[%s1038] sm:$0xff]
      %v1040 = vld [vmem:[%s1038 + $0x8] sm:$0xff]
      %v1041 = vld [vmem:[%s1038 + $0x10] sm:$0xff]
      %v1042 = vld [vmem:[%s1038 + $0x18] sm:$0xff]
      %v1043 = vld [vmem:[%s1038 + $0x20] sm:$0xff]
      %v1044 = vld [vmem:[%s1038 + $0x28] sm:$0xff]
      %v1045 = vld [vmem:[%s1038 + $0x30] sm:$0xff]
      %v1046 = vld [vmem:[%s1038 + $0x38] sm:$0xff]
      %1047 = vrot.lane.b32.xlu0 %v456, 120
      %v1048 = vpop.permute.xlu0 %1047
      %1049 = vrot.lane.b32.xlu0 %v457, 120
      %v1050 = vpop.permute.xlu0 %1049
      %1051 = vrot.lane.b32.xlu0 %v458, 120
      %v1052 = vpop.permute.xlu0 %1051
      %1053 = vrot.lane.b32.xlu0 %v459, 120
      %v1054 = vpop.permute.xlu0 %1053
      %1055 = vrot.lane.b32.xlu0 %v456, 88
      %v1056 = vpop.permute.xlu0 %1055
      %1057 = vrot.lane.b32.xlu0 %v457, 88
      %v1058 = vpop.permute.xlu0 %1057
      %1059 = vrot.lane.b32.xlu0 %v458, 88
      %v1060 = vpop.permute.xlu0 %1059
      %1061 = vrot.lane.b32.xlu0 %v459, 88
      %v1062 = vpop.permute.xlu0 %1061
      %v1064 = vsel %vm484, %v1048, 0
      %v1067 = vsel %vm484, %v1050, 0
      %v1070 = vsel %vm484, %v1052, 0
      %v1073 = vsel %vm484, %v1054, 0
      %v1076 = vsel %vm484, %v1056, 0
      %v1079 = vsel %vm484, %v1058, 0
      %v1082 = vsel %vm484, %v1060, 0
      %v1085 = vsel %vm484, %v1062, 0
      %1087 = vmatprep.subr.bf16.mxu0 0
      %1088 = vmatpush1.bf16.xpose.msra.mxu0 0
      %1089 = vmatprep.subr.bf16.mxu0 0
      %1090 = vmatpush1.bf16.xpose.msra.mxu0 0
      %1091 = vmatprep.subr.bf16.mxu0 0
      %1092 = vmatpush1.bf16.xpose.msra.mxu0 0
      %1093 = vmatprep.subr.bf16.mxu0 0
      %1094 = vmatpush1.bf16.xpose.msra.mxu0 0
      %1095 = vmatprep.subr.bf16.mxu0 0
      %1096 = vmatpush1.bf16.xpose.msra.mxu0 %v1085
      %1097 = vmatprep.subr.bf16.mxu0 0
      %1098 = vmatpush1.bf16.xpose.msra.mxu0 %v1082
      %1099 = vmatprep.subr.bf16.mxu0 0
      %1100 = vmatpush1.bf16.xpose.msra.mxu0 %v1079
      %1101 = vmatprep.subr.bf16.mxu0 0
      %1102 = vmatpush1.bf16.xpose.msra.mxu0 %v1076
      %1103 = vmatprep.subr.bf16.mxu0 0
      %1104 = vmatpush2.bf16.xpose.msra.mxu0 0
      %1105 = vmatprep.subr.bf16.mxu0 0
      %1106 = vmatpush2.bf16.xpose.msra.mxu0 0
      %1107 = vmatprep.subr.bf16.mxu0 0
      %1108 = vmatpush2.bf16.xpose.msra.mxu0 0
      %1109 = vmatprep.subr.bf16.mxu0 0
      %1110 = vmatpush2.bf16.xpose.msra.mxu0 0
      %1111 = vmatprep.subr.bf16.mxu0 0
      %1112 = vmatpush2.bf16.xpose.msra.mxu0 0
      %1113 = vmatprep.subr.bf16.mxu0 0
      %1114 = vmatpush2.bf16.xpose.msra.mxu0 0
      %1115 = vmatprep.subr.bf16.mxu0 0
      %1116 = vmatpush2.bf16.xpose.msra.mxu0 0
      %1117 = vmatprep.subr.bf16.mxu0 0
      %1118 = vmatpush2.bf16.xpose.msra.mxu0 0
      %1119 = vmatprep.mubr.bf16.mxu0 0
      %1120 = vmatmul.mubr.bf16.gmra.mxu0 %v1064
      %v1121 = vpop.f32.mrf.mxu0
      %v1122 = vadd.f32 %v1039, %v1121
      %v1123 = vpop.f32.mrf.mxu0
      %v1124 = vpop.f32.mrf.mxu0
      %v1125 = vadd.f32 %v1040, %v1124
      %v1126 = vpop.f32.mrf.mxu0
      %1127 = vmatprep.mubr.bf16.mxu0 0
      %1128 = vmatmul.mubr.bf16.gmra.mxu0 %v1067
      %v1129 = vpop.f32.mrf.mxu0
      %v1130 = vadd.f32 %v1041, %v1129
      %v1131 = vpop.f32.mrf.mxu0
      %v1132 = vpop.f32.mrf.mxu0
      %v1133 = vadd.f32 %v1042, %v1132
      %v1134 = vpop.f32.mrf.mxu0
      %1135 = vmatprep.mubr.bf16.mxu0 0
      %1136 = vmatmul.mubr.bf16.gmra.mxu0 %v1070
      %v1137 = vpop.f32.mrf.mxu0
      %v1138 = vadd.f32 %v1043, %v1137
      %v1139 = vpop.f32.mrf.mxu0
      %v1140 = vpop.f32.mrf.mxu0
      %v1141 = vadd.f32 %v1044, %v1140
      %v1142 = vpop.f32.mrf.mxu0
      %1143 = vmatprep.mubr.bf16.mxu0 0
      %1144 = vmatmul.mubr.bf16.gmra.mxu0 %v1073
      %v1145 = vpop.f32.mrf.mxu0
      %v1146 = vadd.f32 %v1045, %v1145
      %v1147 = vpop.f32.mrf.mxu0
      %v1148 = vpop.f32.mrf.mxu0
      %v1149 = vadd.f32 %v1046, %v1148
      %v1150 = vpop.f32.mrf.mxu0
      %1151 = vdwg.mxu0
      %1152 = vrot.lane.b32.xlu0 %v460, 120
      %v1153 = vpop.permute.xlu0 %1152
      %1154 = vrot.lane.b32.xlu0 %v461, 120
      %v1155 = vpop.permute.xlu0 %1154
      %1156 = vrot.lane.b32.xlu0 %v462, 120
      %v1157 = vpop.permute.xlu0 %1156
      %1158 = vrot.lane.b32.xlu0 %v463, 120
      %v1159 = vpop.permute.xlu0 %1158
      %1160 = vrot.lane.b32.xlu0 %v460, 88
      %v1161 = vpop.permute.xlu0 %1160
      %1162 = vrot.lane.b32.xlu0 %v461, 88
      %v1163 = vpop.permute.xlu0 %1162
      %1164 = vrot.lane.b32.xlu0 %v462, 88
      %v1165 = vpop.permute.xlu0 %1164
      %1166 = vrot.lane.b32.xlu0 %v463, 88
      %v1167 = vpop.permute.xlu0 %1166
      %v1169 = vsel %vm484, %v1153, 0
      %v1172 = vsel %vm484, %v1155, 0
      %v1175 = vsel %vm484, %v1157, 0
      %v1178 = vsel %vm484, %v1159, 0
      %v1181 = vsel %vm484, %v1161, 0
      %v1184 = vsel %vm484, %v1163, 0
      %v1187 = vsel %vm484, %v1165, 0
      %v1190 = vsel %vm484, %v1167, 0
      %1192 = vmatprep.subr.bf16.mxu0 0
      %1193 = vmatpush1.bf16.xpose.msra.mxu0 0
      %1194 = vmatprep.subr.bf16.mxu0 0
      %1195 = vmatpush1.bf16.xpose.msra.mxu0 0
      %1196 = vmatprep.subr.bf16.mxu0 0
      %1197 = vmatpush1.bf16.xpose.msra.mxu0 0
      %1198 = vmatprep.subr.bf16.mxu0 0
      %1199 = vmatpush1.bf16.xpose.msra.mxu0 0
      %1200 = vmatprep.subr.bf16.mxu0 0
      %1201 = vmatpush1.bf16.xpose.msra.mxu0 %v1190
      %1202 = vmatprep.subr.bf16.mxu0 0
      %1203 = vmatpush1.bf16.xpose.msra.mxu0 %v1187
      %1204 = vmatprep.subr.bf16.mxu0 0
      %1205 = vmatpush1.bf16.xpose.msra.mxu0 %v1184
      %1206 = vmatprep.subr.bf16.mxu0 0
      %1207 = vmatpush1.bf16.xpose.msra.mxu0 %v1181
      %1208 = vmatprep.subr.bf16.mxu0 0
      %1209 = vmatpush2.bf16.xpose.msra.mxu0 0
      %1210 = vmatprep.subr.bf16.mxu0 0
      %1211 = vmatpush2.bf16.xpose.msra.mxu0 0
      %1212 = vmatprep.subr.bf16.mxu0 0
      %1213 = vmatpush2.bf16.xpose.msra.mxu0 0
      %1214 = vmatprep.subr.bf16.mxu0 0
      %1215 = vmatpush2.bf16.xpose.msra.mxu0 0
      %1216 = vmatprep.subr.bf16.mxu0 0
      %1217 = vmatpush2.bf16.xpose.msra.mxu0 0
      %1218 = vmatprep.subr.bf16.mxu0 0
      %1219 = vmatpush2.bf16.xpose.msra.mxu0 0
      %1220 = vmatprep.subr.bf16.mxu0 0
      %1221 = vmatpush2.bf16.xpose.msra.mxu0 0
      %1222 = vmatprep.subr.bf16.mxu0 0
      %1223 = vmatpush2.bf16.xpose.msra.mxu0 0
      %1224 = vmatprep.mubr.bf16.mxu0 0
      %1225 = vmatmul.mubr.bf16.gmra.mxu0 %v1169
      %v1226 = vpop.f32.mrf.mxu0
      %v1227 = vadd.f32 %v1039, %v1226
      %v1228 = vpop.f32.mrf.mxu0
      %v1229 = vpop.f32.mrf.mxu0
      %v1230 = vadd.f32 %v1040, %v1229
      %v1231 = vpop.f32.mrf.mxu0
      %1232 = vmatprep.mubr.bf16.mxu0 0
      %1233 = vmatmul.mubr.bf16.gmra.mxu0 %v1172
      %v1234 = vpop.f32.mrf.mxu0
      %v1235 = vadd.f32 %v1041, %v1234
      %v1236 = vpop.f32.mrf.mxu0
      %v1237 = vpop.f32.mrf.mxu0
      %v1238 = vadd.f32 %v1042, %v1237
      %v1239 = vpop.f32.mrf.mxu0
      %1240 = vmatprep.mubr.bf16.mxu0 0
      %1241 = vmatmul.mubr.bf16.gmra.mxu0 %v1175
      %v1242 = vpop.f32.mrf.mxu0
      %v1243 = vadd.f32 %v1043, %v1242
      %v1244 = vpop.f32.mrf.mxu0
      %v1245 = vpop.f32.mrf.mxu0
      %v1246 = vadd.f32 %v1044, %v1245
      %v1247 = vpop.f32.mrf.mxu0
      %1248 = vmatprep.mubr.bf16.mxu0 0
      %1249 = vmatmul.mubr.bf16.gmra.mxu0 %v1178
      %v1250 = vpop.f32.mrf.mxu0
      %v1251 = vadd.f32 %v1045, %v1250
      %v1252 = vpop.f32.mrf.mxu0
      %v1253 = vpop.f32.mrf.mxu0
      %v1254 = vadd.f32 %v1046, %v1253
      %v1255 = vpop.f32.mrf.mxu0
      %1256 = vdwg.mxu0
      %v1257 = vsel %vm675, %v1122, -inf
      %1258 = vmax.xlane.f32.xlu0 %v1257
      %v1259 = vpop.xlane.xlu0 %1258
      %v1260 = vsel %vm675, %v1125, -inf
      %1261 = vmax.xlane.f32.xlu0 %v1260
      %v1262 = vpop.xlane.xlu0 %1261
      %v1263 = vsel %vm675, %v1130, -inf
      %1264 = vmax.xlane.f32.xlu0 %v1263
      %v1265 = vpop.xlane.xlu0 %1264
      %v1266 = vsel %vm675, %v1133, -inf
      %1267 = vmax.xlane.f32.xlu0 %v1266
      %v1268 = vpop.xlane.xlu0 %1267
      %v1269 = vsel %vm675, %v1138, -inf
      %1270 = vmax.xlane.f32.xlu0 %v1269
      %v1271 = vpop.xlane.xlu0 %1270
      %v1272 = vsel %vm675, %v1141, -inf
      %1273 = vmax.xlane.f32.xlu0 %v1272
      %v1274 = vpop.xlane.xlu0 %1273
      %v1275 = vsel %vm675, %v1146, -inf
      %1276 = vmax.xlane.f32.xlu0 %v1275
      %v1277 = vpop.xlane.xlu0 %1276
      %v1278 = vsel %vm675, %v1149, -inf
      %1279 = vmax.xlane.f32.xlu0 %v1278
      %v1280 = vpop.xlane.xlu0 %1279
      %v1281 = vsel %vm675, %v1227, -inf
      %1282 = vmax.xlane.f32.xlu0 %v1281
      %v1283 = vpop.xlane.xlu0 %1282
      %v1284 = vsel %vm675, %v1230, -inf
      %1285 = vmax.xlane.f32.xlu0 %v1284
      %v1286 = vpop.xlane.xlu0 %1285
      %v1287 = vsel %vm675, %v1235, -inf
      %1288 = vmax.xlane.f32.xlu0 %v1287
      %v1289 = vpop.xlane.xlu0 %1288
      %v1290 = vsel %vm675, %v1238, -inf
      %1291 = vmax.xlane.f32.xlu0 %v1290
      %v1292 = vpop.xlane.xlu0 %1291
      %v1293 = vsel %vm675, %v1243, -inf
      %1294 = vmax.xlane.f32.xlu0 %v1293
      %v1295 = vpop.xlane.xlu0 %1294
      %v1296 = vsel %vm675, %v1246, -inf
      %1297 = vmax.xlane.f32.xlu0 %v1296
      %v1298 = vpop.xlane.xlu0 %1297
      %v1299 = vsel %vm675, %v1251, -inf
      %1300 = vmax.xlane.f32.xlu0 %v1299
      %v1301 = vpop.xlane.xlu0 %1300
      %v1302 = vsel %vm675, %v1254, -inf
      %1303 = vmax.xlane.f32.xlu0 %v1302
      %v1304 = vpop.xlane.xlu0 %1303
      %v1305 = vsub.f32 %v1122, %v1259
      %v1306 = vsub.f32 %v1125, %v1262
      %v1307 = vsub.f32 %v1130, %v1265
      %v1308 = vsub.f32 %v1133, %v1268
      %v1309 = vsub.f32 %v1138, %v1271
      %v1310 = vsub.f32 %v1141, %v1274
      %v1311 = vsub.f32 %v1146, %v1277
      %v1312 = vsub.f32 %v1149, %v1280
      %v1313 = vsub.f32 %v1227, %v1283
      %v1314 = vsub.f32 %v1230, %v1286
      %v1315 = vsub.f32 %v1235, %v1289
      %v1316 = vsub.f32 %v1238, %v1292
      %v1317 = vsub.f32 %v1243, %v1295
      %v1318 = vsub.f32 %v1246, %v1298
      %v1319 = vsub.f32 %v1251, %v1301
      %v1320 = vsub.f32 %v1254, %v1304
      %v1321 = vmul.f32 %v1305, 1.442695
      %v1322 = vpow.pop %v1321
      %v1323 = vmul.f32 %v1306, 1.442695
      %v1324 = vpow.pop %v1323
      %v1325 = vmul.f32 %v1307, 1.442695
      %v1326 = vpow.pop %v1325
      %v1327 = vmul.f32 %v1308, 1.442695
      %v1328 = vpow.pop %v1327
      %v1329 = vmul.f32 %v1309, 1.442695
      %v1330 = vpow.pop %v1329
      %v1331 = vmul.f32 %v1310, 1.442695
      %v1332 = vpow.pop %v1331
      %v1333 = vmul.f32 %v1311, 1.442695
      %v1334 = vpow.pop %v1333
      %v1335 = vmul.f32 %v1312, 1.442695
      %v1336 = vpow.pop %v1335
      %v1337 = vmul.f32 %v1313, 1.442695
      %v1338 = vpow.pop %v1337
      %v1339 = vmul.f32 %v1314, 1.442695
      %v1340 = vpow.pop %v1339
      %v1341 = vmul.f32 %v1315, 1.442695
      %v1342 = vpow.pop %v1341
      %v1343 = vmul.f32 %v1316, 1.442695
      %v1344 = vpow.pop %v1343
      %v1345 = vmul.f32 %v1317, 1.442695
      %v1346 = vpow.pop %v1345
      %v1347 = vmul.f32 %v1318, 1.442695
      %v1348 = vpow.pop %v1347
      %v1349 = vmul.f32 %v1319, 1.442695
      %v1350 = vpow.pop %v1349
      %v1351 = vmul.f32 %v1320, 1.442695
      %v1352 = vpow.pop %v1351
      %v1353 = vsel %vm675, %v1322, 0.0
      %1354 = vadd.xlane.f32.xlu0 %v1353
      %v1355 = vpop.xlane.xlu0 %1354
      %v1356 = vsel %vm675, %v1324, 0.0
      %1357 = vadd.xlane.f32.xlu0 %v1356
      %v1358 = vpop.xlane.xlu0 %1357
      %v1359 = vsel %vm675, %v1326, 0.0
      %1360 = vadd.xlane.f32.xlu0 %v1359
      %v1361 = vpop.xlane.xlu0 %1360
      %v1362 = vsel %vm675, %v1328, 0.0
      %1363 = vadd.xlane.f32.xlu0 %v1362
      %v1364 = vpop.xlane.xlu0 %1363
      %v1365 = vsel %vm675, %v1330, 0.0
      %1366 = vadd.xlane.f32.xlu0 %v1365
      %v1367 = vpop.xlane.xlu0 %1366
      %v1368 = vsel %vm675, %v1332, 0.0
      %1369 = vadd.xlane.f32.xlu0 %v1368
      %v1370 = vpop.xlane.xlu0 %1369
      %v1371 = vsel %vm675, %v1334, 0.0
      %1372 = vadd.xlane.f32.xlu0 %v1371
      %v1373 = vpop.xlane.xlu0 %1372
      %v1374 = vsel %vm675, %v1336, 0.0
      %1375 = vadd.xlane.f32.xlu0 %v1374
      %v1376 = vpop.xlane.xlu0 %1375
      %v1377 = vsel %vm675, %v1338, 0.0
      %1378 = vadd.xlane.f32.xlu0 %v1377
      %v1379 = vpop.xlane.xlu0 %1378
      %v1380 = vsel %vm675, %v1340, 0.0
      %1381 = vadd.xlane.f32.xlu0 %v1380
      %v1382 = vpop.xlane.xlu0 %1381
      %v1383 = vsel %vm675, %v1342, 0.0
      %1384 = vadd.xlane.f32.xlu0 %v1383
      %v1385 = vpop.xlane.xlu0 %1384
      %v1386 = vsel %vm675, %v1344, 0.0
      %1387 = vadd.xlane.f32.xlu0 %v1386
      %v1388 = vpop.xlane.xlu0 %1387
      %v1389 = vsel %vm675, %v1346, 0.0
      %1390 = vadd.xlane.f32.xlu0 %v1389
      %v1391 = vpop.xlane.xlu0 %1390
      %v1392 = vsel %vm675, %v1348, 0.0
      %1393 = vadd.xlane.f32.xlu0 %v1392
      %v1394 = vpop.xlane.xlu0 %1393
      %v1395 = vsel %vm675, %v1350, 0.0
      %1396 = vadd.xlane.f32.xlu0 %v1395
      %v1397 = vpop.xlane.xlu0 %1396
      %v1398 = vsel %vm675, %v1352, 0.0
      %1399 = vadd.xlane.f32.xlu0 %v1398
      %v1400 = vpop.xlane.xlu0 %1399
      %v1401 = vpack.c.bf16 %v1324, %v1322
      %v1402 = vpack.c.bf16 %v1328, %v1326
      %v1403 = vpack.c.bf16 %v1332, %v1330
      %v1404 = vpack.c.bf16 %v1336, %v1334
      %v1405 = vpack.c.bf16 %v1340, %v1338
      %v1406 = vpack.c.bf16 %v1344, %v1342
      %v1407 = vpack.c.bf16 %v1348, %v1346
      %v1408 = vpack.c.bf16 %v1352, %v1350
      %1409 = vrot.lane.b32.xlu0 %v456, 56
      %v1410 = vpop.permute.xlu0 %1409
      %1411 = vrot.lane.b32.xlu0 %v457, 56
      %v1412 = vpop.permute.xlu0 %1411
      %1413 = vrot.lane.b32.xlu0 %v458, 56
      %v1414 = vpop.permute.xlu0 %1413
      %1415 = vrot.lane.b32.xlu0 %v459, 56
      %v1416 = vpop.permute.xlu0 %1415
      %v1422 = vsel %vm675, %v1401, 0
      %v1425 = vsel %vm675, %v1402, 0
      %v1428 = vsel %vm675, %v1403, 0
      %v1431 = vsel %vm675, %v1404, 0
      %1433 = vmatprep.subr.bf16.mxu0 0
      %1434 = vmatpush1.bf16.msra.mxu0 0
      %1435 = vmatprep.subr.bf16.mxu0 0
      %1436 = vmatpush1.bf16.msra.mxu0 0
      %1437 = vmatprep.subr.bf16.mxu0 0
      %1438 = vmatpush1.bf16.msra.mxu0 0
      %1439 = vmatprep.subr.bf16.mxu0 0
      %1440 = vmatpush1.bf16.msra.mxu0 0
      %1441 = vmatprep.subr.bf16.mxu0 0
      %1442 = vmatpush1.bf16.msra.mxu0 %v1416
      %1443 = vmatprep.subr.bf16.mxu0 0
      %1444 = vmatpush1.bf16.msra.mxu0 %v1414
      %1445 = vmatprep.subr.bf16.mxu0 0
      %1446 = vmatpush1.bf16.msra.mxu0 %v1412
      %1447 = vmatprep.subr.bf16.mxu0 0
      %1448 = vmatpush1.bf16.msra.mxu0 %v1410
      %1449 = vmatprep.subr.bf16.mxu0 0
      %1450 = vmatpush2.bf16.msra.mxu0 0
      %1451 = vmatprep.subr.bf16.mxu0 0
      %1452 = vmatpush2.bf16.msra.mxu0 0
      %1453 = vmatprep.subr.bf16.mxu0 0
      %1454 = vmatpush2.bf16.msra.mxu0 0
      %1455 = vmatprep.subr.bf16.mxu0 0
      %1456 = vmatpush2.bf16.msra.mxu0 0
      %1457 = vmatprep.subr.bf16.mxu0 0
      %1458 = vmatpush2.bf16.msra.mxu0 0
      %1459 = vmatprep.subr.bf16.mxu0 0
      %1460 = vmatpush2.bf16.msra.mxu0 0
      %1461 = vmatprep.subr.bf16.mxu0 0
      %1462 = vmatpush2.bf16.msra.mxu0 0
      %1463 = vmatprep.subr.bf16.mxu0 0
      %1464 = vmatpush2.bf16.msra.mxu0 0
      %1465 = vmatprep.mubr.bf16.mxu0 0
      %1466 = vmatmul.mubr.bf16.gmra.mxu0 %v1422
      %v1467 = vpop.f32.mrf.mxu0
      %v1468 = vadd.f32 0.0, %v1467
      %v1469 = vpop.f32.mrf.mxu0
      %v1470 = vpop.f32.mrf.mxu0
      %v1471 = vadd.f32 0.0, %v1470
      %v1472 = vpop.f32.mrf.mxu0
      %1473 = vmatprep.mubr.bf16.mxu0 0
      %1474 = vmatmul.mubr.bf16.gmra.mxu0 %v1425
      %v1475 = vpop.f32.mrf.mxu0
      %v1476 = vadd.f32 0.0, %v1475
      %v1477 = vpop.f32.mrf.mxu0
      %v1478 = vpop.f32.mrf.mxu0
      %v1479 = vadd.f32 0.0, %v1478
      %v1480 = vpop.f32.mrf.mxu0
      %1481 = vmatprep.mubr.bf16.mxu0 0
      %1482 = vmatmul.mubr.bf16.gmra.mxu0 %v1428
      %v1483 = vpop.f32.mrf.mxu0
      %v1484 = vadd.f32 0.0, %v1483
      %v1485 = vpop.f32.mrf.mxu0
      %v1486 = vpop.f32.mrf.mxu0
      %v1487 = vadd.f32 0.0, %v1486
      %v1488 = vpop.f32.mrf.mxu0
      %1489 = vmatprep.mubr.bf16.mxu0 0
      %1490 = vmatmul.mubr.bf16.gmra.mxu0 %v1431
      %v1491 = vpop.f32.mrf.mxu0
      %v1492 = vadd.f32 0.0, %v1491
      %v1493 = vpop.f32.mrf.mxu0
      %v1494 = vpop.f32.mrf.mxu0
      %v1495 = vadd.f32 0.0, %v1494
      %v1496 = vpop.f32.mrf.mxu0
      %1497 = vdwg.mxu0
      %1498 = vrot.lane.b32.xlu0 %v460, 56
      %v1499 = vpop.permute.xlu0 %1498
      %1500 = vrot.lane.b32.xlu0 %v461, 56
      %v1501 = vpop.permute.xlu0 %1500
      %1502 = vrot.lane.b32.xlu0 %v462, 56
      %v1503 = vpop.permute.xlu0 %1502
      %1504 = vrot.lane.b32.xlu0 %v463, 56
      %v1505 = vpop.permute.xlu0 %1504
      %v1511 = vsel %vm675, %v1405, 0
      %v1514 = vsel %vm675, %v1406, 0
      %v1517 = vsel %vm675, %v1407, 0
      %v1520 = vsel %vm675, %v1408, 0
      %1522 = vmatprep.subr.bf16.mxu0 0
      %1523 = vmatpush1.bf16.msra.mxu0 0
      %1524 = vmatprep.subr.bf16.mxu0 0
      %1525 = vmatpush1.bf16.msra.mxu0 0
      %1526 = vmatprep.subr.bf16.mxu0 0
      %1527 = vmatpush1.bf16.msra.mxu0 0
      %1528 = vmatprep.subr.bf16.mxu0 0
      %1529 = vmatpush1.bf16.msra.mxu0 0
      %1530 = vmatprep.subr.bf16.mxu0 0
      %1531 = vmatpush1.bf16.msra.mxu0 %v1505
      %1532 = vmatprep.subr.bf16.mxu0 0
      %1533 = vmatpush1.bf16.msra.mxu0 %v1503
      %1534 = vmatprep.subr.bf16.mxu0 0
      %1535 = vmatpush1.bf16.msra.mxu0 %v1501
      %1536 = vmatprep.subr.bf16.mxu0 0
      %1537 = vmatpush1.bf16.msra.mxu0 %v1499
      %1538 = vmatprep.subr.bf16.mxu0 0
      %1539 = vmatpush2.bf16.msra.mxu0 0
      %1540 = vmatprep.subr.bf16.mxu0 0
      %1541 = vmatpush2.bf16.msra.mxu0 0
      %1542 = vmatprep.subr.bf16.mxu0 0
      %1543 = vmatpush2.bf16.msra.mxu0 0
      %1544 = vmatprep.subr.bf16.mxu0 0
      %1545 = vmatpush2.bf16.msra.mxu0 0
      %1546 = vmatprep.subr.bf16.mxu0 0
      %1547 = vmatpush2.bf16.msra.mxu0 0
      %1548 = vmatprep.subr.bf16.mxu0 0
      %1549 = vmatpush2.bf16.msra.mxu0 0
      %1550 = vmatprep.subr.bf16.mxu0 0
      %1551 = vmatpush2.bf16.msra.mxu0 0
      %1552 = vmatprep.subr.bf16.mxu0 0
      %1553 = vmatpush2.bf16.msra.mxu0 0
      %1554 = vmatprep.mubr.bf16.mxu0 0
      %1555 = vmatmul.mubr.bf16.gmra.mxu0 %v1511
      %v1556 = vpop.f32.mrf.mxu0
      %v1557 = vadd.f32 0.0, %v1556
      %v1558 = vpop.f32.mrf.mxu0
      %v1559 = vpop.f32.mrf.mxu0
      %v1560 = vadd.f32 0.0, %v1559
      %v1561 = vpop.f32.mrf.mxu0
      %1562 = vmatprep.mubr.bf16.mxu0 0
      %1563 = vmatmul.mubr.bf16.gmra.mxu0 %v1514
      %v1564 = vpop.f32.mrf.mxu0
      %v1565 = vadd.f32 0.0, %v1564
      %v1566 = vpop.f32.mrf.mxu0
      %v1567 = vpop.f32.mrf.mxu0
      %v1568 = vadd.f32 0.0, %v1567
      %v1569 = vpop.f32.mrf.mxu0
      %1570 = vmatprep.mubr.bf16.mxu0 0
      %1571 = vmatmul.mubr.bf16.gmra.mxu0 %v1517
      %v1572 = vpop.f32.mrf.mxu0
      %v1573 = vadd.f32 0.0, %v1572
      %v1574 = vpop.f32.mrf.mxu0
      %v1575 = vpop.f32.mrf.mxu0
      %v1576 = vadd.f32 0.0, %v1575
      %v1577 = vpop.f32.mrf.mxu0
      %1578 = vmatprep.mubr.bf16.mxu0 0
      %1579 = vmatmul.mubr.bf16.gmra.mxu0 %v1520
      %v1580 = vpop.f32.mrf.mxu0
      %v1581 = vadd.f32 0.0, %v1580
      %v1582 = vpop.f32.mrf.mxu0
      %v1583 = vpop.f32.mrf.mxu0
      %v1584 = vadd.f32 0.0, %v1583
      %v1585 = vpop.f32.mrf.mxu0
      %1586 = vdwg.mxu0
      %v1587 = vrcp.pop %v1355
      %v1588 = vrcp.pop %v1358
      %v1589 = vrcp.pop %v1361
      %v1590 = vrcp.pop %v1364
      %v1591 = vrcp.pop %v1367
      %v1592 = vrcp.pop %v1370
      %v1593 = vrcp.pop %v1373
      %v1594 = vrcp.pop %v1376
      %v1595 = vrcp.pop %v1379
      %v1596 = vrcp.pop %v1382
      %v1597 = vrcp.pop %v1385
      %v1598 = vrcp.pop %v1388
      %v1599 = vrcp.pop %v1391
      %v1600 = vrcp.pop %v1394
      %v1601 = vrcp.pop %v1397
      %v1602 = vrcp.pop %v1400
      %v1603 = vmul.f32 %v1468, %v1587
      %v1604 = vmul.f32 %v1471, %v1588
      %v1605 = vmul.f32 %v1476, %v1589
      %v1606 = vmul.f32 %v1479, %v1590
      %v1607 = vmul.f32 %v1484, %v1591
      %v1608 = vmul.f32 %v1487, %v1592
      %v1609 = vmul.f32 %v1492, %v1593
      %v1610 = vmul.f32 %v1495, %v1594
      %v1611 = vmul.f32 %v1557, %v1595
      %v1612 = vmul.f32 %v1560, %v1596
      %v1613 = vmul.f32 %v1565, %v1597
      %v1614 = vmul.f32 %v1568, %v1598
      %v1615 = vmul.f32 %v1573, %v1599
      %v1616 = vmul.f32 %v1576, %v1600
      %v1617 = vmul.f32 %v1581, %v1601
      %v1618 = vmul.f32 %v1584, %v1602
      %s1619 = scalar_lea.vmem %s5, 128
      %v1620 = vld [vmem:[%s1619] sm:$0xff]
      %v1621 = vld [vmem:[%s1619 + $0x8] sm:$0xff]
      %v1622 = vld [vmem:[%s1619 + $0x10] sm:$0xff]
      %v1623 = vld [vmem:[%s1619 + $0x18] sm:$0xff]
      %v1624 = vld [vmem:[%s1619 + $0x20] sm:$0xff]
      %v1625 = vld [vmem:[%s1619 + $0x28] sm:$0xff]
      %v1626 = vld [vmem:[%s1619 + $0x30] sm:$0xff]
      %v1627 = vld [vmem:[%s1619 + $0x38] sm:$0xff]
      %1628 = vrot.lane.b32.xlu0 %v456, 112
      %v1629 = vpop.permute.xlu0 %1628
      %1630 = vrot.lane.b32.xlu0 %v457, 112
      %v1631 = vpop.permute.xlu0 %1630
      %1632 = vrot.lane.b32.xlu0 %v458, 112
      %v1633 = vpop.permute.xlu0 %1632
      %1634 = vrot.lane.b32.xlu0 %v459, 112
      %v1635 = vpop.permute.xlu0 %1634
      %1636 = vrot.lane.b32.xlu0 %v456, 80
      %v1637 = vpop.permute.xlu0 %1636
      %1638 = vrot.lane.b32.xlu0 %v457, 80
      %v1639 = vpop.permute.xlu0 %1638
      %1640 = vrot.lane.b32.xlu0 %v458, 80
      %v1641 = vpop.permute.xlu0 %1640
      %1642 = vrot.lane.b32.xlu0 %v459, 80
      %v1643 = vpop.permute.xlu0 %1642
      %v1645 = vsel %vm484, %v1629, 0
      %v1648 = vsel %vm484, %v1631, 0
      %v1651 = vsel %vm484, %v1633, 0
      %v1654 = vsel %vm484, %v1635, 0
      %v1657 = vsel %vm484, %v1637, 0
      %v1660 = vsel %vm484, %v1639, 0
      %v1663 = vsel %vm484, %v1641, 0
      %v1666 = vsel %vm484, %v1643, 0
      %1668 = vmatprep.subr.bf16.mxu0 0
      %1669 = vmatpush1.bf16.xpose.msra.mxu0 0
      %1670 = vmatprep.subr.bf16.mxu0 0
      %1671 = vmatpush1.bf16.xpose.msra.mxu0 0
      %1672 = vmatprep.subr.bf16.mxu0 0
      %1673 = vmatpush1.bf16.xpose.msra.mxu0 0
      %1674 = vmatprep.subr.bf16.mxu0 0
      %1675 = vmatpush1.bf16.xpose.msra.mxu0 0
      %1676 = vmatprep.subr.bf16.mxu0 0
      %1677 = vmatpush1.bf16.xpose.msra.mxu0 %v1666
      %1678 = vmatprep.subr.bf16.mxu0 0
      %1679 = vmatpush1.bf16.xpose.msra.mxu0 %v1663
      %1680 = vmatprep.subr.bf16.mxu0 0
      %1681 = vmatpush1.bf16.xpose.msra.mxu0 %v1660
      %1682 = vmatprep.subr.bf16.mxu0 0
      %1683 = vmatpush1.bf16.xpose.msra.mxu0 %v1657
      %1684 = vmatprep.subr.bf16.mxu0 0
      %1685 = vmatpush2.bf16.xpose.msra.mxu0 0
      %1686 = vmatprep.subr.bf16.mxu0 0
      %1687 = vmatpush2.bf16.xpose.msra.mxu0 0
      %1688 = vmatprep.subr.bf16.mxu0 0
      %1689 = vmatpush2.bf16.xpose.msra.mxu0 0
      %1690 = vmatprep.subr.bf16.mxu0 0
      %1691 = vmatpush2.bf16.xpose.msra.mxu0 0
      %1692 = vmatprep.subr.bf16.mxu0 0
      %1693 = vmatpush2.bf16.xpose.msra.mxu0 0
      %1694 = vmatprep.subr.bf16.mxu0 0
      %1695 = vmatpush2.bf16.xpose.msra.mxu0 0
      %1696 = vmatprep.subr.bf16.mxu0 0
      %1697 = vmatpush2.bf16.xpose.msra.mxu0 0
      %1698 = vmatprep.subr.bf16.mxu0 0
      %1699 = vmatpush2.bf16.xpose.msra.mxu0 0
      %1700 = vmatprep.mubr.bf16.mxu0 0
      %1701 = vmatmul.mubr.bf16.gmra.mxu0 %v1645
      %v1702 = vpop.f32.mrf.mxu0
      %v1703 = vadd.f32 %v1620, %v1702
      %v1704 = vpop.f32.mrf.mxu0
      %v1705 = vpop.f32.mrf.mxu0
      %v1706 = vadd.f32 %v1621, %v1705
      %v1707 = vpop.f32.mrf.mxu0
      %1708 = vmatprep.mubr.bf16.mxu0 0
      %1709 = vmatmul.mubr.bf16.gmra.mxu0 %v1648
      %v1710 = vpop.f32.mrf.mxu0
      %v1711 = vadd.f32 %v1622, %v1710
      %v1712 = vpop.f32.mrf.mxu0
      %v1713 = vpop.f32.mrf.mxu0
      %v1714 = vadd.f32 %v1623, %v1713
      %v1715 = vpop.f32.mrf.mxu0
      %1716 = vmatprep.mubr.bf16.mxu0 0
      %1717 = vmatmul.mubr.bf16.gmra.mxu0 %v1651
      %v1718 = vpop.f32.mrf.mxu0
      %v1719 = vadd.f32 %v1624, %v1718
      %v1720 = vpop.f32.mrf.mxu0
      %v1721 = vpop.f32.mrf.mxu0
      %v1722 = vadd.f32 %v1625, %v1721
      %v1723 = vpop.f32.mrf.mxu0
      %1724 = vmatprep.mubr.bf16.mxu0 0
      %1725 = vmatmul.mubr.bf16.gmra.mxu0 %v1654
      %v1726 = vpop.f32.mrf.mxu0
      %v1727 = vadd.f32 %v1626, %v1726
      %v1728 = vpop.f32.mrf.mxu0
      %v1729 = vpop.f32.mrf.mxu0
      %v1730 = vadd.f32 %v1627, %v1729
      %v1731 = vpop.f32.mrf.mxu0
      %1732 = vdwg.mxu0
      %1733 = vrot.lane.b32.xlu0 %v460, 112
      %v1734 = vpop.permute.xlu0 %1733
      %1735 = vrot.lane.b32.xlu0 %v461, 112
      %v1736 = vpop.permute.xlu0 %1735
      %1737 = vrot.lane.b32.xlu0 %v462, 112
      %v1738 = vpop.permute.xlu0 %1737
      %1739 = vrot.lane.b32.xlu0 %v463, 112
      %v1740 = vpop.permute.xlu0 %1739
      %1741 = vrot.lane.b32.xlu0 %v460, 80
      %v1742 = vpop.permute.xlu0 %1741
      %1743 = vrot.lane.b32.xlu0 %v461, 80
      %v1744 = vpop.permute.xlu0 %1743
      %1745 = vrot.lane.b32.xlu0 %v462, 80
      %v1746 = vpop.permute.xlu0 %1745
      %1747 = vrot.lane.b32.xlu0 %v463, 80
      %v1748 = vpop.permute.xlu0 %1747
      %v1750 = vsel %vm484, %v1734, 0
      %v1753 = vsel %vm484, %v1736, 0
      %v1756 = vsel %vm484, %v1738, 0
      %v1759 = vsel %vm484, %v1740, 0
      %v1762 = vsel %vm484, %v1742, 0
      %v1765 = vsel %vm484, %v1744, 0
      %v1768 = vsel %vm484, %v1746, 0
      %v1771 = vsel %vm484, %v1748, 0
      %1773 = vmatprep.subr.bf16.mxu0 0
      %1774 = vmatpush1.bf16.xpose.msra.mxu0 0
      %1775 = vmatprep.subr.bf16.mxu0 0
      %1776 = vmatpush1.bf16.xpose.msra.mxu0 0
      %1777 = vmatprep.subr.bf16.mxu0 0
      %1778 = vmatpush1.bf16.xpose.msra.mxu0 0
      %1779 = vmatprep.subr.bf16.mxu0 0
      %1780 = vmatpush1.bf16.xpose.msra.mxu0 0
      %1781 = vmatprep.subr.bf16.mxu0 0
      %1782 = vmatpush1.bf16.xpose.msra.mxu0 %v1771
      %1783 = vmatprep.subr.bf16.mxu0 0
      %1784 = vmatpush1.bf16.xpose.msra.mxu0 %v1768
      %1785 = vmatprep.subr.bf16.mxu0 0
      %1786 = vmatpush1.bf16.xpose.msra.mxu0 %v1765
      %1787 = vmatprep.subr.bf16.mxu0 0
      %1788 = vmatpush1.bf16.xpose.msra.mxu0 %v1762
      %1789 = vmatprep.subr.bf16.mxu0 0
      %1790 = vmatpush2.bf16.xpose.msra.mxu0 0
      %1791 = vmatprep.subr.bf16.mxu0 0
      %1792 = vmatpush2.bf16.xpose.msra.mxu0 0
      %1793 = vmatprep.subr.bf16.mxu0 0
      %1794 = vmatpush2.bf16.xpose.msra.mxu0 0
      %1795 = vmatprep.subr.bf16.mxu0 0
      %1796 = vmatpush2.bf16.xpose.msra.mxu0 0
      %1797 = vmatprep.subr.bf16.mxu0 0
      %1798 = vmatpush2.bf16.xpose.msra.mxu0 0
      %1799 = vmatprep.subr.bf16.mxu0 0
      %1800 = vmatpush2.bf16.xpose.msra.mxu0 0
      %1801 = vmatprep.subr.bf16.mxu0 0
      %1802 = vmatpush2.bf16.xpose.msra.mxu0 0
      %1803 = vmatprep.subr.bf16.mxu0 0
      %1804 = vmatpush2.bf16.xpose.msra.mxu0 0
      %1805 = vmatprep.mubr.bf16.mxu0 0
      %1806 = vmatmul.mubr.bf16.gmra.mxu0 %v1750
      %v1807 = vpop.f32.mrf.mxu0
      %v1808 = vadd.f32 %v1620, %v1807
      %v1809 = vpop.f32.mrf.mxu0
      %v1810 = vpop.f32.mrf.mxu0
      %v1811 = vadd.f32 %v1621, %v1810
      %v1812 = vpop.f32.mrf.mxu0
      %1813 = vmatprep.mubr.bf16.mxu0 0
      %1814 = vmatmul.mubr.bf16.gmra.mxu0 %v1753
      %v1815 = vpop.f32.mrf.mxu0
      %v1816 = vadd.f32 %v1622, %v1815
      %v1817 = vpop.f32.mrf.mxu0
      %v1818 = vpop.f32.mrf.mxu0
      %v1819 = vadd.f32 %v1623, %v1818
      %v1820 = vpop.f32.mrf.mxu0
      %1821 = vmatprep.mubr.bf16.mxu0 0
      %1822 = vmatmul.mubr.bf16.gmra.mxu0 %v1756
      %v1823 = vpop.f32.mrf.mxu0
      %v1824 = vadd.f32 %v1624, %v1823
      %v1825 = vpop.f32.mrf.mxu0
      %v1826 = vpop.f32.mrf.mxu0
      %v1827 = vadd.f32 %v1625, %v1826
      %v1828 = vpop.f32.mrf.mxu0
      %1829 = vmatprep.mubr.bf16.mxu0 0
      %1830 = vmatmul.mubr.bf16.gmra.mxu0 %v1759
      %v1831 = vpop.f32.mrf.mxu0
      %v1832 = vadd.f32 %v1626, %v1831
      %v1833 = vpop.f32.mrf.mxu0
      %v1834 = vpop.f32.mrf.mxu0
      %v1835 = vadd.f32 %v1627, %v1834
      %v1836 = vpop.f32.mrf.mxu0
      %1837 = vdwg.mxu0
      %v1838 = vsel %vm675, %v1703, -inf
      %1839 = vmax.xlane.f32.xlu0 %v1838
      %v1840 = vpop.xlane.xlu0 %1839
      %v1841 = vsel %vm675, %v1706, -inf
      %1842 = vmax.xlane.f32.xlu0 %v1841
      %v1843 = vpop.xlane.xlu0 %1842
      %v1844 = vsel %vm675, %v1711, -inf
      %1845 = vmax.xlane.f32.xlu0 %v1844
      %v1846 = vpop.xlane.xlu0 %1845
      %v1847 = vsel %vm675, %v1714, -inf
      %1848 = vmax.xlane.f32.xlu0 %v1847
      %v1849 = vpop.xlane.xlu0 %1848
      %v1850 = vsel %vm675, %v1719, -inf
      %1851 = vmax.xlane.f32.xlu0 %v1850
      %v1852 = vpop.xlane.xlu0 %1851
      %v1853 = vsel %vm675, %v1722, -inf
      %1854 = vmax.xlane.f32.xlu0 %v1853
      %v1855 = vpop.xlane.xlu0 %1854
      %v1856 = vsel %vm675, %v1727, -inf
      %1857 = vmax.xlane.f32.xlu0 %v1856
      %v1858 = vpop.xlane.xlu0 %1857
      %v1859 = vsel %vm675, %v1730, -inf
      %1860 = vmax.xlane.f32.xlu0 %v1859
      %v1861 = vpop.xlane.xlu0 %1860
      %v1862 = vsel %vm675, %v1808, -inf
      %1863 = vmax.xlane.f32.xlu0 %v1862
      %v1864 = vpop.xlane.xlu0 %1863
      %v1865 = vsel %vm675, %v1811, -inf
      %1866 = vmax.xlane.f32.xlu0 %v1865
      %v1867 = vpop.xlane.xlu0 %1866
      %v1868 = vsel %vm675, %v1816, -inf
      %1869 = vmax.xlane.f32.xlu0 %v1868
      %v1870 = vpop.xlane.xlu0 %1869
      %v1871 = vsel %vm675, %v1819, -inf
      %1872 = vmax.xlane.f32.xlu0 %v1871
      %v1873 = vpop.xlane.xlu0 %1872
      %v1874 = vsel %vm675, %v1824, -inf
      %1875 = vmax.xlane.f32.xlu0 %v1874
      %v1876 = vpop.xlane.xlu0 %1875
      %v1877 = vsel %vm675, %v1827, -inf
      %1878 = vmax.xlane.f32.xlu0 %v1877
      %v1879 = vpop.xlane.xlu0 %1878
      %v1880 = vsel %vm675, %v1832, -inf
      %1881 = vmax.xlane.f32.xlu0 %v1880
      %v1882 = vpop.xlane.xlu0 %1881
      %v1883 = vsel %vm675, %v1835, -inf
      %1884 = vmax.xlane.f32.xlu0 %v1883
      %v1885 = vpop.xlane.xlu0 %1884
      %v1886 = vsub.f32 %v1703, %v1840
      %v1887 = vsub.f32 %v1706, %v1843
      %v1888 = vsub.f32 %v1711, %v1846
      %v1889 = vsub.f32 %v1714, %v1849
      %v1890 = vsub.f32 %v1719, %v1852
      %v1891 = vsub.f32 %v1722, %v1855
      %v1892 = vsub.f32 %v1727, %v1858
      %v1893 = vsub.f32 %v1730, %v1861
      %v1894 = vsub.f32 %v1808, %v1864
      %v1895 = vsub.f32 %v1811, %v1867
      %v1896 = vsub.f32 %v1816, %v1870
      %v1897 = vsub.f32 %v1819, %v1873
      %v1898 = vsub.f32 %v1824, %v1876
      %v1899 = vsub.f32 %v1827, %v1879
      %v1900 = vsub.f32 %v1832, %v1882
      %v1901 = vsub.f32 %v1835, %v1885
      %v1902 = vmul.f32 %v1886, 1.442695
      %v1903 = vpow.pop %v1902
      %v1904 = vmul.f32 %v1887, 1.442695
      %v1905 = vpow.pop %v1904
      %v1906 = vmul.f32 %v1888, 1.442695
      %v1907 = vpow.pop %v1906
      %v1908 = vmul.f32 %v1889, 1.442695
      %v1909 = vpow.pop %v1908
      %v1910 = vmul.f32 %v1890, 1.442695
      %v1911 = vpow.pop %v1910
      %v1912 = vmul.f32 %v1891, 1.442695
      %v1913 = vpow.pop %v1912
      %v1914 = vmul.f32 %v1892, 1.442695
      %v1915 = vpow.pop %v1914
      %v1916 = vmul.f32 %v1893, 1.442695
      %v1917 = vpow.pop %v1916
      %v1918 = vmul.f32 %v1894, 1.442695
      %v1919 = vpow.pop %v1918
      %v1920 = vmul.f32 %v1895, 1.442695
      %v1921 = vpow.pop %v1920
      %v1922 = vmul.f32 %v1896, 1.442695
      %v1923 = vpow.pop %v1922
      %v1924 = vmul.f32 %v1897, 1.442695
      %v1925 = vpow.pop %v1924
      %v1926 = vmul.f32 %v1898, 1.442695
      %v1927 = vpow.pop %v1926
      %v1928 = vmul.f32 %v1899, 1.442695
      %v1929 = vpow.pop %v1928
      %v1930 = vmul.f32 %v1900, 1.442695
      %v1931 = vpow.pop %v1930
      %v1932 = vmul.f32 %v1901, 1.442695
      %v1933 = vpow.pop %v1932
      %v1934 = vsel %vm675, %v1903, 0.0
      %1935 = vadd.xlane.f32.xlu0 %v1934
      %v1936 = vpop.xlane.xlu0 %1935
      %v1937 = vsel %vm675, %v1905, 0.0
      %1938 = vadd.xlane.f32.xlu0 %v1937
      %v1939 = vpop.xlane.xlu0 %1938
      %v1940 = vsel %vm675, %v1907, 0.0
      %1941 = vadd.xlane.f32.xlu0 %v1940
      %v1942 = vpop.xlane.xlu0 %1941
      %v1943 = vsel %vm675, %v1909, 0.0
      %1944 = vadd.xlane.f32.xlu0 %v1943
      %v1945 = vpop.xlane.xlu0 %1944
      %v1946 = vsel %vm675, %v1911, 0.0
      %1947 = vadd.xlane.f32.xlu0 %v1946
      %v1948 = vpop.xlane.xlu0 %1947
      %v1949 = vsel %vm675, %v1913, 0.0
      %1950 = vadd.xlane.f32.xlu0 %v1949
      %v1951 = vpop.xlane.xlu0 %1950
      %v1952 = vsel %vm675, %v1915, 0.0
      %1953 = vadd.xlane.f32.xlu0 %v1952
      %v1954 = vpop.xlane.xlu0 %1953
      %v1955 = vsel %vm675, %v1917, 0.0
      %1956 = vadd.xlane.f32.xlu0 %v1955
      %v1957 = vpop.xlane.xlu0 %1956
      %v1958 = vsel %vm675, %v1919, 0.0
      %1959 = vadd.xlane.f32.xlu0 %v1958
      %v1960 = vpop.xlane.xlu0 %1959
      %v1961 = vsel %vm675, %v1921, 0.0
      %1962 = vadd.xlane.f32.xlu0 %v1961
      %v1963 = vpop.xlane.xlu0 %1962
      %v1964 = vsel %vm675, %v1923, 0.0
      %1965 = vadd.xlane.f32.xlu0 %v1964
      %v1966 = vpop.xlane.xlu0 %1965
      %v1967 = vsel %vm675, %v1925, 0.0
      %1968 = vadd.xlane.f32.xlu0 %v1967
      %v1969 = vpop.xlane.xlu0 %1968
      %v1970 = vsel %vm675, %v1927, 0.0
      %1971 = vadd.xlane.f32.xlu0 %v1970
      %v1972 = vpop.xlane.xlu0 %1971
      %v1973 = vsel %vm675, %v1929, 0.0
      %1974 = vadd.xlane.f32.xlu0 %v1973
      %v1975 = vpop.xlane.xlu0 %1974
      %v1976 = vsel %vm675, %v1931, 0.0
      %1977 = vadd.xlane.f32.xlu0 %v1976
      %v1978 = vpop.xlane.xlu0 %1977
      %v1979 = vsel %vm675, %v1933, 0.0
      %1980 = vadd.xlane.f32.xlu0 %v1979
      %v1981 = vpop.xlane.xlu0 %1980
      %v1982 = vpack.c.bf16 %v1905, %v1903
      %v1983 = vpack.c.bf16 %v1909, %v1907
      %v1984 = vpack.c.bf16 %v1913, %v1911
      %v1985 = vpack.c.bf16 %v1917, %v1915
      %v1986 = vpack.c.bf16 %v1921, %v1919
      %v1987 = vpack.c.bf16 %v1925, %v1923
      %v1988 = vpack.c.bf16 %v1929, %v1927
      %v1989 = vpack.c.bf16 %v1933, %v1931
      %1990 = vrot.lane.b32.xlu0 %v456, 48
      %v1991 = vpop.permute.xlu0 %1990
      %1992 = vrot.lane.b32.xlu0 %v457, 48
      %v1993 = vpop.permute.xlu0 %1992
      %1994 = vrot.lane.b32.xlu0 %v458, 48
      %v1995 = vpop.permute.xlu0 %1994
      %1996 = vrot.lane.b32.xlu0 %v459, 48
      %v1997 = vpop.permute.xlu0 %1996
      %v2003 = vsel %vm675, %v1982, 0
      %v2006 = vsel %vm675, %v1983, 0
      %v2009 = vsel %vm675, %v1984, 0
      %v2012 = vsel %vm675, %v1985, 0
      %2014 = vmatprep.subr.bf16.mxu0 0
      %2015 = vmatpush1.bf16.msra.mxu0 0
      %2016 = vmatprep.subr.bf16.mxu0 0
      %2017 = vmatpush1.bf16.msra.mxu0 0
      %2018 = vmatprep.subr.bf16.mxu0 0
      %2019 = vmatpush1.bf16.msra.mxu0 0
      %2020 = vmatprep.subr.bf16.mxu0 0
      %2021 = vmatpush1.bf16.msra.mxu0 0
      %2022 = vmatprep.subr.bf16.mxu0 0
      %2023 = vmatpush1.bf16.msra.mxu0 %v1997
      %2024 = vmatprep.subr.bf16.mxu0 0
      %2025 = vmatpush1.bf16.msra.mxu0 %v1995
      %2026 = vmatprep.subr.bf16.mxu0 0
      %2027 = vmatpush1.bf16.msra.mxu0 %v1993
      %2028 = vmatprep.subr.bf16.mxu0 0
      %2029 = vmatpush1.bf16.msra.mxu0 %v1991
      %2030 = vmatprep.subr.bf16.mxu0 0
      %2031 = vmatpush2.bf16.msra.mxu0 0
      %2032 = vmatprep.subr.bf16.mxu0 0
      %2033 = vmatpush2.bf16.msra.mxu0 0
      %2034 = vmatprep.subr.bf16.mxu0 0
      %2035 = vmatpush2.bf16.msra.mxu0 0
      %2036 = vmatprep.subr.bf16.mxu0 0
      %2037 = vmatpush2.bf16.msra.mxu0 0
      %2038 = vmatprep.subr.bf16.mxu0 0
      %2039 = vmatpush2.bf16.msra.mxu0 0
      %2040 = vmatprep.subr.bf16.mxu0 0
      %2041 = vmatpush2.bf16.msra.mxu0 0
      %2042 = vmatprep.subr.bf16.mxu0 0
      %2043 = vmatpush2.bf16.msra.mxu0 0
      %2044 = vmatprep.subr.bf16.mxu0 0
      %2045 = vmatpush2.bf16.msra.mxu0 0
      %2046 = vmatprep.mubr.bf16.mxu0 0
      %2047 = vmatmul.mubr.bf16.gmra.mxu0 %v2003
      %v2048 = vpop.f32.mrf.mxu0
      %v2049 = vadd.f32 0.0, %v2048
      %v2050 = vpop.f32.mrf.mxu0
      %v2051 = vpop.f32.mrf.mxu0
      %v2052 = vadd.f32 0.0, %v2051
      %v2053 = vpop.f32.mrf.mxu0
      %2054 = vmatprep.mubr.bf16.mxu0 0
      %2055 = vmatmul.mubr.bf16.gmra.mxu0 %v2006
      %v2056 = vpop.f32.mrf.mxu0
      %v2057 = vadd.f32 0.0, %v2056
      %v2058 = vpop.f32.mrf.mxu0
      %v2059 = vpop.f32.mrf.mxu0
      %v2060 = vadd.f32 0.0, %v2059
      %v2061 = vpop.f32.mrf.mxu0
      %2062 = vmatprep.mubr.bf16.mxu0 0
      %2063 = vmatmul.mubr.bf16.gmra.mxu0 %v2009
      %v2064 = vpop.f32.mrf.mxu0
      %v2065 = vadd.f32 0.0, %v2064
      %v2066 = vpop.f32.mrf.mxu0
      %v2067 = vpop.f32.mrf.mxu0
      %v2068 = vadd.f32 0.0, %v2067
      %v2069 = vpop.f32.mrf.mxu0
      %2070 = vmatprep.mubr.bf16.mxu0 0
      %2071 = vmatmul.mubr.bf16.gmra.mxu0 %v2012
      %v2072 = vpop.f32.mrf.mxu0
      %v2073 = vadd.f32 0.0, %v2072
      %v2074 = vpop.f32.mrf.mxu0
      %v2075 = vpop.f32.mrf.mxu0
      %v2076 = vadd.f32 0.0, %v2075
      %v2077 = vpop.f32.mrf.mxu0
      %2078 = vdwg.mxu0
      %2079 = vrot.lane.b32.xlu0 %v460, 48
      %v2080 = vpop.permute.xlu0 %2079
      %2081 = vrot.lane.b32.xlu0 %v461, 48
      %v2082 = vpop.permute.xlu0 %2081
      %2083 = vrot.lane.b32.xlu0 %v462, 48
      %v2084 = vpop.permute.xlu0 %2083
      %2085 = vrot.lane.b32.xlu0 %v463, 48
      %v2086 = vpop.permute.xlu0 %2085
      %v2092 = vsel %vm675, %v1986, 0
      %v2095 = vsel %vm675, %v1987, 0
      %v2098 = vsel %vm675, %v1988, 0
      %v2101 = vsel %vm675, %v1989, 0
      %2103 = vmatprep.subr.bf16.mxu0 0
      %2104 = vmatpush1.bf16.msra.mxu0 0
      %2105 = vmatprep.subr.bf16.mxu0 0
      %2106 = vmatpush1.bf16.msra.mxu0 0
      %2107 = vmatprep.subr.bf16.mxu0 0
      %2108 = vmatpush1.bf16.msra.mxu0 0
      %2109 = vmatprep.subr.bf16.mxu0 0
      %2110 = vmatpush1.bf16.msra.mxu0 0
      %2111 = vmatprep.subr.bf16.mxu0 0
      %2112 = vmatpush1.bf16.msra.mxu0 %v2086
      %2113 = vmatprep.subr.bf16.mxu0 0
      %2114 = vmatpush1.bf16.msra.mxu0 %v2084
      %2115 = vmatprep.subr.bf16.mxu0 0
      %2116 = vmatpush1.bf16.msra.mxu0 %v2082
      %2117 = vmatprep.subr.bf16.mxu0 0
      %2118 = vmatpush1.bf16.msra.mxu0 %v2080
      %2119 = vmatprep.subr.bf16.mxu0 0
      %2120 = vmatpush2.bf16.msra.mxu0 0
      %2121 = vmatprep.subr.bf16.mxu0 0
      %2122 = vmatpush2.bf16.msra.mxu0 0
      %2123 = vmatprep.subr.bf16.mxu0 0
      %2124 = vmatpush2.bf16.msra.mxu0 0
      %2125 = vmatprep.subr.bf16.mxu0 0
      %2126 = vmatpush2.bf16.msra.mxu0 0
      %2127 = vmatprep.subr.bf16.mxu0 0
      %2128 = vmatpush2.bf16.msra.mxu0 0
      %2129 = vmatprep.subr.bf16.mxu0 0
      %2130 = vmatpush2.bf16.msra.mxu0 0
      %2131 = vmatprep.subr.bf16.mxu0 0
      %2132 = vmatpush2.bf16.msra.mxu0 0
      %2133 = vmatprep.subr.bf16.mxu0 0
      %2134 = vmatpush2.bf16.msra.mxu0 0
      %2135 = vmatprep.mubr.bf16.mxu0 0
      %2136 = vmatmul.mubr.bf16.gmra.mxu0 %v2092
      %v2137 = vpop.f32.mrf.mxu0
      %v2138 = vadd.f32 0.0, %v2137
      %v2139 = vpop.f32.mrf.mxu0
      %v2140 = vpop.f32.mrf.mxu0
      %v2141 = vadd.f32 0.0, %v2140
      %v2142 = vpop.f32.mrf.mxu0
      %2143 = vmatprep.mubr.bf16.mxu0 0
      %2144 = vmatmul.mubr.bf16.gmra.mxu0 %v2095
      %v2145 = vpop.f32.mrf.mxu0
      %v2146 = vadd.f32 0.0, %v2145
      %v2147 = vpop.f32.mrf.mxu0
      %v2148 = vpop.f32.mrf.mxu0
      %v2149 = vadd.f32 0.0, %v2148
      %v2150 = vpop.f32.mrf.mxu0
      %2151 = vmatprep.mubr.bf16.mxu0 0
      %2152 = vmatmul.mubr.bf16.gmra.mxu0 %v2098
      %v2153 = vpop.f32.mrf.mxu0
      %v2154 = vadd.f32 0.0, %v2153
      %v2155 = vpop.f32.mrf.mxu0
      %v2156 = vpop.f32.mrf.mxu0
      %v2157 = vadd.f32 0.0, %v2156
      %v2158 = vpop.f32.mrf.mxu0
      %2159 = vmatprep.mubr.bf16.mxu0 0
      %2160 = vmatmul.mubr.bf16.gmra.mxu0 %v2101
      %v2161 = vpop.f32.mrf.mxu0
      %v2162 = vadd.f32 0.0, %v2161
      %v2163 = vpop.f32.mrf.mxu0
      %v2164 = vpop.f32.mrf.mxu0
      %v2165 = vadd.f32 0.0, %v2164
      %v2166 = vpop.f32.mrf.mxu0
      %2167 = vdwg.mxu0
      %v2168 = vrcp.pop %v1936
      %v2169 = vrcp.pop %v1939
      %v2170 = vrcp.pop %v1942
      %v2171 = vrcp.pop %v1945
      %v2172 = vrcp.pop %v1948
      %v2173 = vrcp.pop %v1951
      %v2174 = vrcp.pop %v1954
      %v2175 = vrcp.pop %v1957
      %v2176 = vrcp.pop %v1960
      %v2177 = vrcp.pop %v1963
      %v2178 = vrcp.pop %v1966
      %v2179 = vrcp.pop %v1969
      %v2180 = vrcp.pop %v1972
      %v2181 = vrcp.pop %v1975
      %v2182 = vrcp.pop %v1978
      %v2183 = vrcp.pop %v1981
      %v2184 = vmul.f32 %v2049, %v2168
      %v2185 = vmul.f32 %v2052, %v2169
      %v2186 = vmul.f32 %v2057, %v2170
      %v2187 = vmul.f32 %v2060, %v2171
      %v2188 = vmul.f32 %v2065, %v2172
      %v2189 = vmul.f32 %v2068, %v2173
      %v2190 = vmul.f32 %v2073, %v2174
      %v2191 = vmul.f32 %v2076, %v2175
      %v2192 = vmul.f32 %v2138, %v2176
      %v2193 = vmul.f32 %v2141, %v2177
      %v2194 = vmul.f32 %v2146, %v2178
      %v2195 = vmul.f32 %v2149, %v2179
      %v2196 = vmul.f32 %v2154, %v2180
      %v2197 = vmul.f32 %v2157, %v2181
      %v2198 = vmul.f32 %v2162, %v2182
      %v2199 = vmul.f32 %v2165, %v2183
      %s2200 = scalar_lea.vmem %s5, 192
      %v2201 = vld [vmem:[%s2200] sm:$0xff]
      %v2202 = vld [vmem:[%s2200 + $0x8] sm:$0xff]
      %v2203 = vld [vmem:[%s2200 + $0x10] sm:$0xff]
      %v2204 = vld [vmem:[%s2200 + $0x18] sm:$0xff]
      %v2205 = vld [vmem:[%s2200 + $0x20] sm:$0xff]
      %v2206 = vld [vmem:[%s2200 + $0x28] sm:$0xff]
      %v2207 = vld [vmem:[%s2200 + $0x30] sm:$0xff]
      %v2208 = vld [vmem:[%s2200 + $0x38] sm:$0xff]
      %2209 = vrot.lane.b32.xlu0 %v456, 104
      %v2210 = vpop.permute.xlu0 %2209
      %2211 = vrot.lane.b32.xlu0 %v457, 104
      %v2212 = vpop.permute.xlu0 %2211
      %2213 = vrot.lane.b32.xlu0 %v458, 104
      %v2214 = vpop.permute.xlu0 %2213
      %2215 = vrot.lane.b32.xlu0 %v459, 104
      %v2216 = vpop.permute.xlu0 %2215
      %2217 = vrot.lane.b32.xlu0 %v456, 72
      %v2218 = vpop.permute.xlu0 %2217
      %2219 = vrot.lane.b32.xlu0 %v457, 72
      %v2220 = vpop.permute.xlu0 %2219
      %2221 = vrot.lane.b32.xlu0 %v458, 72
      %v2222 = vpop.permute.xlu0 %2221
      %2223 = vrot.lane.b32.xlu0 %v459, 72
      %v2224 = vpop.permute.xlu0 %2223
      %v2226 = vsel %vm484, %v2210, 0
      %v2229 = vsel %vm484, %v2212, 0
      %v2232 = vsel %vm484, %v2214, 0
      %v2235 = vsel %vm484, %v2216, 0
      %v2238 = vsel %vm484, %v2218, 0
      %v2241 = vsel %vm484, %v2220, 0
      %v2244 = vsel %vm484, %v2222, 0
      %v2247 = vsel %vm484, %v2224, 0
      %2249 = vmatprep.subr.bf16.mxu0 0
      %2250 = vmatpush1.bf16.xpose.msra.mxu0 0
      %2251 = vmatprep.subr.bf16.mxu0 0
      %2252 = vmatpush1.bf16.xpose.msra.mxu0 0
      %2253 = vmatprep.subr.bf16.mxu0 0
      %2254 = vmatpush1.bf16.xpose.msra.mxu0 0
      %2255 = vmatprep.subr.bf16.mxu0 0
      %2256 = vmatpush1.bf16.xpose.msra.mxu0 0
      %2257 = vmatprep.subr.bf16.mxu0 0
      %2258 = vmatpush1.bf16.xpose.msra.mxu0 %v2247
      %2259 = vmatprep.subr.bf16.mxu0 0
      %2260 = vmatpush1.bf16.xpose.msra.mxu0 %v2244
      %2261 = vmatprep.subr.bf16.mxu0 0
      %2262 = vmatpush1.bf16.xpose.msra.mxu0 %v2241
      %2263 = vmatprep.subr.bf16.mxu0 0
      %2264 = vmatpush1.bf16.xpose.msra.mxu0 %v2238
      %2265 = vmatprep.subr.bf16.mxu0 0
      %2266 = vmatpush2.bf16.xpose.msra.mxu0 0
      %2267 = vmatprep.subr.bf16.mxu0 0
      %2268 = vmatpush2.bf16.xpose.msra.mxu0 0
      %2269 = vmatprep.subr.bf16.mxu0 0
      %2270 = vmatpush2.bf16.xpose.msra.mxu0 0
      %2271 = vmatprep.subr.bf16.mxu0 0
      %2272 = vmatpush2.bf16.xpose.msra.mxu0 0
      %2273 = vmatprep.subr.bf16.mxu0 0
      %2274 = vmatpush2.bf16.xpose.msra.mxu0 0
      %2275 = vmatprep.subr.bf16.mxu0 0
      %2276 = vmatpush2.bf16.xpose.msra.mxu0 0
      %2277 = vmatprep.subr.bf16.mxu0 0
      %2278 = vmatpush2.bf16.xpose.msra.mxu0 0
      %2279 = vmatprep.subr.bf16.mxu0 0
      %2280 = vmatpush2.bf16.xpose.msra.mxu0 0
      %2281 = vmatprep.mubr.bf16.mxu0 0
      %2282 = vmatmul.mubr.bf16.gmra.mxu0 %v2226
      %v2283 = vpop.f32.mrf.mxu0
      %v2284 = vadd.f32 %v2201, %v2283
      %v2285 = vpop.f32.mrf.mxu0
      %v2286 = vpop.f32.mrf.mxu0
      %v2287 = vadd.f32 %v2202, %v2286
      %v2288 = vpop.f32.mrf.mxu0
      %2289 = vmatprep.mubr.bf16.mxu0 0
      %2290 = vmatmul.mubr.bf16.gmra.mxu0 %v2229
      %v2291 = vpop.f32.mrf.mxu0
      %v2292 = vadd.f32 %v2203, %v2291
      %v2293 = vpop.f32.mrf.mxu0
      %v2294 = vpop.f32.mrf.mxu0
      %v2295 = vadd.f32 %v2204, %v2294
      %v2296 = vpop.f32.mrf.mxu0
      %2297 = vmatprep.mubr.bf16.mxu0 0
      %2298 = vmatmul.mubr.bf16.gmra.mxu0 %v2232
      %v2299 = vpop.f32.mrf.mxu0
      %v2300 = vadd.f32 %v2205, %v2299
      %v2301 = vpop.f32.mrf.mxu0
      %v2302 = vpop.f32.mrf.mxu0
      %v2303 = vadd.f32 %v2206, %v2302
      %v2304 = vpop.f32.mrf.mxu0
      %2305 = vmatprep.mubr.bf16.mxu0 0
      %2306 = vmatmul.mubr.bf16.gmra.mxu0 %v2235
      %v2307 = vpop.f32.mrf.mxu0
      %v2308 = vadd.f32 %v2207, %v2307
      %v2309 = vpop.f32.mrf.mxu0
      %v2310 = vpop.f32.mrf.mxu0
      %v2311 = vadd.f32 %v2208, %v2310
      %v2312 = vpop.f32.mrf.mxu0
      %2313 = vdwg.mxu0
      %2314 = vrot.lane.b32.xlu0 %v460, 104
      %v2315 = vpop.permute.xlu0 %2314
      %2316 = vrot.lane.b32.xlu0 %v461, 104
      %v2317 = vpop.permute.xlu0 %2316
      %2318 = vrot.lane.b32.xlu0 %v462, 104
      %v2319 = vpop.permute.xlu0 %2318
      %2320 = vrot.lane.b32.xlu0 %v463, 104
      %v2321 = vpop.permute.xlu0 %2320
      %2322 = vrot.lane.b32.xlu0 %v460, 72
      %v2323 = vpop.permute.xlu0 %2322
      %2324 = vrot.lane.b32.xlu0 %v461, 72
      %v2325 = vpop.permute.xlu0 %2324
      %2326 = vrot.lane.b32.xlu0 %v462, 72
      %v2327 = vpop.permute.xlu0 %2326
      %2328 = vrot.lane.b32.xlu0 %v463, 72
      %v2329 = vpop.permute.xlu0 %2328
      %v2331 = vsel %vm484, %v2315, 0
      %v2334 = vsel %vm484, %v2317, 0
      %v2337 = vsel %vm484, %v2319, 0
      %v2340 = vsel %vm484, %v2321, 0
      %v2343 = vsel %vm484, %v2323, 0
      %v2346 = vsel %vm484, %v2325, 0
      %v2349 = vsel %vm484, %v2327, 0
      %v2352 = vsel %vm484, %v2329, 0
      %2354 = vmatprep.subr.bf16.mxu0 0
      %2355 = vmatpush1.bf16.xpose.msra.mxu0 0
      %2356 = vmatprep.subr.bf16.mxu0 0
      %2357 = vmatpush1.bf16.xpose.msra.mxu0 0
      %2358 = vmatprep.subr.bf16.mxu0 0
      %2359 = vmatpush1.bf16.xpose.msra.mxu0 0
      %2360 = vmatprep.subr.bf16.mxu0 0
      %2361 = vmatpush1.bf16.xpose.msra.mxu0 0
      %2362 = vmatprep.subr.bf16.mxu0 0
      %2363 = vmatpush1.bf16.xpose.msra.mxu0 %v2352
      %2364 = vmatprep.subr.bf16.mxu0 0
      %2365 = vmatpush1.bf16.xpose.msra.mxu0 %v2349
      %2366 = vmatprep.subr.bf16.mxu0 0
      %2367 = vmatpush1.bf16.xpose.msra.mxu0 %v2346
      %2368 = vmatprep.subr.bf16.mxu0 0
      %2369 = vmatpush1.bf16.xpose.msra.mxu0 %v2343
      %2370 = vmatprep.subr.bf16.mxu0 0
      %2371 = vmatpush2.bf16.xpose.msra.mxu0 0
      %2372 = vmatprep.subr.bf16.mxu0 0
      %2373 = vmatpush2.bf16.xpose.msra.mxu0 0
      %2374 = vmatprep.subr.bf16.mxu0 0
      %2375 = vmatpush2.bf16.xpose.msra.mxu0 0
      %2376 = vmatprep.subr.bf16.mxu0 0
      %2377 = vmatpush2.bf16.xpose.msra.mxu0 0
      %2378 = vmatprep.subr.bf16.mxu0 0
      %2379 = vmatpush2.bf16.xpose.msra.mxu0 0
      %2380 = vmatprep.subr.bf16.mxu0 0
      %2381 = vmatpush2.bf16.xpose.msra.mxu0 0
      %2382 = vmatprep.subr.bf16.mxu0 0
      %2383 = vmatpush2.bf16.xpose.msra.mxu0 0
      %2384 = vmatprep.subr.bf16.mxu0 0
      %2385 = vmatpush2.bf16.xpose.msra.mxu0 0
      %2386 = vmatprep.mubr.bf16.mxu0 0
      %2387 = vmatmul.mubr.bf16.gmra.mxu0 %v2331
      %v2388 = vpop.f32.mrf.mxu0
      %v2389 = vadd.f32 %v2201, %v2388
      %v2390 = vpop.f32.mrf.mxu0
      %v2391 = vpop.f32.mrf.mxu0
      %v2392 = vadd.f32 %v2202, %v2391
      %v2393 = vpop.f32.mrf.mxu0
      %2394 = vmatprep.mubr.bf16.mxu0 0
      %2395 = vmatmul.mubr.bf16.gmra.mxu0 %v2334
      %v2396 = vpop.f32.mrf.mxu0
      %v2397 = vadd.f32 %v2203, %v2396
      %v2398 = vpop.f32.mrf.mxu0
      %v2399 = vpop.f32.mrf.mxu0
      %v2400 = vadd.f32 %v2204, %v2399
      %v2401 = vpop.f32.mrf.mxu0
      %2402 = vmatprep.mubr.bf16.mxu0 0
      %2403 = vmatmul.mubr.bf16.gmra.mxu0 %v2337
      %v2404 = vpop.f32.mrf.mxu0
      %v2405 = vadd.f32 %v2205, %v2404
      %v2406 = vpop.f32.mrf.mxu0
      %v2407 = vpop.f32.mrf.mxu0
      %v2408 = vadd.f32 %v2206, %v2407
      %v2409 = vpop.f32.mrf.mxu0
      %2410 = vmatprep.mubr.bf16.mxu0 0
      %2411 = vmatmul.mubr.bf16.gmra.mxu0 %v2340
      %v2412 = vpop.f32.mrf.mxu0
      %v2413 = vadd.f32 %v2207, %v2412
      %v2414 = vpop.f32.mrf.mxu0
      %v2415 = vpop.f32.mrf.mxu0
      %v2416 = vadd.f32 %v2208, %v2415
      %v2417 = vpop.f32.mrf.mxu0
      %2418 = vdwg.mxu0
      %v2419 = vsel %vm675, %v2284, -inf
      %2420 = vmax.xlane.f32.xlu0 %v2419
      %v2421 = vpop.xlane.xlu0 %2420
      %v2422 = vsel %vm675, %v2287, -inf
      %2423 = vmax.xlane.f32.xlu0 %v2422
      %v2424 = vpop.xlane.xlu0 %2423
      %v2425 = vsel %vm675, %v2292, -inf
      %2426 = vmax.xlane.f32.xlu0 %v2425
      %v2427 = vpop.xlane.xlu0 %2426
      %v2428 = vsel %vm675, %v2295, -inf
      %2429 = vmax.xlane.f32.xlu0 %v2428
      %v2430 = vpop.xlane.xlu0 %2429
      %v2431 = vsel %vm675, %v2300, -inf
      %2432 = vmax.xlane.f32.xlu0 %v2431
      %v2433 = vpop.xlane.xlu0 %2432
      %v2434 = vsel %vm675, %v2303, -inf
      %2435 = vmax.xlane.f32.xlu0 %v2434
      %v2436 = vpop.xlane.xlu0 %2435
      %v2437 = vsel %vm675, %v2308, -inf
      %2438 = vmax.xlane.f32.xlu0 %v2437
      %v2439 = vpop.xlane.xlu0 %2438
      %v2440 = vsel %vm675, %v2311, -inf
      %2441 = vmax.xlane.f32.xlu0 %v2440
      %v2442 = vpop.xlane.xlu0 %2441
      %v2443 = vsel %vm675, %v2389, -inf
      %2444 = vmax.xlane.f32.xlu0 %v2443
      %v2445 = vpop.xlane.xlu0 %2444
      %v2446 = vsel %vm675, %v2392, -inf
      %2447 = vmax.xlane.f32.xlu0 %v2446
      %v2448 = vpop.xlane.xlu0 %2447
      %v2449 = vsel %vm675, %v2397, -inf
      %2450 = vmax.xlane.f32.xlu0 %v2449
      %v2451 = vpop.xlane.xlu0 %2450
      %v2452 = vsel %vm675, %v2400, -inf
      %2453 = vmax.xlane.f32.xlu0 %v2452
      %v2454 = vpop.xlane.xlu0 %2453
      %v2455 = vsel %vm675, %v2405, -inf
      %2456 = vmax.xlane.f32.xlu0 %v2455
      %v2457 = vpop.xlane.xlu0 %2456
      %v2458 = vsel %vm675, %v2408, -inf
      %2459 = vmax.xlane.f32.xlu0 %v2458
      %v2460 = vpop.xlane.xlu0 %2459
      %v2461 = vsel %vm675, %v2413, -inf
      %2462 = vmax.xlane.f32.xlu0 %v2461
      %v2463 = vpop.xlane.xlu0 %2462
      %v2464 = vsel %vm675, %v2416, -inf
      %2465 = vmax.xlane.f32.xlu0 %v2464
      %v2466 = vpop.xlane.xlu0 %2465
      %v2467 = vsub.f32 %v2284, %v2421
      %v2468 = vsub.f32 %v2287, %v2424
      %v2469 = vsub.f32 %v2292, %v2427
      %v2470 = vsub.f32 %v2295, %v2430
      %v2471 = vsub.f32 %v2300, %v2433
      %v2472 = vsub.f32 %v2303, %v2436
      %v2473 = vsub.f32 %v2308, %v2439
      %v2474 = vsub.f32 %v2311, %v2442
      %v2475 = vsub.f32 %v2389, %v2445
      %v2476 = vsub.f32 %v2392, %v2448
      %v2477 = vsub.f32 %v2397, %v2451
      %v2478 = vsub.f32 %v2400, %v2454
      %v2479 = vsub.f32 %v2405, %v2457
      %v2480 = vsub.f32 %v2408, %v2460
      %v2481 = vsub.f32 %v2413, %v2463
      %v2482 = vsub.f32 %v2416, %v2466
      %v2483 = vmul.f32 %v2467, 1.442695
      %v2484 = vpow.pop %v2483
      %v2485 = vmul.f32 %v2468, 1.442695
      %v2486 = vpow.pop %v2485
      %v2487 = vmul.f32 %v2469, 1.442695
      %v2488 = vpow.pop %v2487
      %v2489 = vmul.f32 %v2470, 1.442695
      %v2490 = vpow.pop %v2489
      %v2491 = vmul.f32 %v2471, 1.442695
      %v2492 = vpow.pop %v2491
      %v2493 = vmul.f32 %v2472, 1.442695
      %v2494 = vpow.pop %v2493
      %v2495 = vmul.f32 %v2473, 1.442695
      %v2496 = vpow.pop %v2495
      %v2497 = vmul.f32 %v2474, 1.442695
      %v2498 = vpow.pop %v2497
      %v2499 = vmul.f32 %v2475, 1.442695
      %v2500 = vpow.pop %v2499
      %v2501 = vmul.f32 %v2476, 1.442695
      %v2502 = vpow.pop %v2501
      %v2503 = vmul.f32 %v2477, 1.442695
      %v2504 = vpow.pop %v2503
      %v2505 = vmul.f32 %v2478, 1.442695
      %v2506 = vpow.pop %v2505
      %v2507 = vmul.f32 %v2479, 1.442695
      %v2508 = vpow.pop %v2507
      %v2509 = vmul.f32 %v2480, 1.442695
      %v2510 = vpow.pop %v2509
      %v2511 = vmul.f32 %v2481, 1.442695
      %v2512 = vpow.pop %v2511
      %v2513 = vmul.f32 %v2482, 1.442695
      %v2514 = vpow.pop %v2513
      %v2515 = vsel %vm675, %v2484, 0.0
      %2516 = vadd.xlane.f32.xlu0 %v2515
      %v2517 = vpop.xlane.xlu0 %2516
      %v2518 = vsel %vm675, %v2486, 0.0
      %2519 = vadd.xlane.f32.xlu0 %v2518
      %v2520 = vpop.xlane.xlu0 %2519
      %v2521 = vsel %vm675, %v2488, 0.0
      %2522 = vadd.xlane.f32.xlu0 %v2521
      %v2523 = vpop.xlane.xlu0 %2522
      %v2524 = vsel %vm675, %v2490, 0.0
      %2525 = vadd.xlane.f32.xlu0 %v2524
      %v2526 = vpop.xlane.xlu0 %2525
      %v2527 = vsel %vm675, %v2492, 0.0
      %2528 = vadd.xlane.f32.xlu0 %v2527
      %v2529 = vpop.xlane.xlu0 %2528
      %v2530 = vsel %vm675, %v2494, 0.0
      %2531 = vadd.xlane.f32.xlu0 %v2530
      %v2532 = vpop.xlane.xlu0 %2531
      %v2533 = vsel %vm675, %v2496, 0.0
      %2534 = vadd.xlane.f32.xlu0 %v2533
      %v2535 = vpop.xlane.xlu0 %2534
      %v2536 = vsel %vm675, %v2498, 0.0
      %2537 = vadd.xlane.f32.xlu0 %v2536
      %v2538 = vpop.xlane.xlu0 %2537
      %v2539 = vsel %vm675, %v2500, 0.0
      %2540 = vadd.xlane.f32.xlu0 %v2539
      %v2541 = vpop.xlane.xlu0 %2540
      %v2542 = vsel %vm675, %v2502, 0.0
      %2543 = vadd.xlane.f32.xlu0 %v2542
      %v2544 = vpop.xlane.xlu0 %2543
      %v2545 = vsel %vm675, %v2504, 0.0
      %2546 = vadd.xlane.f32.xlu0 %v2545
      %v2547 = vpop.xlane.xlu0 %2546
      %v2548 = vsel %vm675, %v2506, 0.0
      %2549 = vadd.xlane.f32.xlu0 %v2548
      %v2550 = vpop.xlane.xlu0 %2549
      %v2551 = vsel %vm675, %v2508, 0.0
      %2552 = vadd.xlane.f32.xlu0 %v2551
      %v2553 = vpop.xlane.xlu0 %2552
      %v2554 = vsel %vm675, %v2510, 0.0
      %2555 = vadd.xlane.f32.xlu0 %v2554
      %v2556 = vpop.xlane.xlu0 %2555
      %v2557 = vsel %vm675, %v2512, 0.0
      %2558 = vadd.xlane.f32.xlu0 %v2557
      %v2559 = vpop.xlane.xlu0 %2558
      %v2560 = vsel %vm675, %v2514, 0.0
      %2561 = vadd.xlane.f32.xlu0 %v2560
      %v2562 = vpop.xlane.xlu0 %2561
      %v2563 = vpack.c.bf16 %v2486, %v2484
      %v2564 = vpack.c.bf16 %v2490, %v2488
      %v2565 = vpack.c.bf16 %v2494, %v2492
      %v2566 = vpack.c.bf16 %v2498, %v2496
      %v2567 = vpack.c.bf16 %v2502, %v2500
      %v2568 = vpack.c.bf16 %v2506, %v2504
      %v2569 = vpack.c.bf16 %v2510, %v2508
      %v2570 = vpack.c.bf16 %v2514, %v2512
      %2571 = vrot.lane.b32.xlu0 %v456, 40
      %v2572 = vpop.permute.xlu0 %2571
      %2573 = vrot.lane.b32.xlu0 %v457, 40
      %v2574 = vpop.permute.xlu0 %2573
      %2575 = vrot.lane.b32.xlu0 %v458, 40
      %v2576 = vpop.permute.xlu0 %2575
      %2577 = vrot.lane.b32.xlu0 %v459, 40
      %v2578 = vpop.permute.xlu0 %2577
      %v2584 = vsel %vm675, %v2563, 0
      %v2587 = vsel %vm675, %v2564, 0
      %v2590 = vsel %vm675, %v2565, 0
      %v2593 = vsel %vm675, %v2566, 0
      %2595 = vmatprep.subr.bf16.mxu0 0
      %2596 = vmatpush1.bf16.msra.mxu0 0
      %2597 = vmatprep.subr.bf16.mxu0 0
      %2598 = vmatpush1.bf16.msra.mxu0 0
      %2599 = vmatprep.subr.bf16.mxu0 0
      %2600 = vmatpush1.bf16.msra.mxu0 0
      %2601 = vmatprep.subr.bf16.mxu0 0
      %2602 = vmatpush1.bf16.msra.mxu0 0
      %2603 = vmatprep.subr.bf16.mxu0 0
      %2604 = vmatpush1.bf16.msra.mxu0 %v2578
      %2605 = vmatprep.subr.bf16.mxu0 0
      %2606 = vmatpush1.bf16.msra.mxu0 %v2576
      %2607 = vmatprep.subr.bf16.mxu0 0
      %2608 = vmatpush1.bf16.msra.mxu0 %v2574
      %2609 = vmatprep.subr.bf16.mxu0 0
      %2610 = vmatpush1.bf16.msra.mxu0 %v2572
      %2611 = vmatprep.subr.bf16.mxu0 0
      %2612 = vmatpush2.bf16.msra.mxu0 0
      %2613 = vmatprep.subr.bf16.mxu0 0
      %2614 = vmatpush2.bf16.msra.mxu0 0
      %2615 = vmatprep.subr.bf16.mxu0 0
      %2616 = vmatpush2.bf16.msra.mxu0 0
      %2617 = vmatprep.subr.bf16.mxu0 0
      %2618 = vmatpush2.bf16.msra.mxu0 0
      %2619 = vmatprep.subr.bf16.mxu0 0
      %2620 = vmatpush2.bf16.msra.mxu0 0
      %2621 = vmatprep.subr.bf16.mxu0 0
      %2622 = vmatpush2.bf16.msra.mxu0 0
      %2623 = vmatprep.subr.bf16.mxu0 0
      %2624 = vmatpush2.bf16.msra.mxu0 0
      %2625 = vmatprep.subr.bf16.mxu0 0
      %2626 = vmatpush2.bf16.msra.mxu0 0
      %2627 = vmatprep.mubr.bf16.mxu0 0
      %2628 = vmatmul.mubr.bf16.gmra.mxu0 %v2584
      %v2629 = vpop.f32.mrf.mxu0
      %v2630 = vadd.f32 0.0, %v2629
      %v2631 = vpop.f32.mrf.mxu0
      %v2632 = vpop.f32.mrf.mxu0
      %v2633 = vadd.f32 0.0, %v2632
      %v2634 = vpop.f32.mrf.mxu0
      %2635 = vmatprep.mubr.bf16.mxu0 0
      %2636 = vmatmul.mubr.bf16.gmra.mxu0 %v2587
      %v2637 = vpop.f32.mrf.mxu0
      %v2638 = vadd.f32 0.0, %v2637
      %v2639 = vpop.f32.mrf.mxu0
      %v2640 = vpop.f32.mrf.mxu0
      %v2641 = vadd.f32 0.0, %v2640
      %v2642 = vpop.f32.mrf.mxu0
      %2643 = vmatprep.mubr.bf16.mxu0 0
      %2644 = vmatmul.mubr.bf16.gmra.mxu0 %v2590
      %v2645 = vpop.f32.mrf.mxu0
      %v2646 = vadd.f32 0.0, %v2645
      %v2647 = vpop.f32.mrf.mxu0
      %v2648 = vpop.f32.mrf.mxu0
      %v2649 = vadd.f32 0.0, %v2648
      %v2650 = vpop.f32.mrf.mxu0
      %2651 = vmatprep.mubr.bf16.mxu0 0
      %2652 = vmatmul.mubr.bf16.gmra.mxu0 %v2593
      %v2653 = vpop.f32.mrf.mxu0
      %v2654 = vadd.f32 0.0, %v2653
      %v2655 = vpop.f32.mrf.mxu0
      %v2656 = vpop.f32.mrf.mxu0
      %v2657 = vadd.f32 0.0, %v2656
      %v2658 = vpop.f32.mrf.mxu0
      %2659 = vdwg.mxu0
      %2660 = vrot.lane.b32.xlu0 %v460, 40
      %v2661 = vpop.permute.xlu0 %2660
      %2662 = vrot.lane.b32.xlu0 %v461, 40
      %v2663 = vpop.permute.xlu0 %2662
      %2664 = vrot.lane.b32.xlu0 %v462, 40
      %v2665 = vpop.permute.xlu0 %2664
      %2666 = vrot.lane.b32.xlu0 %v463, 40
      %v2667 = vpop.permute.xlu0 %2666
      %v2673 = vsel %vm675, %v2567, 0
      %v2676 = vsel %vm675, %v2568, 0
      %v2679 = vsel %vm675, %v2569, 0
      %v2682 = vsel %vm675, %v2570, 0
      %2684 = vmatprep.subr.bf16.mxu0 0
      %2685 = vmatpush1.bf16.msra.mxu0 0
      %2686 = vmatprep.subr.bf16.mxu0 0
      %2687 = vmatpush1.bf16.msra.mxu0 0
      %2688 = vmatprep.subr.bf16.mxu0 0
      %2689 = vmatpush1.bf16.msra.mxu0 0
      %2690 = vmatprep.subr.bf16.mxu0 0
      %2691 = vmatpush1.bf16.msra.mxu0 0
      %2692 = vmatprep.subr.bf16.mxu0 0
      %2693 = vmatpush1.bf16.msra.mxu0 %v2667
      %2694 = vmatprep.subr.bf16.mxu0 0
      %2695 = vmatpush1.bf16.msra.mxu0 %v2665
      %2696 = vmatprep.subr.bf16.mxu0 0
      %2697 = vmatpush1.bf16.msra.mxu0 %v2663
      %2698 = vmatprep.subr.bf16.mxu0 0
      %2699 = vmatpush1.bf16.msra.mxu0 %v2661
      %2700 = vmatprep.subr.bf16.mxu0 0
      %2701 = vmatpush2.bf16.msra.mxu0 0
      %2702 = vmatprep.subr.bf16.mxu0 0
      %2703 = vmatpush2.bf16.msra.mxu0 0
      %2704 = vmatprep.subr.bf16.mxu0 0
      %2705 = vmatpush2.bf16.msra.mxu0 0
      %2706 = vmatprep.subr.bf16.mxu0 0
      %2707 = vmatpush2.bf16.msra.mxu0 0
      %2708 = vmatprep.subr.bf16.mxu0 0
      %2709 = vmatpush2.bf16.msra.mxu0 0
      %2710 = vmatprep.subr.bf16.mxu0 0
      %2711 = vmatpush2.bf16.msra.mxu0 0
      %2712 = vmatprep.subr.bf16.mxu0 0
      %2713 = vmatpush2.bf16.msra.mxu0 0
      %2714 = vmatprep.subr.bf16.mxu0 0
      %2715 = vmatpush2.bf16.msra.mxu0 0
      %2716 = vmatprep.mubr.bf16.mxu0 0
      %2717 = vmatmul.mubr.bf16.gmra.mxu0 %v2673
      %v2718 = vpop.f32.mrf.mxu0
      %v2719 = vadd.f32 0.0, %v2718
      %v2720 = vpop.f32.mrf.mxu0
      %v2721 = vpop.f32.mrf.mxu0
      %v2722 = vadd.f32 0.0, %v2721
      %v2723 = vpop.f32.mrf.mxu0
      %2724 = vmatprep.mubr.bf16.mxu0 0
      %2725 = vmatmul.mubr.bf16.gmra.mxu0 %v2676
      %v2726 = vpop.f32.mrf.mxu0
      %v2727 = vadd.f32 0.0, %v2726
      %v2728 = vpop.f32.mrf.mxu0
      %v2729 = vpop.f32.mrf.mxu0
      %v2730 = vadd.f32 0.0, %v2729
      %v2731 = vpop.f32.mrf.mxu0
      %2732 = vmatprep.mubr.bf16.mxu0 0
      %2733 = vmatmul.mubr.bf16.gmra.mxu0 %v2679
      %v2734 = vpop.f32.mrf.mxu0
      %v2735 = vadd.f32 0.0, %v2734
      %v2736 = vpop.f32.mrf.mxu0
      %v2737 = vpop.f32.mrf.mxu0
      %v2738 = vadd.f32 0.0, %v2737
      %v2739 = vpop.f32.mrf.mxu0
      %2740 = vmatprep.mubr.bf16.mxu0 0
      %2741 = vmatmul.mubr.bf16.gmra.mxu0 %v2682
      %v2742 = vpop.f32.mrf.mxu0
      %v2743 = vadd.f32 0.0, %v2742
      %v2744 = vpop.f32.mrf.mxu0
      %v2745 = vpop.f32.mrf.mxu0
      %v2746 = vadd.f32 0.0, %v2745
      %v2747 = vpop.f32.mrf.mxu0
      %2748 = vdwg.mxu0
      %v2749 = vrcp.pop %v2517
      %v2750 = vrcp.pop %v2520
      %v2751 = vrcp.pop %v2523
      %v2752 = vrcp.pop %v2526
      %v2753 = vrcp.pop %v2529
      %v2754 = vrcp.pop %v2532
      %v2755 = vrcp.pop %v2535
      %v2756 = vrcp.pop %v2538
      %v2757 = vrcp.pop %v2541
      %v2758 = vrcp.pop %v2544
      %v2759 = vrcp.pop %v2547
      %v2760 = vrcp.pop %v2550
      %v2761 = vrcp.pop %v2553
      %v2762 = vrcp.pop %v2556
      %v2763 = vrcp.pop %v2559
      %v2764 = vrcp.pop %v2562
      %v2765 = vmul.f32 %v2630, %v2749
      %v2766 = vmul.f32 %v2633, %v2750
      %v2767 = vmul.f32 %v2638, %v2751
      %v2768 = vmul.f32 %v2641, %v2752
      %v2769 = vmul.f32 %v2646, %v2753
      %v2770 = vmul.f32 %v2649, %v2754
      %v2771 = vmul.f32 %v2654, %v2755
      %v2772 = vmul.f32 %v2657, %v2756
      %v2773 = vmul.f32 %v2719, %v2757
      %v2774 = vmul.f32 %v2722, %v2758
      %v2775 = vmul.f32 %v2727, %v2759
      %v2776 = vmul.f32 %v2730, %v2760
      %v2777 = vmul.f32 %v2735, %v2761
      %v2778 = vmul.f32 %v2738, %v2762
      %v2779 = vmul.f32 %v2743, %v2763
      %v2780 = vmul.f32 %v2746, %v2764
      %2797 = vrot.lane.b32.xlu0 %v1603, 8
      %v2798 = vpop.permute.xlu0 %2797
      %2799 = vrot.lane.b32.xlu0 %v1604, 8
      %v2800 = vpop.permute.xlu0 %2799
      %2801 = vrot.lane.b32.xlu0 %v1605, 8
      %v2802 = vpop.permute.xlu0 %2801
      %2803 = vrot.lane.b32.xlu0 %v1606, 8
      %v2804 = vpop.permute.xlu0 %2803
      %2805 = vrot.lane.b32.xlu0 %v1607, 8
      %v2806 = vpop.permute.xlu0 %2805
      %2807 = vrot.lane.b32.xlu0 %v1608, 8
      %v2808 = vpop.permute.xlu0 %2807
      %2809 = vrot.lane.b32.xlu0 %v1609, 8
      %v2810 = vpop.permute.xlu0 %2809
      %2811 = vrot.lane.b32.xlu0 %v1610, 8
      %v2812 = vpop.permute.xlu0 %2811
      %2813 = vrot.lane.b32.xlu0 %v1611, 8
      %v2814 = vpop.permute.xlu0 %2813
      %2815 = vrot.lane.b32.xlu0 %v1612, 8
      %v2816 = vpop.permute.xlu0 %2815
      %2817 = vrot.lane.b32.xlu0 %v1613, 8
      %v2818 = vpop.permute.xlu0 %2817
      %2819 = vrot.lane.b32.xlu0 %v1614, 8
      %v2820 = vpop.permute.xlu0 %2819
      %2821 = vrot.lane.b32.xlu0 %v1615, 8
      %v2822 = vpop.permute.xlu0 %2821
      %2823 = vrot.lane.b32.xlu0 %v1616, 8
      %v2824 = vpop.permute.xlu0 %2823
      %2825 = vrot.lane.b32.xlu0 %v1617, 8
      %v2826 = vpop.permute.xlu0 %2825
      %2827 = vrot.lane.b32.xlu0 %v1618, 8
      %v2828 = vpop.permute.xlu0 %2827
      %2861 = vrot.lane.b32.xlu0 %v2184, 16
      %v2862 = vpop.permute.xlu0 %2861
      %2863 = vrot.lane.b32.xlu0 %v2185, 16
      %v2864 = vpop.permute.xlu0 %2863
      %2865 = vrot.lane.b32.xlu0 %v2186, 16
      %v2866 = vpop.permute.xlu0 %2865
      %2867 = vrot.lane.b32.xlu0 %v2187, 16
      %v2868 = vpop.permute.xlu0 %2867
      %2869 = vrot.lane.b32.xlu0 %v2188, 16
      %v2870 = vpop.permute.xlu0 %2869
      %2871 = vrot.lane.b32.xlu0 %v2189, 16
      %v2872 = vpop.permute.xlu0 %2871
      %2873 = vrot.lane.b32.xlu0 %v2190, 16
      %v2874 = vpop.permute.xlu0 %2873
      %2875 = vrot.lane.b32.xlu0 %v2191, 16
      %v2876 = vpop.permute.xlu0 %2875
      %2877 = vrot.lane.b32.xlu0 %v2192, 16
      %v2878 = vpop.permute.xlu0 %2877
      %2879 = vrot.lane.b32.xlu0 %v2193, 16
      %v2880 = vpop.permute.xlu0 %2879
      %2881 = vrot.lane.b32.xlu0 %v2194, 16
      %v2882 = vpop.permute.xlu0 %2881
      %2883 = vrot.lane.b32.xlu0 %v2195, 16
      %v2884 = vpop.permute.xlu0 %2883
      %2885 = vrot.lane.b32.xlu0 %v2196, 16
      %v2886 = vpop.permute.xlu0 %2885
      %2887 = vrot.lane.b32.xlu0 %v2197, 16
      %v2888 = vpop.permute.xlu0 %2887
      %2889 = vrot.lane.b32.xlu0 %v2198, 16
      %v2890 = vpop.permute.xlu0 %2889
      %2891 = vrot.lane.b32.xlu0 %v2199, 16
      %v2892 = vpop.permute.xlu0 %2891
      %2925 = vrot.lane.b32.xlu0 %v2765, 24
      %v2926 = vpop.permute.xlu0 %2925
      %2927 = vrot.lane.b32.xlu0 %v2766, 24
      %v2928 = vpop.permute.xlu0 %2927
      %2929 = vrot.lane.b32.xlu0 %v2767, 24
      %v2930 = vpop.permute.xlu0 %2929
      %2931 = vrot.lane.b32.xlu0 %v2768, 24
      %v2932 = vpop.permute.xlu0 %2931
      %2933 = vrot.lane.b32.xlu0 %v2769, 24
      %v2934 = vpop.permute.xlu0 %2933
      %2935 = vrot.lane.b32.xlu0 %v2770, 24
      %v2936 = vpop.permute.xlu0 %2935
      %2937 = vrot.lane.b32.xlu0 %v2771, 24
      %v2938 = vpop.permute.xlu0 %2937
      %2939 = vrot.lane.b32.xlu0 %v2772, 24
      %v2940 = vpop.permute.xlu0 %2939
      %2941 = vrot.lane.b32.xlu0 %v2773, 24
      %v2942 = vpop.permute.xlu0 %2941
      %2943 = vrot.lane.b32.xlu0 %v2774, 24
      %v2944 = vpop.permute.xlu0 %2943
      %2945 = vrot.lane.b32.xlu0 %v2775, 24
      %v2946 = vpop.permute.xlu0 %2945
      %2947 = vrot.lane.b32.xlu0 %v2776, 24
      %v2948 = vpop.permute.xlu0 %2947
      %2949 = vrot.lane.b32.xlu0 %v2777, 24
      %v2950 = vpop.permute.xlu0 %2949
      %2951 = vrot.lane.b32.xlu0 %v2778, 24
      %v2952 = vpop.permute.xlu0 %2951
      %2953 = vrot.lane.b32.xlu0 %v2779, 24
      %v2954 = vpop.permute.xlu0 %2953
      %2955 = vrot.lane.b32.xlu0 %v2780, 24
      %v2956 = vpop.permute.xlu0 %2955
      %v2973 = vsel %vm484, %v1022, %v2798
      %v2974 = vsel %vm484, %v1023, %v2800
      %v2975 = vsel %vm484, %v1024, %v2802
      %v2976 = vsel %vm484, %v1025, %v2804
      %v2977 = vsel %vm484, %v1026, %v2806
      %v2978 = vsel %vm484, %v1027, %v2808
      %v2979 = vsel %vm484, %v1028, %v2810
      %v2980 = vsel %vm484, %v1029, %v2812
      %v2981 = vsel %vm484, %v1030, %v2814
      %v2982 = vsel %vm484, %v1031, %v2816
      %v2983 = vsel %vm484, %v1032, %v2818
      %v2984 = vsel %vm484, %v1033, %v2820
      %v2985 = vsel %vm484, %v1034, %v2822
      %v2986 = vsel %vm484, %v1035, %v2824
      %v2987 = vsel %vm484, %v1036, %v2826
      %v2988 = vsel %vm484, %v1037, %v2828
      %vm2989 = vcmask 130048
      %v2990 = vsel %vm2989, %v2973, %v2862
      %v2991 = vsel %vm2989, %v2974, %v2864
      %v2992 = vsel %vm2989, %v2975, %v2866
      %v2993 = vsel %vm2989, %v2976, %v2868
      %v2994 = vsel %vm2989, %v2977, %v2870
      %v2995 = vsel %vm2989, %v2978, %v2872
      %v2996 = vsel %vm2989, %v2979, %v2874
      %v2997 = vsel %vm2989, %v2980, %v2876
      %v2998 = vsel %vm2989, %v2981, %v2878
      %v2999 = vsel %vm2989, %v2982, %v2880
      %v3000 = vsel %vm2989, %v2983, %v2882
      %v3001 = vsel %vm2989, %v2984, %v2884
      %v3002 = vsel %vm2989, %v2985, %v2886
      %v3003 = vsel %vm2989, %v2986, %v2888
      %v3004 = vsel %vm2989, %v2987, %v2890
      %v3005 = vsel %vm2989, %v2988, %v2892
      %vm3006 = vcmask 195584
      %v3007 = vsel %vm3006, %v2990, %v2926
      %v3008 = vsel %vm3006, %v2991, %v2928
      %v3009 = vsel %vm3006, %v2992, %v2930
      %v3010 = vsel %vm3006, %v2993, %v2932
      %v3011 = vsel %vm3006, %v2994, %v2934
      %v3012 = vsel %vm3006, %v2995, %v2936
      %v3013 = vsel %vm3006, %v2996, %v2938
      %v3014 = vsel %vm3006, %v2997, %v2940
      %v3015 = vsel %vm3006, %v2998, %v2942
      %v3016 = vsel %vm3006, %v2999, %v2944
      %v3017 = vsel %vm3006, %v3000, %v2946
      %v3018 = vsel %vm3006, %v3001, %v2948
      %v3019 = vsel %vm3006, %v3002, %v2950
      %v3020 = vsel %vm3006, %v3003, %v2952
      %v3021 = vsel %vm3006, %v3004, %v2954
      %v3022 = vsel %vm3006, %v3005, %v2956
      %v3023 = vpack.c.bf16 %v3008, %v3007
      %v3024 = vpack.c.bf16 %v3010, %v3009
      %v3025 = vpack.c.bf16 %v3012, %v3011
      %v3026 = vpack.c.bf16 %v3014, %v3013
      %v3027 = vpack.c.bf16 %v3016, %v3015
      %v3028 = vpack.c.bf16 %v3018, %v3017
      %v3029 = vpack.c.bf16 %v3020, %v3019
      %v3030 = vpack.c.bf16 %v3022, %v3021
      %v3031 = vld [vmem:[%s3] sm:$0xf]
      %v3032 = vld [vmem:[%s3 + $0x4] sm:$0xf]
      %v3033 = vld [vmem:[%s3 + $0x8] sm:$0xf]
      %v3034 = vld [vmem:[%s3 + $0xc] sm:$0xf]
      %v3035 = vld [vmem:[%s4] sm:$0x1]
      %v3036 = vunpack.c.l.bf16 %v3035
      %v3037 = vlaneseq
      %v3038 = vshrl.u32 %v3037, 7
      %v3039 = vsub.s32 0, %v3038
      %v3040 = vrot.slane %v3036, %v3039
      %v3045 = vunpack.c.l.b16 %v3031
      %v3046 = vunpack.c.l.b16 %v3032
      %v3047 = vunpack.c.l.b16 %v3033
      %v3048 = vunpack.c.l.b16 %v3034
      %v3049 = vpack.c.b16 %v3046, %v3045
      %v3050 = vpack.c.b16 %v3048, %v3047
      %v3054 = vsel %vm334, %v3023, 0
      %v3057 = vsel %vm334, %v3024, 0
      %v3060 = vsel %vm334, %v3025, 0
      %v3063 = vsel %vm334, %v3026, 0
      %v3066 = vsel %vm334, %v3027, 0
      %v3069 = vsel %vm334, %v3028, 0
      %v3072 = vsel %vm334, %v3029, 0
      %v3075 = vsel %vm334, %v3030, 0
      %3077 = vmatprep.subr.bf16.mxu0 0
      %3078 = vmatpush1.bf16.msra.mxu0 0
      %3079 = vmatprep.subr.bf16.mxu0 0
      %3080 = vmatpush1.bf16.msra.mxu0 0
      %3081 = vmatprep.subr.bf16.mxu0 0
      %3082 = vmatpush1.bf16.msra.mxu0 0
      %3083 = vmatprep.subr.bf16.mxu0 0
      %3084 = vmatpush1.bf16.msra.mxu0 0
      %3085 = vmatprep.subr.bf16.mxu0 0
      %3086 = vmatpush1.bf16.msra.mxu0 0
      %3087 = vmatprep.subr.bf16.mxu0 0
      %3088 = vmatpush1.bf16.msra.mxu0 0
      %3089 = vmatprep.subr.bf16.mxu0 0
      %3090 = vmatpush1.bf16.msra.mxu0 %v3050
      %3091 = vmatprep.subr.bf16.mxu0 0
      %3092 = vmatpush1.bf16.msra.mxu0 %v3049
      %3093 = vmatprep.subr.bf16.mxu0 0
      %3094 = vmatpush2.bf16.msra.mxu0 0
      %3095 = vmatprep.subr.bf16.mxu0 0
      %3096 = vmatpush2.bf16.msra.mxu0 0
      %3097 = vmatprep.subr.bf16.mxu0 0
      %3098 = vmatpush2.bf16.msra.mxu0 0
      %3099 = vmatprep.subr.bf16.mxu0 0
      %3100 = vmatpush2.bf16.msra.mxu0 0
      %3101 = vmatprep.subr.bf16.mxu0 0
      %3102 = vmatpush2.bf16.msra.mxu0 0
      %3103 = vmatprep.subr.bf16.mxu0 0
      %3104 = vmatpush2.bf16.msra.mxu0 0
      %3105 = vmatprep.subr.bf16.mxu0 0
      %3106 = vmatpush2.bf16.msra.mxu0 0
      %3107 = vmatprep.subr.bf16.mxu0 0
      %3108 = vmatpush2.bf16.msra.mxu0 0
      %3109 = vmatprep.mubr.bf16.mxu0 0
      %3110 = vmatmul.mubr.bf16.gmra.mxu0 %v3054
      %v3111 = vpop.f32.mrf.mxu0
      %v3112 = vadd.f32 %v3040, %v3111
      %v3113 = vpop.f32.mrf.mxu0
      %v3114 = vpop.f32.mrf.mxu0
      %v3115 = vadd.f32 %v3040, %v3114
      %v3116 = vpop.f32.mrf.mxu0
      %3117 = vmatprep.mubr.bf16.mxu0 0
      %3118 = vmatmul.mubr.bf16.gmra.mxu0 %v3057
      %v3119 = vpop.f32.mrf.mxu0
      %v3120 = vadd.f32 %v3040, %v3119
      %v3121 = vpop.f32.mrf.mxu0
      %v3122 = vpop.f32.mrf.mxu0
      %v3123 = vadd.f32 %v3040, %v3122
      %v3124 = vpop.f32.mrf.mxu0
      %3125 = vmatprep.mubr.bf16.mxu0 0
      %3126 = vmatmul.mubr.bf16.gmra.mxu0 %v3060
      %v3127 = vpop.f32.mrf.mxu0
      %v3128 = vadd.f32 %v3040, %v3127
      %v3129 = vpop.f32.mrf.mxu0
      %v3130 = vpop.f32.mrf.mxu0
      %v3131 = vadd.f32 %v3040, %v3130
      %v3132 = vpop.f32.mrf.mxu0
      %3133 = vmatprep.mubr.bf16.mxu0 0
      %3134 = vmatmul.mubr.bf16.gmra.mxu0 %v3063
      %v3135 = vpop.f32.mrf.mxu0
      %v3136 = vadd.f32 %v3040, %v3135
      %v3137 = vpop.f32.mrf.mxu0
      %v3138 = vpop.f32.mrf.mxu0
      %v3139 = vadd.f32 %v3040, %v3138
      %v3140 = vpop.f32.mrf.mxu0
      %3141 = vmatprep.mubr.bf16.mxu0 0
      %3142 = vmatmul.mubr.bf16.gmra.mxu0 %v3066
      %v3143 = vpop.f32.mrf.mxu0
      %v3144 = vadd.f32 %v3040, %v3143
      %v3145 = vpop.f32.mrf.mxu0
      %v3146 = vpop.f32.mrf.mxu0
      %v3147 = vadd.f32 %v3040, %v3146
      %v3148 = vpop.f32.mrf.mxu0
      %3149 = vmatprep.mubr.bf16.mxu0 0
      %3150 = vmatmul.mubr.bf16.gmra.mxu0 %v3069
      %v3151 = vpop.f32.mrf.mxu0
      %v3152 = vadd.f32 %v3040, %v3151
      %v3153 = vpop.f32.mrf.mxu0
      %v3154 = vpop.f32.mrf.mxu0
      %v3155 = vadd.f32 %v3040, %v3154
      %v3156 = vpop.f32.mrf.mxu0
      %3157 = vmatprep.mubr.bf16.mxu0 0
      %3158 = vmatmul.mubr.bf16.gmra.mxu0 %v3072
      %v3159 = vpop.f32.mrf.mxu0
      %v3160 = vadd.f32 %v3040, %v3159
      %v3161 = vpop.f32.mrf.mxu0
      %v3162 = vpop.f32.mrf.mxu0
      %v3163 = vadd.f32 %v3040, %v3162
      %v3164 = vpop.f32.mrf.mxu0
      %3165 = vmatprep.mubr.bf16.mxu0 0
      %3166 = vmatmul.mubr.bf16.gmra.mxu0 %v3075
      %v3167 = vpop.f32.mrf.mxu0
      %v3168 = vadd.f32 %v3040, %v3167
      %v3169 = vpop.f32.mrf.mxu0
      %v3170 = vpop.f32.mrf.mxu0
      %v3171 = vadd.f32 %v3040, %v3170
      %v3172 = vpop.f32.mrf.mxu0
      %3173 = vdwg.mxu0
      %3174 = vst.msk [vmem:[%s253] sm:$0xff] %vm334, %v3112
      %3175 = vst.msk [vmem:[%s253 + $0x8] sm:$0xff] %vm334, %v3115
      %3176 = vst.msk [vmem:[%s253 + $0x10] sm:$0xff] %vm334, %v3120
      %3177 = vst.msk [vmem:[%s253 + $0x18] sm:$0xff] %vm334, %v3123
      %3178 = vst.msk [vmem:[%s253 + $0x20] sm:$0xff] %vm334, %v3128
      %3179 = vst.msk [vmem:[%s253 + $0x28] sm:$0xff] %vm334, %v3131
      %3180 = vst.msk [vmem:[%s253 + $0x30] sm:$0xff] %vm334, %v3136
      %3181 = vst.msk [vmem:[%s253 + $0x38] sm:$0xff] %vm334, %v3139
      %3182 = vst.msk [vmem:[%s253 + $0x40] sm:$0xff] %vm334, %v3144
      %3183 = vst.msk [vmem:[%s253 + $0x48] sm:$0xff] %vm334, %v3147
      %3184 = vst.msk [vmem:[%s253 + $0x50] sm:$0xff] %vm334, %v3152
      %3185 = vst.msk [vmem:[%s253 + $0x58] sm:$0xff] %vm334, %v3155
      %3186 = vst.msk [vmem:[%s253 + $0x60] sm:$0xff] %vm334, %v3160
      %3187 = vst.msk [vmem:[%s253 + $0x68] sm:$0xff] %vm334, %v3163
      %3188 = vst.msk [vmem:[%s253 + $0x70] sm:$0xff] %vm334, %v3168
      %3189 = vst.msk [vmem:[%s253 + $0x78] sm:$0xff] %vm334, %v3171
      %s3190 = smul.u32 16, %s17
      %p3191 = scmp.lt.s32.totalorder %s3190, 63
      %s3192 = scalar_select %p3191, %s3190, 63
      %s3193 = smul.addr %s3192, 8
      %s3194 = scalar_lea.vmem %s6, %s3193
      // Predicated region
      $region45: #{tpu_custom_call.1} parent=43 // pred_check
        %p3195 = pneg %p166
      $region46: #{tpu_custom_call.1} parent=43 // pred_check_branch
        %3197 = sbr.rel (%p3195) target = $region48
      $region47: #{tpu_custom_call.1} parent=43 // pred_region
        %s3198 = smul.u32 16, %s17
      $region48: #{tpu_custom_call.1} parent=43 // pred_fallthru
        _
    $region44: #{tpu_custom_call.1} parent=5 // pred_fallthru
      _
    %p3199 = scmp.le.s32.totalorder 2, %s12
    // Predicated region
    $region49: #{tpu_custom_call.1} parent=5 // pred_check
      %p3200 = pneg %p3199
    $region50: #{tpu_custom_call.1} parent=5 // pred_check_branch
      %3202 = sbr.rel (%p3200) target = $region52
    $region51: #{tpu_custom_call.1} parent=5 // pred_region
      %s3203 = ssub.s32 %s12, 2
      // Predicated region
      $region53: #{tpu_custom_call.1} parent=51 // pred_check
        %p3204 = pneg %p172
      $region54: #{tpu_custom_call.1} parent=51 // pred_check_branch
        %3206 = sbr.rel (%p3204) target = $region56
      $region55: #{tpu_custom_call.1} parent=51 // pred_region
        %s3207 = smul.u32 16, %s18
        %p3208 = scmp.lt.s32.totalorder %s3207, 63
        %s3209 = scalar_select %p3208, %s3207, 63
        %s3210 = smul.addr %s3209, 8
        %s3211 = scalar_lea.vmem %s6, %s3210
      $region56: #{tpu_custom_call.1} parent=51 // pred_fallthru
        _
    $region52: #{tpu_custom_call.1} parent=5 // pred_fallthru
      _
  $region6: #{tpu_custom_call.1} parent=0 // loop_footer
    %s16 = sadd.s32 1, %s12
  $region7: #{tpu_custom_call.1} parent=0 // loop_footer_branch
    %11 = sbr.rel target = $region3
  $region8: #{tpu_custom_call.1} parent=0 // loop_exit
    _

</llo_original>
